<compile_context>
chip_gen: v7x
topology: tpu7x:2x2x1
jax: 0.10.0
libtpu: 0.0.40
codegen_flags: <defaults>
</compile_context>

<pallas_src>
import functools
import math

import jax
import jax.numpy as jnp
from jax.experimental import pallas as pl
from jax.experimental.pallas import tpu as pltpu


def _self_attn_layer_kernel(x_ref, pos_ref,
                            wqk_ref, bqk_ref,
                            wv_ref, bv_ref,
                            wo_ref, bo_ref,
                            gamma_ref, beta_ref,
                            o_ref,
                            *, nhead: int, head_dim: int, eps: float,
                            kv_block: int, approx_recip: bool):
    Bb, L, D = x_ref.shape
    M = Bb * L
    BH = Bb * nhead
    cdt = wqk_ref.dtype  # MXU operand dtype (weights pre-cast in the wrapper)

    x = x_ref[...].reshape(M, D)                        # (M, D), input dtype
    qk_in = (x_ref[...] + pos_ref[...]).reshape(M, D)   # q = k = with_pos_embed(tgt, query_pos)

    # --- fused Q/K projection (1/sqrt(hd) folded into the Q half) and V projection ---
    qk = jnp.dot(qk_in.astype(cdt), wqk_ref[...],
                 preferred_element_type=jnp.float32) + bqk_ref[...]      # (M, 2D) f32
    v = jnp.dot(x.astype(cdt), wv_ref[...],
                preferred_element_type=jnp.float32) + bv_ref[...]        # (M, D)  f32
    qk = qk.astype(cdt)
    v = v.astype(cdt)

    # --- head-major stacks via reshape + swapaxes (no per-head slicing/stack/concat) ---
    def to_heads(t2d):  # (M, nhead*hd) -> (Bb*nhead, L, hd)
        t = t2d.reshape(Bb, L, nhead, head_dim)
        return jnp.swapaxes(t, 1, 2).reshape(BH, L, head_dim)

    qh = to_heads(qk[:, :D])
    kh = to_heads(qk[:, D:])
    vh = to_heads(v)

    # --- scaled dot-product attention, flash-style over KV chunks ---
    num_kv = pl.cdiv(L, kv_block)
    if num_kv == 1:
        # single chunk: plain max-subtracted softmax (exactly the previous behaviour)
        s = jnp.einsum('bld,bmd->blm', qh, kh, preferred_element_type=jnp.float32)
        s = s - jnp.max(s, axis=-1, keepdims=True)
        p = jnp.exp(s)
        l_i = jnp.sum(p, axis=-1, keepdims=True)
        acc = jnp.einsum('blm,bmd->bld', p.astype(cdt), vh,
                         preferred_element_type=jnp.float32)
    else:
        m_i = jnp.full((BH, L, 1), -jnp.inf, jnp.float32)
        l_i = jnp.zeros((BH, L, 1), jnp.float32)
        acc = jnp.zeros((BH, L, head_dim), jnp.float32)
        for c in range(num_kv):  # static unroll; bounds live score memory to O(L*kv_block)
            lo = c * kv_block
            hi = min(L, lo + kv_block)
            kc = kh[:, lo:hi]
            vc = vh[:, lo:hi]
            s = jnp.einsum('bld,bmd->blm', qh, kc, preferred_element_type=jnp.float32)
            m_new = jnp.maximum(m_i, jnp.max(s, axis=-1, keepdims=True))
            alpha = jnp.exp(m_i - m_new)
            p = jnp.exp(s - m_new)
            l_i = alpha * l_i + jnp.sum(p, axis=-1, keepdims=True)
            acc = alpha * acc + jnp.einsum('blm,bmd->bld', p.astype(cdt), vc,
                                           preferred_element_type=jnp.float32)
            m_i = m_new

    # normalize after PV (EUP reciprocal slot), then back to (M, D)
    attn = acc * pl.reciprocal(l_i, approx=approx_recip)                 # (BH, L, hd) f32
    attn = jnp.swapaxes(attn.reshape(Bb, nhead, L, head_dim), 1, 2).reshape(M, D)

    # --- output projection ---
    proj = jnp.dot(attn.astype(cdt), wo_ref[...],
                   preferred_element_type=jnp.float32) + bo_ref[...]     # (M, D) f32

    # --- residual (dropout=0.0) + LayerNorm over D, in f32 ---
    y = x.astype(jnp.float32) + proj
    mean = jnp.mean(y, axis=-1, keepdims=True)
    var = jnp.mean(jnp.square(y - mean), axis=-1, keepdims=True)
    y = (y - mean) * jax.lax.rsqrt(var + eps)
    out = y * gamma_ref[...] + beta_ref[...]
    o_ref[...] = out.reshape(Bb, L, D).astype(o_ref.dtype)


# ------------------------- generation-aware sizing heuristics -------------------------
def _tpu_vmem_info():
    """Returns (vmem_capacity_bytes, needs_two_grid_steps).

    64-MiB-VMEM chips (v7x class) carry two TensorCores per chip, so they want >= 2
    parallel grid steps; 128-MiB chips (v5e/v6e) are single-TC and prefer bigger blocks."""
    cap = 128 * 1024 * 1024
    try:
        cap = int(pltpu.get_tpu_info().vmem_capacity_bytes)
    except Exception:
        pass
    return cap, cap <= 80 * 1024 * 1024


def _vmem_bytes_estimate(Bb, L, D, nhead, act_isz, w_isz, kv_block, weight_bufs):
    M = Bb * L
    kb = min(L, kv_block)
    weights = weight_bufs * 4 * D * D * w_isz + 8 * D * 4   # Wqk+Wv+Wo (+biases/LN)
    acts = 2 * 3 * Bb * L * D * act_isz                     # double-buffered x / pos / out
    proj = 4 * 3 * M * D                                    # qk (M,2D) + v (M,D) in f32
    heads = 3 * M * D * w_isz                               # head-major q/k/v copies
    scores = 2 * Bb * nhead * L * kb * 4                    # s and exp(s), f32, per KV chunk
    epilog = 3 * 4 * M * D + M * D * w_isz                  # acc / proj / y (f32) + attn
    return weights + acts + proj + heads + scores + epilog


def _pick_block_batch(B, L, D, nhead, act_isz, w_isz, kv_block, budget, need_two_steps):
    best = 1
    for cand in range(1, B + 1):
        if B % cand:
            continue
        if need_two_steps and B >= 2 and (B // cand) < 2:
            continue  # keep both v7x TensorCores busy
        if _vmem_bytes_estimate(cand, L, D, nhead, act_isz, w_isz, kv_block, 2) <= budget:
            best = cand
    return best


# ------------------------- wrapper -------------------------
def self_attention_layer(tgt, query_pos, params, *, nhead: int, block_batch=None,
                         kv_block=None, mxu_operand_dtype=None):
    """Pallas implementation of SelfAttentionLayer.forward_post (normalize_before=False,
    dropout=0.0, no masks)."""
    B, L, D = tgt.shape
    assert D % nhead == 0
    head_dim = D // nhead
    scale = 1.0 / math.sqrt(head_dim)
    cdt = jnp.dtype(mxu_operand_dtype) if mxu_operand_dtype is not None else jnp.dtype(tgt.dtype)

    # One-time packing outside the kernel: pre-transpose (PyTorch stores (out,in)),
    # fuse Q/K, fold the attention scale into the Q half.
    wq_t = params["wq"].T * scale
    wk_t = params["wk"].T
    wqk = jnp.concatenate([wq_t, wk_t], axis=1).astype(cdt)             # (D, 2D)
    bqk = jnp.concatenate([params["bq"] * scale, params["bk"]], axis=1).astype(jnp.float32)
    wv_t = params["wv"].T.astype(cdt)                                   # (D, D)
    wo_t = params["wo"].T.astype(cdt)                                   # (D, D)
    bv = params["bv"].astype(jnp.float32)
    bo = params["bo"].astype(jnp.float32)
    gamma = params["ln_gamma"].astype(jnp.float32)
    beta = params["ln_beta"].astype(jnp.float32)

    kv_block = int(kv_block) if kv_block else min(L, 512)
    vmem_cap, need_two_steps = _tpu_vmem_info()
    act_isz = jnp.dtype(tgt.dtype).itemsize
    w_isz = jnp.dtype(cdt).itemsize

    Bb = block_batch or _pick_block_batch(B, L, D, nhead, act_isz, w_isz, kv_block,
                                          budget=int(0.6 * vmem_cap),
                                          need_two_steps=need_two_steps)
    assert B % Bb == 0

    approx_recip = jnp.dtype(tgt.dtype) != jnp.dtype(jnp.float32)
    kernel = functools.partial(_self_attn_layer_kernel, nhead=nhead, head_dim=head_dim,
                               eps=1e-5, kv_block=kv_block, approx_recip=bool(approx_recip))

    cp_kwargs = dict(dimension_semantics=("parallel",))
    est = _vmem_bytes_estimate(Bb, L, D, nhead, act_isz, w_isz, kv_block, 2)
    if est > 12 * 1024 * 1024:
        # generation-aware cap: ~96 MiB on 128-MiB chips (v5e/v6e), ~48 MiB on v7x
        cp_kwargs["vmem_limit_bytes"] = min(int(est * 1.5), int(0.75 * vmem_cap))

    act_spec = pl.BlockSpec((Bb, L, D), lambda b: (b, 0, 0))

    def build(single_buffer):
        ckw = {}
        if single_buffer and hasattr(pl, "Buffered"):
            # grid-invariant operands: no point double-buffering, saves ~4*D*D*w_isz VMEM
            ckw = dict(pipeline_mode=pl.Buffered(1))

        def const_spec(shape):
            return pl.BlockSpec(shape, lambda b: (0,) * len(shape), **ckw)

        return pl.pallas_call(
            kernel,
            out_shape=jax.ShapeDtypeStruct((B, L, D), tgt.dtype),
            grid_spec=pltpu.PrefetchScalarGridSpec(
                num_scalar_prefetch=0,
                grid=(B // Bb,),
                in_specs=[act_spec, act_spec,
                          const_spec((D, 2 * D)), const_spec((1, 2 * D)),
                          const_spec((D, D)), const_spec((1, D)),
                          const_spec((D, D)), const_spec((1, D)),
                          const_spec((1, D)), const_spec((1, D))],
                out_specs=act_spec),
            compiler_params=pltpu.CompilerParams(**cp_kwargs),
        )

    args = (tgt, query_pos, wqk, bqk, wv_t, bv, wo_t, bo, gamma, beta)
    try:
        return jax.block_until_ready(build(True)(*args))
    except Exception:
        # fall back to default (double-buffered) specs if Buffered(1) is unsupported
        return build(False)(*args)


# ------------------------- parameter init (deterministic) -------------------------
def _xavier_uniform(key, shape):
    fan_out, fan_in = shape
    bound = math.sqrt(6.0 / (fan_in + fan_out))
    return jax.random.uniform(key, shape, jnp.float32, -bound, bound)


def init_params(key, d_model):
    # Mirrors the PyTorch module: in_proj_weight (3D, D) and out_proj.weight are
    # xavier_uniform_'d by _reset_parameters; biases stay zero; LayerNorm weight=1, bias=0.
    k_in, k_out = jax.random.split(key)
    in_proj = _xavier_uniform(k_in, (3 * d_model, d_model))
    wq, wk, wv = in_proj[:d_model], in_proj[d_model:2 * d_model], in_proj[2 * d_model:]
    wo = _xavier_uniform(k_out, (d_model, d_model))
    zeros = jnp.zeros((1, d_model), jnp.float32)
    return dict(wq=wq, wk=wk, wv=wv,
                bq=zeros, bk=zeros, bv=zeros,
                wo=wo, bo=zeros,
                ln_gamma=jnp.ones((1, d_model), jnp.float32),
                ln_beta=zeros)


# ------------------------- pure-JAX reference for validation -------------------------
def reference(tgt, query_pos, params, nhead):
    B, L, D = tgt.shape
    hd = D // nhead
    qk_in = tgt + query_pos
    q = qk_in @ params["wq"].T + params["bq"]
    k = qk_in @ params["wk"].T + params["bk"]
    v = tgt @ params["wv"].T + params["bv"]
    q = q.reshape(B, L, nhead, hd).transpose(0, 2, 1, 3)
    k = k.reshape(B, L, nhead, hd).transpose(0, 2, 1, 3)
    v = v.reshape(B, L, nhead, hd).transpose(0, 2, 1, 3)
    s = jnp.einsum("bhld,bhmd->bhlm", q, k) / math.sqrt(hd)
    p = jax.nn.softmax(s, axis=-1)
    o = jnp.einsum("bhlm,bhmd->bhld", p, v).transpose(0, 2, 1, 3).reshape(B, L, D)
    o = o @ params["wo"].T + params["bo"]
    y = tgt + o
    mean = y.mean(-1, keepdims=True)
    var = ((y - mean) ** 2).mean(-1, keepdims=True)
    return (y - mean) / jnp.sqrt(var + 1e-5) * params["ln_gamma"] + params["ln_beta"]


if __name__ == "__main__":
    d_model, nhead = 32, 4
    B, L = 2, 8
    key = jax.random.PRNGKey(0)
    k_p, k_x, k_pos = jax.random.split(key, 3)

    params = init_params(k_p, d_model)
    tgt = jax.random.normal(k_x, (B, L, d_model), jnp.float32)
    query_pos = jax.random.normal(k_pos, (B, L, d_model), jnp.float32)

    out = self_attention_layer(tgt, query_pos, params, nhead=nhead)
    out = jax.block_until_ready(out)

    ref = reference(tgt, query_pos, params, nhead)
    assert out.shape == (B, L, d_model)
    assert jnp.allclose(out, ref, atol=1e-4, rtol=1e-4), "mismatch vs reference"

    # also exercise the multi-chunk (online-softmax) path on a slightly longer sequence
    B2, L2 = 2, 16
    tgt2 = jax.random.normal(jax.random.PRNGKey(1), (B2, L2, d_model), jnp.float32)
    pos2 = jax.random.normal(jax.random.PRNGKey(2), (B2, L2, d_model), jnp.float32)
    out2 = jax.block_until_ready(
        self_attention_layer(tgt2, pos2, params, nhead=nhead, kv_block=8))
    ref2 = reference(tgt2, pos2, params, nhead)
    assert jnp.allclose(out2, ref2, atol=1e-4, rtol=1e-4), "mismatch vs reference (kv-chunked)"

    print("KERNEL_OK")
</pallas_src>

<mosaic_0001>
module attributes {stable_mosaic.version = 11 : i64} {
  func.func @_self_attn_layer_kernel(%arg0: i32, %arg1: memref<2x8x32xf32, #tpu.memory_space<vmem>>, %arg2: memref<2x8x32xf32, #tpu.memory_space<vmem>>, %arg3: memref<32x64xf32, #tpu.memory_space<vmem>>, %arg4: memref<1x64xf32, #tpu.memory_space<vmem>>, %arg5: memref<32x32xf32, #tpu.memory_space<vmem>>, %arg6: memref<1x32xf32, #tpu.memory_space<vmem>>, %arg7: memref<32x32xf32, #tpu.memory_space<vmem>>, %arg8: memref<1x32xf32, #tpu.memory_space<vmem>>, %arg9: memref<1x32xf32, #tpu.memory_space<vmem>>, %arg10: memref<1x32xf32, #tpu.memory_space<vmem>>, %arg11: memref<2x8x32xf32, #tpu.memory_space<vmem>>) attributes {dimension_semantics = [#tpu.dimension_semantics<parallel>], iteration_bounds = array<i64: 1>, scalar_prefetch = 0 : i64, scratch_operands = 0 : i64, tpu.core_type = #tpu.core_type<tc>, window_params = [{transform_indices = @transform_0, window_bounds = array<i64: 2, 8, 32>}, {transform_indices = @transform_1, window_bounds = array<i64: 2, 8, 32>}, {pipeline_mode = #tpu.pipeline_mode<synchronous>, transform_indices = @transform_2, window_bounds = array<i64: 32, 64>}, {pipeline_mode = #tpu.pipeline_mode<synchronous>, transform_indices = @transform_3, window_bounds = array<i64: 1, 64>}, {pipeline_mode = #tpu.pipeline_mode<synchronous>, transform_indices = @transform_4, window_bounds = array<i64: 32, 32>}, {pipeline_mode = #tpu.pipeline_mode<synchronous>, transform_indices = @transform_5, window_bounds = array<i64: 1, 32>}, {pipeline_mode = #tpu.pipeline_mode<synchronous>, transform_indices = @transform_6, window_bounds = array<i64: 32, 32>}, {pipeline_mode = #tpu.pipeline_mode<synchronous>, transform_indices = @transform_7, window_bounds = array<i64: 1, 32>}, {pipeline_mode = #tpu.pipeline_mode<synchronous>, transform_indices = @transform_8, window_bounds = array<i64: 1, 32>}, {pipeline_mode = #tpu.pipeline_mode<synchronous>, transform_indices = @transform_9, window_bounds = array<i64: 1, 32>}, {transform_indices = @transform_10, window_bounds = array<i64: 2, 8, 32>}]} {
    %c0 = arith.constant 0 : index
    %c0_0 = arith.constant 0 : index
    %c0_1 = arith.constant 0 : index
    %0 = vector.load %arg1[%c0, %c0_0, %c0_1] : memref<2x8x32xf32, #tpu.memory_space<vmem>>, vector<2x8x32xf32>
    %1 = vector.shape_cast %0 : vector<2x8x32xf32> to vector<16x32xf32>
    %c0_2 = arith.constant 0 : index
    %c0_3 = arith.constant 0 : index
    %c0_4 = arith.constant 0 : index
    %2 = vector.load %arg1[%c0_2, %c0_3, %c0_4] : memref<2x8x32xf32, #tpu.memory_space<vmem>>, vector<2x8x32xf32>
    %c0_5 = arith.constant 0 : index
    %c0_6 = arith.constant 0 : index
    %c0_7 = arith.constant 0 : index
    %3 = vector.load %arg2[%c0_5, %c0_6, %c0_7] : memref<2x8x32xf32, #tpu.memory_space<vmem>>, vector<2x8x32xf32>
    %4 = arith.addf %2, %3 : vector<2x8x32xf32>
    %5 = vector.shape_cast %4 : vector<2x8x32xf32> to vector<16x32xf32>
    %c0_8 = arith.constant 0 : index
    %c0_9 = arith.constant 0 : index
    %6 = vector.load %arg3[%c0_8, %c0_9] : memref<32x64xf32, #tpu.memory_space<vmem>>, vector<32x64xf32>
    %cst = arith.constant dense<0.000000e+00> : vector<16x64xf32>
    %7 = tpu.matmul %5, %6, %cst {dimension_numbers = #tpu.dot_dimension_numbers<[1], [0], [0], [1], [0, 0, 1, 1], [], []>} : vector<16x32xf32>, vector<32x64xf32>, vector<16x64xf32> -> vector<16x64xf32>
    %c0_10 = arith.constant 0 : index
    %c0_11 = arith.constant 0 : index
    %8 = vector.load %arg4[%c0_10, %c0_11] : memref<1x64xf32, #tpu.memory_space<vmem>>, vector<1x64xf32>
    %9 = vector.broadcast %8 : vector<1x64xf32> to vector<16x64xf32>
    %10 = arith.addf %7, %9 : vector<16x64xf32>
    %c0_12 = arith.constant 0 : index
    %c0_13 = arith.constant 0 : index
    %11 = vector.load %arg5[%c0_12, %c0_13] : memref<32x32xf32, #tpu.memory_space<vmem>>, vector<32x32xf32>
    %cst_14 = arith.constant dense<0.000000e+00> : vector<16x32xf32>
    %12 = tpu.matmul %1, %11, %cst_14 {dimension_numbers = #tpu.dot_dimension_numbers<[1], [0], [0], [1], [0, 0, 1, 1], [], []>} : vector<16x32xf32>, vector<32x32xf32>, vector<16x32xf32> -> vector<16x32xf32>
    %c0_15 = arith.constant 0 : index
    %c0_16 = arith.constant 0 : index
    %13 = vector.load %arg6[%c0_15, %c0_16] : memref<1x32xf32, #tpu.memory_space<vmem>>, vector<1x32xf32>
    %14 = vector.broadcast %13 : vector<1x32xf32> to vector<16x32xf32>
    %15 = arith.addf %12, %14 : vector<16x32xf32>
    %16 = vector.extract_strided_slice %10 {offsets = [0, 0], sizes = [16, 32], strides = [1, 1]} : vector<16x64xf32> to vector<16x32xf32>
    %17 = vector.shape_cast %16 : vector<16x32xf32> to vector<2x8x4x8xf32>
    %18 = tpu.transpose %17, [0, 2, 1, 3] : vector<2x8x4x8xf32> -> vector<2x4x8x8xf32>
    %19 = vector.shape_cast %18 : vector<2x4x8x8xf32> to vector<8x8x8xf32>
    %20 = vector.extract_strided_slice %10 {offsets = [0, 32], sizes = [16, 32], strides = [1, 1]} : vector<16x64xf32> to vector<16x32xf32>
    %21 = vector.shape_cast %20 : vector<16x32xf32> to vector<2x8x4x8xf32>
    %22 = tpu.transpose %21, [0, 2, 1, 3] : vector<2x8x4x8xf32> -> vector<2x4x8x8xf32>
    %23 = vector.shape_cast %22 : vector<2x4x8x8xf32> to vector<8x8x8xf32>
    %24 = vector.shape_cast %15 : vector<16x32xf32> to vector<2x8x4x8xf32>
    %25 = tpu.transpose %24, [0, 2, 1, 3] : vector<2x8x4x8xf32> -> vector<2x4x8x8xf32>
    %26 = vector.shape_cast %25 : vector<2x4x8x8xf32> to vector<8x8x8xf32>
    "tpu.trace_start"() <{level = 10 : i32, message = "bld,bmd->blm"}> : () -> ()
    %cst_17 = arith.constant dense<0.000000e+00> : vector<8x8x8xf32>
    %27 = tpu.matmul %19, %23, %cst_17 {dimension_numbers = #tpu.dot_dimension_numbers<[2], [2], [1], [1], [0, 0, 0, 1, 1, 1], [0], [0]>} : vector<8x8x8xf32>, vector<8x8x8xf32>, vector<8x8x8xf32> -> vector<8x8x8xf32>
    "tpu.trace_stop"() : () -> ()
    %cst_18 = arith.constant dense<0xFF800000> : vector<8x8xf32>
    %28 = vector.multi_reduction <maximumf>, %27, %cst_18 [2] : vector<8x8x8xf32> to vector<8x8xf32>
    %29 = vector.shape_cast %28 : vector<8x8xf32> to vector<8x8x1xf32>
    %30 = vector.broadcast %29 : vector<8x8x1xf32> to vector<8x8x8xf32>
    %31 = arith.subf %27, %30 : vector<8x8x8xf32>
    %32 = math.exp %31 : vector<8x8x8xf32>
    %cst_19 = arith.constant dense<0.000000e+00> : vector<8x8xf32>
    %33 = vector.multi_reduction <add>, %32, %cst_19 [2] : vector<8x8x8xf32> to vector<8x8xf32>
    %34 = vector.shape_cast %33 : vector<8x8xf32> to vector<8x8x1xf32>
    "tpu.trace_start"() <{level = 10 : i32, message = "blm,bmd->bld"}> : () -> ()
    %cst_20 = arith.constant dense<0.000000e+00> : vector<8x8x8xf32>
    %35 = tpu.matmul %32, %26, %cst_20 {dimension_numbers = #tpu.dot_dimension_numbers<[2], [1], [1], [2], [0, 0, 0, 1, 1, 2], [0], [0]>} : vector<8x8x8xf32>, vector<8x8x8xf32>, vector<8x8x8xf32> -> vector<8x8x8xf32>
    "tpu.trace_stop"() : () -> ()
    %36 = tpu.reciprocal %34 : vector<8x8x1xf32> -> vector<8x8x1xf32>
    %37 = vector.broadcast %36 : vector<8x8x1xf32> to vector<8x8x8xf32>
    %38 = arith.mulf %35, %37 : vector<8x8x8xf32>
    %39 = vector.shape_cast %38 : vector<8x8x8xf32> to vector<2x4x8x8xf32>
    %40 = tpu.transpose %39, [0, 2, 1, 3] : vector<2x4x8x8xf32> -> vector<2x8x4x8xf32>
    %41 = vector.shape_cast %40 : vector<2x8x4x8xf32> to vector<16x32xf32>
    %c0_21 = arith.constant 0 : index
    %c0_22 = arith.constant 0 : index
    %42 = vector.load %arg7[%c0_21, %c0_22] : memref<32x32xf32, #tpu.memory_space<vmem>>, vector<32x32xf32>
    %cst_23 = arith.constant dense<0.000000e+00> : vector<16x32xf32>
    %43 = tpu.matmul %41, %42, %cst_23 {dimension_numbers = #tpu.dot_dimension_numbers<[1], [0], [0], [1], [0, 0, 1, 1], [], []>} : vector<16x32xf32>, vector<32x32xf32>, vector<16x32xf32> -> vector<16x32xf32>
    %c0_24 = arith.constant 0 : index
    %c0_25 = arith.constant 0 : index
    %44 = vector.load %arg8[%c0_24, %c0_25] : memref<1x32xf32, #tpu.memory_space<vmem>>, vector<1x32xf32>
    %45 = vector.broadcast %44 : vector<1x32xf32> to vector<16x32xf32>
    %46 = arith.addf %43, %45 : vector<16x32xf32>
    %47 = arith.addf %1, %46 : vector<16x32xf32>
    %cst_26 = arith.constant dense<0.000000e+00> : vector<16xf32>
    %48 = vector.multi_reduction <add>, %47, %cst_26 [1] : vector<16x32xf32> to vector<16xf32>
    %49 = vector.shape_cast %48 : vector<16xf32> to vector<16x1xf32>
    %cst_27 = arith.constant 3.200000e+01 : f32
    %50 = vector.broadcast %cst_27 : f32 to vector<16x1xf32>
    %51 = arith.divf %49, %50 : vector<16x1xf32>
    %52 = vector.broadcast %51 : vector<16x1xf32> to vector<16x32xf32>
    %53 = arith.subf %47, %52 : vector<16x32xf32>
    %54 = arith.mulf %53, %53 : vector<16x32xf32>
    %cst_28 = arith.constant dense<0.000000e+00> : vector<16xf32>
    %55 = vector.multi_reduction <add>, %54, %cst_28 [1] : vector<16x32xf32> to vector<16xf32>
    %56 = vector.shape_cast %55 : vector<16xf32> to vector<16x1xf32>
    %cst_29 = arith.constant 3.200000e+01 : f32
    %57 = vector.broadcast %cst_29 : f32 to vector<16x1xf32>
    %58 = arith.divf %56, %57 : vector<16x1xf32>
    %59 = vector.broadcast %51 : vector<16x1xf32> to vector<16x32xf32>
    %60 = arith.subf %47, %59 : vector<16x32xf32>
    %cst_30 = arith.constant 9.99999974E-6 : f32
    %61 = vector.broadcast %cst_30 : f32 to vector<16x1xf32>
    %62 = arith.addf %58, %61 : vector<16x1xf32>
    %63 = math.rsqrt %62 : vector<16x1xf32>
    %64 = vector.broadcast %63 : vector<16x1xf32> to vector<16x32xf32>
    %65 = arith.mulf %60, %64 : vector<16x32xf32>
    %c0_31 = arith.constant 0 : index
    %c0_32 = arith.constant 0 : index
    %66 = vector.load %arg9[%c0_31, %c0_32] : memref<1x32xf32, #tpu.memory_space<vmem>>, vector<1x32xf32>
    %67 = vector.broadcast %66 : vector<1x32xf32> to vector<16x32xf32>
    %68 = arith.mulf %65, %67 : vector<16x32xf32>
    %c0_33 = arith.constant 0 : index
    %c0_34 = arith.constant 0 : index
    %69 = vector.load %arg10[%c0_33, %c0_34] : memref<1x32xf32, #tpu.memory_space<vmem>>, vector<1x32xf32>
    %70 = vector.broadcast %69 : vector<1x32xf32> to vector<16x32xf32>
    %71 = arith.addf %68, %70 : vector<16x32xf32>
    %72 = vector.shape_cast %71 : vector<16x32xf32> to vector<2x8x32xf32>
    %c0_35 = arith.constant 0 : index
    %c0_36 = arith.constant 0 : index
    %c0_37 = arith.constant 0 : index
    %73 = vector.load %arg11[%c0_35, %c0_36, %c0_37] : memref<2x8x32xf32, #tpu.memory_space<vmem>>, vector<2x8x32xf32>
    tpu.vector_store %arg11[%c0_35, %c0_36, %c0_37], %72 {strides = array<i32>} : memref<2x8x32xf32, #tpu.memory_space<vmem>>, vector<2x8x32xf32>,
    return
  }
  func.func @transform_0(%arg0: i32) -> (i32, i32, i32) {
    %c0_i32 = arith.constant 0 : i32
    %c0_i32_0 = arith.constant 0 : i32
    %c0_i32_1 = arith.constant 0 : i32
    return %arg0, %c0_i32, %c0_i32_0 : i32, i32, i32
  }
  func.func @transform_1(%arg0: i32) -> (i32, i32, i32) {
    %c0_i32 = arith.constant 0 : i32
    %c0_i32_0 = arith.constant 0 : i32
    %c0_i32_1 = arith.constant 0 : i32
    return %arg0, %c0_i32, %c0_i32_0 : i32, i32, i32
  }
  func.func @transform_2(%arg0: i32) -> (i32, i32) {
    %c0_i32 = arith.constant 0 : i32
    %c0_i32_0 = arith.constant 0 : i32
    %c0_i32_1 = arith.constant 0 : i32
    return %c0_i32, %c0_i32_0 : i32, i32
  }
  func.func @transform_3(%arg0: i32) -> (i32, i32) {
    %c0_i32 = arith.constant 0 : i32
    %c0_i32_0 = arith.constant 0 : i32
    %c0_i32_1 = arith.constant 0 : i32
    return %c0_i32, %c0_i32_0 : i32, i32
  }
  func.func @transform_4(%arg0: i32) -> (i32, i32) {
    %c0_i32 = arith.constant 0 : i32
    %c0_i32_0 = arith.constant 0 : i32
    %c0_i32_1 = arith.constant 0 : i32
    return %c0_i32, %c0_i32_0 : i32, i32
  }
  func.func @transform_5(%arg0: i32) -> (i32, i32) {
    %c0_i32 = arith.constant 0 : i32
    %c0_i32_0 = arith.constant 0 : i32
    %c0_i32_1 = arith.constant 0 : i32
    return %c0_i32, %c0_i32_0 : i32, i32
  }
  func.func @transform_6(%arg0: i32) -> (i32, i32) {
    %c0_i32 = arith.constant 0 : i32
    %c0_i32_0 = arith.constant 0 : i32
    %c0_i32_1 = arith.constant 0 : i32
    return %c0_i32, %c0_i32_0 : i32, i32
  }
  func.func @transform_7(%arg0: i32) -> (i32, i32) {
    %c0_i32 = arith.constant 0 : i32
    %c0_i32_0 = arith.constant 0 : i32
    %c0_i32_1 = arith.constant 0 : i32
    return %c0_i32, %c0_i32_0 : i32, i32
  }
  func.func @transform_8(%arg0: i32) -> (i32, i32) {
    %c0_i32 = arith.constant 0 : i32
    %c0_i32_0 = arith.constant 0 : i32
    %c0_i32_1 = arith.constant 0 : i32
    return %c0_i32, %c0_i32_0 : i32, i32
  }
  func.func @transform_9(%arg0: i32) -> (i32, i32) {
    %c0_i32 = arith.constant 0 : i32
    %c0_i32_0 = arith.constant 0 : i32
    %c0_i32_1 = arith.constant 0 : i32
    return %c0_i32, %c0_i32_0 : i32, i32
  }
  func.func @transform_10(%arg0: i32) -> (i32, i32, i32) {
    %c0_i32 = arith.constant 0 : i32
    %c0_i32_0 = arith.constant 0 : i32
    %c0_i32_1 = arith.constant 0 : i32
    return %arg0, %c0_i32, %c0_i32_0 : i32, i32, i32
  }
}

module attributes {stable_mosaic.version = 11 : i64} {
  func.func @_self_attn_layer_kernel(%arg0: i32, %arg1: memref<2x8x32xf32, #tpu.memory_space<vmem>>, %arg2: memref<2x8x32xf32, #tpu.memory_space<vmem>>, %arg3: memref<32x64xf32, #tpu.memory_space<vmem>>, %arg4: memref<1x64xf32, #tpu.memory_space<vmem>>, %arg5: memref<32x32xf32, #tpu.memory_space<vmem>>, %arg6: memref<1x32xf32, #tpu.memory_space<vmem>>, %arg7: memref<32x32xf32, #tpu.memory_space<vmem>>, %arg8: memref<1x32xf32, #tpu.memory_space<vmem>>, %arg9: memref<1x32xf32, #tpu.memory_space<vmem>>, %arg10: memref<1x32xf32, #tpu.memory_space<vmem>>, %arg11: memref<2x8x32xf32, #tpu.memory_space<vmem>>) attributes {dimension_semantics = [#tpu.dimension_semantics<parallel>], iteration_bounds = array<i64: 1>, scalar_prefetch = 0 : i64, scratch_operands = 0 : i64, tpu.core_type = #tpu.core_type<tc>, window_params = [{transform_indices = @transform_0, window_bounds = array<i64: 2, 8, 32>}, {transform_indices = @transform_1, window_bounds = array<i64: 2, 8, 32>}, {pipeline_mode = #tpu.pipeline_mode<synchronous>, transform_indices = @transform_2, window_bounds = array<i64: 32, 64>}, {pipeline_mode = #tpu.pipeline_mode<synchronous>, transform_indices = @transform_3, window_bounds = array<i64: 1, 64>}, {pipeline_mode = #tpu.pipeline_mode<synchronous>, transform_indices = @transform_4, window_bounds = array<i64: 32, 32>}, {pipeline_mode = #tpu.pipeline_mode<synchronous>, transform_indices = @transform_5, window_bounds = array<i64: 1, 32>}, {pipeline_mode = #tpu.pipeline_mode<synchronous>, transform_indices = @transform_6, window_bounds = array<i64: 32, 32>}, {pipeline_mode = #tpu.pipeline_mode<synchronous>, transform_indices = @transform_7, window_bounds = array<i64: 1, 32>}, {pipeline_mode = #tpu.pipeline_mode<synchronous>, transform_indices = @transform_8, window_bounds = array<i64: 1, 32>}, {pipeline_mode = #tpu.pipeline_mode<synchronous>, transform_indices = @transform_9, window_bounds = array<i64: 1, 32>}, {transform_indices = @transform_10, window_bounds = array<i64: 2, 8, 32>}]} {
    %c0 = arith.constant 0 : index
    %c0_0 = arith.constant 0 : index
    %c0_1 = arith.constant 0 : index
    %0 = vector.load %arg1[%c0, %c0_0, %c0_1] : memref<2x8x32xf32, #tpu.memory_space<vmem>>, vector<2x8x32xf32>
    %1 = vector.shape_cast %0 : vector<2x8x32xf32> to vector<16x32xf32>
    %c0_2 = arith.constant 0 : index
    %c0_3 = arith.constant 0 : index
    %c0_4 = arith.constant 0 : index
    %2 = vector.load %arg1[%c0_2, %c0_3, %c0_4] : memref<2x8x32xf32, #tpu.memory_space<vmem>>, vector<2x8x32xf32>
    %c0_5 = arith.constant 0 : index
    %c0_6 = arith.constant 0 : index
    %c0_7 = arith.constant 0 : index
    %3 = vector.load %arg2[%c0_5, %c0_6, %c0_7] : memref<2x8x32xf32, #tpu.memory_space<vmem>>, vector<2x8x32xf32>
    %4 = arith.addf %2, %3 : vector<2x8x32xf32>
    %5 = vector.shape_cast %4 : vector<2x8x32xf32> to vector<16x32xf32>
    %c0_8 = arith.constant 0 : index
    %c0_9 = arith.constant 0 : index
    %6 = vector.load %arg3[%c0_8, %c0_9] : memref<32x64xf32, #tpu.memory_space<vmem>>, vector<32x64xf32>
    %cst = arith.constant dense<0.000000e+00> : vector<16x64xf32>
    %7 = tpu.matmul %5, %6, %cst {dimension_numbers = #tpu.dot_dimension_numbers<[1], [0], [0], [1], [0, 0, 1, 1], [], []>} : vector<16x32xf32>, vector<32x64xf32>, vector<16x64xf32> -> vector<16x64xf32>
    %c0_10 = arith.constant 0 : index
    %c0_11 = arith.constant 0 : index
    %8 = vector.load %arg4[%c0_10, %c0_11] : memref<1x64xf32, #tpu.memory_space<vmem>>, vector<1x64xf32>
    %9 = vector.broadcast %8 : vector<1x64xf32> to vector<16x64xf32>
    %10 = arith.addf %7, %9 : vector<16x64xf32>
    %c0_12 = arith.constant 0 : index
    %c0_13 = arith.constant 0 : index
    %11 = vector.load %arg5[%c0_12, %c0_13] : memref<32x32xf32, #tpu.memory_space<vmem>>, vector<32x32xf32>
    %cst_14 = arith.constant dense<0.000000e+00> : vector<16x32xf32>
    %12 = tpu.matmul %1, %11, %cst_14 {dimension_numbers = #tpu.dot_dimension_numbers<[1], [0], [0], [1], [0, 0, 1, 1], [], []>} : vector<16x32xf32>, vector<32x32xf32>, vector<16x32xf32> -> vector<16x32xf32>
    %c0_15 = arith.constant 0 : index
    %c0_16 = arith.constant 0 : index
    %13 = vector.load %arg6[%c0_15, %c0_16] : memref<1x32xf32, #tpu.memory_space<vmem>>, vector<1x32xf32>
    %14 = vector.broadcast %13 : vector<1x32xf32> to vector<16x32xf32>
    %15 = arith.addf %12, %14 : vector<16x32xf32>
    %16 = vector.extract_strided_slice %10 {offsets = [0, 0], sizes = [16, 32], strides = [1, 1]} : vector<16x64xf32> to vector<16x32xf32>
    %17 = vector.shape_cast %16 : vector<16x32xf32> to vector<2x8x4x8xf32>
    %18 = tpu.transpose %17, [0, 2, 1, 3] : vector<2x8x4x8xf32> -> vector<2x4x8x8xf32>
    %19 = vector.shape_cast %18 : vector<2x4x8x8xf32> to vector<8x8x8xf32>
    %20 = vector.extract_strided_slice %10 {offsets = [0, 32], sizes = [16, 32], strides = [1, 1]} : vector<16x64xf32> to vector<16x32xf32>
    %21 = vector.shape_cast %20 : vector<16x32xf32> to vector<2x8x4x8xf32>
    %22 = tpu.transpose %21, [0, 2, 1, 3] : vector<2x8x4x8xf32> -> vector<2x4x8x8xf32>
    %23 = vector.shape_cast %22 : vector<2x4x8x8xf32> to vector<8x8x8xf32>
    %24 = vector.shape_cast %15 : vector<16x32xf32> to vector<2x8x4x8xf32>
    %25 = tpu.transpose %24, [0, 2, 1, 3] : vector<2x8x4x8xf32> -> vector<2x4x8x8xf32>
    %26 = vector.shape_cast %25 : vector<2x4x8x8xf32> to vector<8x8x8xf32>
    "tpu.trace_start"() <{level = 10 : i32, message = "bld,bmd->blm"}> : () -> ()
    %cst_17 = arith.constant dense<0.000000e+00> : vector<8x8x8xf32>
    %27 = tpu.matmul %19, %23, %cst_17 {dimension_numbers = #tpu.dot_dimension_numbers<[2], [2], [1], [1], [0, 0, 0, 1, 1, 1], [0], [0]>} : vector<8x8x8xf32>, vector<8x8x8xf32>, vector<8x8x8xf32> -> vector<8x8x8xf32>
    "tpu.trace_stop"() : () -> ()
    %cst_18 = arith.constant dense<0xFF800000> : vector<8x8xf32>
    %28 = vector.multi_reduction <maximumf>, %27, %cst_18 [2] : vector<8x8x8xf32> to vector<8x8xf32>
    %29 = vector.shape_cast %28 : vector<8x8xf32> to vector<8x8x1xf32>
    %30 = vector.broadcast %29 : vector<8x8x1xf32> to vector<8x8x8xf32>
    %31 = arith.subf %27, %30 : vector<8x8x8xf32>
    %32 = math.exp %31 : vector<8x8x8xf32>
    %cst_19 = arith.constant dense<0.000000e+00> : vector<8x8xf32>
    %33 = vector.multi_reduction <add>, %32, %cst_19 [2] : vector<8x8x8xf32> to vector<8x8xf32>
    %34 = vector.shape_cast %33 : vector<8x8xf32> to vector<8x8x1xf32>
    "tpu.trace_start"() <{level = 10 : i32, message = "blm,bmd->bld"}> : () -> ()
    %cst_20 = arith.constant dense<0.000000e+00> : vector<8x8x8xf32>
    %35 = tpu.matmul %32, %26, %cst_20 {dimension_numbers = #tpu.dot_dimension_numbers<[2], [1], [1], [2], [0, 0, 0, 1, 1, 2], [0], [0]>} : vector<8x8x8xf32>, vector<8x8x8xf32>, vector<8x8x8xf32> -> vector<8x8x8xf32>
    "tpu.trace_stop"() : () -> ()
    %36 = tpu.reciprocal %34 : vector<8x8x1xf32> -> vector<8x8x1xf32>
    %37 = vector.broadcast %36 : vector<8x8x1xf32> to vector<8x8x8xf32>
    %38 = arith.mulf %35, %37 : vector<8x8x8xf32>
    %39 = vector.shape_cast %38 : vector<8x8x8xf32> to vector<2x4x8x8xf32>
    %40 = tpu.transpose %39, [0, 2, 1, 3] : vector<2x4x8x8xf32> -> vector<2x8x4x8xf32>
    %41 = vector.shape_cast %40 : vector<2x8x4x8xf32> to vector<16x32xf32>
    %c0_21 = arith.constant 0 : index
    %c0_22 = arith.constant 0 : index
    %42 = vector.load %arg7[%c0_21, %c0_22] : memref<32x32xf32, #tpu.memory_space<vmem>>, vector<32x32xf32>
    %cst_23 = arith.constant dense<0.000000e+00> : vector<16x32xf32>
    %43 = tpu.matmul %41, %42, %cst_23 {dimension_numbers = #tpu.dot_dimension_numbers<[1], [0], [0], [1], [0, 0, 1, 1], [], []>} : vector<16x32xf32>, vector<32x32xf32>, vector<16x32xf32> -> vector<16x32xf32>
    %c0_24 = arith.constant 0 : index
    %c0_25 = arith.constant 0 : index
    %44 = vector.load %arg8[%c0_24, %c0_25] : memref<1x32xf32, #tpu.memory_space<vmem>>, vector<1x32xf32>
    %45 = vector.broadcast %44 : vector<1x32xf32> to vector<16x32xf32>
    %46 = arith.addf %43, %45 : vector<16x32xf32>
    %47 = arith.addf %1, %46 : vector<16x32xf32>
    %cst_26 = arith.constant dense<0.000000e+00> : vector<16xf32>
    %48 = vector.multi_reduction <add>, %47, %cst_26 [1] : vector<16x32xf32> to vector<16xf32>
    %49 = vector.shape_cast %48 : vector<16xf32> to vector<16x1xf32>
    %cst_27 = arith.constant 3.200000e+01 : f32
    %50 = vector.broadcast %cst_27 : f32 to vector<16x1xf32>
    %51 = arith.divf %49, %50 : vector<16x1xf32>
    %52 = vector.broadcast %51 : vector<16x1xf32> to vector<16x32xf32>
    %53 = arith.subf %47, %52 : vector<16x32xf32>
    %54 = arith.mulf %53, %53 : vector<16x32xf32>
    %cst_28 = arith.constant dense<0.000000e+00> : vector<16xf32>
    %55 = vector.multi_reduction <add>, %54, %cst_28 [1] : vector<16x32xf32> to vector<16xf32>
    %56 = vector.shape_cast %55 : vector<16xf32> to vector<16x1xf32>
    %cst_29 = arith.constant 3.200000e+01 : f32
    %57 = vector.broadcast %cst_29 : f32 to vector<16x1xf32>
    %58 = arith.divf %56, %57 : vector<16x1xf32>
    %59 = vector.broadcast %51 : vector<16x1xf32> to vector<16x32xf32>
    %60 = arith.subf %47, %59 : vector<16x32xf32>
    %cst_30 = arith.constant 9.99999974E-6 : f32
    %61 = vector.broadcast %cst_30 : f32 to vector<16x1xf32>
    %62 = arith.addf %58, %61 : vector<16x1xf32>
    %63 = math.rsqrt %62 : vector<16x1xf32>
    %64 = vector.broadcast %63 : vector<16x1xf32> to vector<16x32xf32>
    %65 = arith.mulf %60, %64 : vector<16x32xf32>
    %c0_31 = arith.constant 0 : index
    %c0_32 = arith.constant 0 : index
    %66 = vector.load %arg9[%c0_31, %c0_32] : memref<1x32xf32, #tpu.memory_space<vmem>>, vector<1x32xf32>
    %67 = vector.broadcast %66 : vector<1x32xf32> to vector<16x32xf32>
    %68 = arith.mulf %65, %67 : vector<16x32xf32>
    %c0_33 = arith.constant 0 : index
    %c0_34 = arith.constant 0 : index
    %69 = vector.load %arg10[%c0_33, %c0_34] : memref<1x32xf32, #tpu.memory_space<vmem>>, vector<1x32xf32>
    %70 = vector.broadcast %69 : vector<1x32xf32> to vector<16x32xf32>
    %71 = arith.addf %68, %70 : vector<16x32xf32>
    %72 = vector.shape_cast %71 : vector<16x32xf32> to vector<2x8x32xf32>
    %c0_35 = arith.constant 0 : index
    %c0_36 = arith.constant 0 : index
    %c0_37 = arith.constant 0 : index
    %73 = vector.load %arg11[%c0_35, %c0_36, %c0_37] : memref<2x8x32xf32, #tpu.memory_space<vmem>>, vector<2x8x32xf32>
    tpu.vector_store %arg11[%c0_35, %c0_36, %c0_37], %72 {strides = array<i32>} : memref<2x8x32xf32, #tpu.memory_space<vmem>>, vector<2x8x32xf32>,
    return
  }
  func.func @transform_0(%arg0: i32) -> (i32, i32, i32) {
    %c0_i32 = arith.constant 0 : i32
    %c0_i32_0 = arith.constant 0 : i32
    %c0_i32_1 = arith.constant 0 : i32
    return %arg0, %c0_i32, %c0_i32_0 : i32, i32, i32
  }
  func.func @transform_1(%arg0: i32) -> (i32, i32, i32) {
    %c0_i32 = arith.constant 0 : i32
    %c0_i32_0 = arith.constant 0 : i32
    %c0_i32_1 = arith.constant 0 : i32
    return %arg0, %c0_i32, %c0_i32_0 : i32, i32, i32
  }
  func.func @transform_2(%arg0: i32) -> (i32, i32) {
    %c0_i32 = arith.constant 0 : i32
    %c0_i32_0 = arith.constant 0 : i32
    %c0_i32_1 = arith.constant 0 : i32
    return %c0_i32, %c0_i32_0 : i32, i32
  }
  func.func @transform_3(%arg0: i32) -> (i32, i32) {
    %c0_i32 = arith.constant 0 : i32
    %c0_i32_0 = arith.constant 0 : i32
    %c0_i32_1 = arith.constant 0 : i32
    return %c0_i32, %c0_i32_0 : i32, i32
  }
  func.func @transform_4(%arg0: i32) -> (i32, i32) {
    %c0_i32 = arith.constant 0 : i32
    %c0_i32_0 = arith.constant 0 : i32
    %c0_i32_1 = arith.constant 0 : i32
    return %c0_i32, %c0_i32_0 : i32, i32
  }
  func.func @transform_5(%arg0: i32) -> (i32, i32) {
    %c0_i32 = arith.constant 0 : i32
    %c0_i32_0 = arith.constant 0 : i32
    %c0_i32_1 = arith.constant 0 : i32
    return %c0_i32, %c0_i32_0 : i32, i32
  }
  func.func @transform_6(%arg0: i32) -> (i32, i32) {
    %c0_i32 = arith.constant 0 : i32
    %c0_i32_0 = arith.constant 0 : i32
    %c0_i32_1 = arith.constant 0 : i32
    return %c0_i32, %c0_i32_0 : i32, i32
  }
  func.func @transform_7(%arg0: i32) -> (i32, i32) {
    %c0_i32 = arith.constant 0 : i32
    %c0_i32_0 = arith.constant 0 : i32
    %c0_i32_1 = arith.constant 0 : i32
    return %c0_i32, %c0_i32_0 : i32, i32
  }
  func.func @transform_8(%arg0: i32) -> (i32, i32) {
    %c0_i32 = arith.constant 0 : i32
    %c0_i32_0 = arith.constant 0 : i32
    %c0_i32_1 = arith.constant 0 : i32
    return %c0_i32, %c0_i32_0 : i32, i32
  }
  func.func @transform_9(%arg0: i32) -> (i32, i32) {
    %c0_i32 = arith.constant 0 : i32
    %c0_i32_0 = arith.constant 0 : i32
    %c0_i32_1 = arith.constant 0 : i32
    return %c0_i32, %c0_i32_0 : i32, i32
  }
  func.func @transform_10(%arg0: i32) -> (i32, i32, i32) {
    %c0_i32 = arith.constant 0 : i32
    %c0_i32_0 = arith.constant 0 : i32
    %c0_i32_1 = arith.constant 0 : i32
    return %arg0, %c0_i32, %c0_i32_0 : i32, i32, i32
  }
}

</mosaic_0001>

<llo_original>
// kernel: tpu_custom_call.1
$region0: #{tpu_custom_call.1}
  #allocation0 [shape = 'u32[]', space=smem, size = 0x4, offset = 0x4, fixed_abs, tag = 'smem constant byte address 0x4 - core index']
  #allocation1 [shape = 'u32[144,128]{1,0:T(1,128)}', space=vmem, size = 0x12000, scoped, tag = 'internal scratch']
  %s0 = inlined_call_operand.hbm [shape: f32[2,8,32], index: 0, kind: input, shape index: {}]
  %s1 = inlined_call_operand.hbm [shape: f32[2,8,32], index: 1, kind: input, shape index: {}]
  %s2 = inlined_call_operand.hbm [shape: f32[32,64], index: 2, kind: input, shape index: {}]
  %s3 = inlined_call_operand.vmem [shape: f32[1,64], index: 3, kind: input, shape index: {}]
  %s4 = inlined_call_operand.hbm [shape: f32[32,32], index: 4, kind: input, shape index: {}]
  %s5 = inlined_call_operand.vmem [shape: f32[1,32], index: 5, kind: input, shape index: {}]
  %s6 = inlined_call_operand.hbm [shape: f32[32,32], index: 6, kind: input, shape index: {}]
  %s7 = inlined_call_operand.vmem [shape: f32[1,32], index: 7, kind: input, shape index: {}]
  %s8 = inlined_call_operand.vmem [shape: f32[1,32], index: 8, kind: input, shape index: {}]
  %s9 = inlined_call_operand.vmem [shape: f32[1,32], index: 9, kind: input, shape index: {}]
  %s10 = inlined_call_operand.hbm [shape: f32[2,8,32], index: 10, kind: output, shape index: {}]
  %s11 = sld [smem:[#allocation0]]
  $region70: #{tpu_custom_call.1} parent=0
    _
  %s13 = ssub.s32 1, %s11
  %s14 = scalar_select 0, %s13, %s11
  $region1: #{tpu_custom_call.1} parent=0
    #allocation2 [shape = 'u8[8192]{0}', space=vmem, size = 0x2000, scoped, tag = 'input window, operand 0, single buffered']
    #allocation3 [shape = 's32[1]{0}', space=sflag, size = 0x4, scoped, tag = 'scoped memory for tpu_custom_call.1']
    #allocation4 [shape = 's32[1]{0}', space=sflag, size = 0x4, scoped, tag = 'scoped memory for tpu_custom_call.1']
    #allocation5 [shape = 'u8[8192]{0}', space=vmem, size = 0x2000, scoped, tag = 'input window, operand 1, single buffered']
    #allocation6 [shape = 's32[1]{0}', space=sflag, size = 0x4, scoped, tag = 'scoped memory for tpu_custom_call.1']
    #allocation7 [shape = 'u8[16384]{0}', space=vmem, size = 0x4000, scoped, tag = 'input window, operand 2, single buffered']
    #allocation8 [shape = 'u8[16384]{0}', space=vmem, size = 0x4000, scoped, tag = 'input window, operand 4, single buffered']
    #allocation9 [shape = 's32[1]{0}', space=sflag, size = 0x4, scoped, tag = 'scoped memory for tpu_custom_call.1']
    #allocation10 [shape = 'u8[16384]{0}', space=vmem, size = 0x4000, scoped, tag = 'input window, operand 6, single buffered']
    #allocation11 [shape = 'u8[8192]{0}', space=vmem, size = 0x2000, scoped, tag = 'output window, operand 0, single buffered']
    %15 = vsyncpa [#allocation3], 0
    %16 = vsyncpa [#allocation6], 0
    %17 = vsyncpa [#allocation9], 0
    %18 = vsyncpa [#allocation4], 0
    // Predicated region
    $region2: #{tpu_custom_call.1} parent=1 // pred_check
      _
    $region3: #{tpu_custom_call.1} parent=1 // pred_check_branch
      %20 = sbr.rel (0) target = $region5
    $region4: #{tpu_custom_call.1} parent=1 // pred_region
      %s22 = ssub.s32 256, 256
      %23 = vsyncadd [#allocation3], %s22
      %s24 = sshll.u32 [#allocation2], 4
      %s25 = int_to_ptr.vmem [resolvable:$true] %s24
      %30 = dma.hbm_to_vmem [thread:$0]  %s0, 256, %s25, [#allocation3], 128, 128, 8
    $region5: #{tpu_custom_call.1} parent=1 // pred_fallthru
      _
    // Predicated region
    $region6: #{tpu_custom_call.1} parent=1 // pred_check
      _
    $region7: #{tpu_custom_call.1} parent=1 // pred_check_branch
      %32 = sbr.rel (0) target = $region9
    $region8: #{tpu_custom_call.1} parent=1 // pred_region
      %s34 = ssub.s32 256, 256
      %35 = vsyncadd [#allocation6], %s34
      %s36 = sshll.u32 [#allocation5], 4
      %s37 = int_to_ptr.vmem [resolvable:$true] %s36
      %42 = dma.hbm_to_vmem [thread:$0]  %s1, 256, %s37, [#allocation6], 128, 128, 8
    $region9: #{tpu_custom_call.1} parent=1 // pred_fallthru
      _
    // Predicated region
    $region10: #{tpu_custom_call.1} parent=1 // pred_check
      _
    $region11: #{tpu_custom_call.1} parent=1 // pred_check_branch
      %44 = sbr.rel (0) target = $region13
    $region12: #{tpu_custom_call.1} parent=1 // pred_region
      %s46 = ssub.s32 512, 512
      %47 = vsyncadd [#allocation6], %s46
      %s48 = sshll.u32 [#allocation7], 4
      %s49 = int_to_ptr.vmem [resolvable:$true] %s48
      %54 = dma.hbm_to_vmem [thread:$0]  %s2, 512, %s49, [#allocation6], 128, 128, 8
    $region13: #{tpu_custom_call.1} parent=1 // pred_fallthru
      _
    // Predicated region
    $region14: #{tpu_custom_call.1} parent=1 // pred_check
      _
    $region15: #{tpu_custom_call.1} parent=1 // pred_check_branch
      %56 = sbr.rel (0) target = $region17
    $region16: #{tpu_custom_call.1} parent=1 // pred_region
      _
    $region17: #{tpu_custom_call.1} parent=1 // pred_fallthru
      _
    // Predicated region
    $region18: #{tpu_custom_call.1} parent=1 // pred_check
      _
    $region19: #{tpu_custom_call.1} parent=1 // pred_check_branch
      %58 = sbr.rel (0) target = $region21
    $region20: #{tpu_custom_call.1} parent=1 // pred_region
      %s60 = ssub.s32 512, 512
      %61 = vsyncadd [#allocation9], %s60
      %s62 = sshll.u32 [#allocation8], 4
      %s63 = int_to_ptr.vmem [resolvable:$true] %s62
      %68 = dma.hbm_to_vmem [thread:$0]  %s4, 512, %s63, [#allocation9], 128, 128, 8
    $region21: #{tpu_custom_call.1} parent=1 // pred_fallthru
      _
    // Predicated region
    $region22: #{tpu_custom_call.1} parent=1 // pred_check
      _
    $region23: #{tpu_custom_call.1} parent=1 // pred_check_branch
      %70 = sbr.rel (0) target = $region25
    $region24: #{tpu_custom_call.1} parent=1 // pred_region
      _
    $region25: #{tpu_custom_call.1} parent=1 // pred_fallthru
      _
    // Predicated region
    $region26: #{tpu_custom_call.1} parent=1 // pred_check
      _
    $region27: #{tpu_custom_call.1} parent=1 // pred_check_branch
      %72 = sbr.rel (0) target = $region29
    $region28: #{tpu_custom_call.1} parent=1 // pred_region
      %s74 = ssub.s32 512, 512
      %75 = vsyncadd [#allocation9], %s74
      %s76 = sshll.u32 [#allocation10], 4
      %s77 = int_to_ptr.vmem [resolvable:$true] %s76
      %82 = dma.hbm_to_vmem [thread:$0]  %s6, 512, %s77, [#allocation9], 128, 128, 8
    $region29: #{tpu_custom_call.1} parent=1 // pred_fallthru
      _
    // Predicated region
    $region30: #{tpu_custom_call.1} parent=1 // pred_check
      _
    $region31: #{tpu_custom_call.1} parent=1 // pred_check_branch
      %84 = sbr.rel (0) target = $region33
    $region32: #{tpu_custom_call.1} parent=1 // pred_region
      _
    $region33: #{tpu_custom_call.1} parent=1 // pred_fallthru
      _
    // Predicated region
    $region34: #{tpu_custom_call.1} parent=1 // pred_check
      _
    $region35: #{tpu_custom_call.1} parent=1 // pred_check_branch
      %86 = sbr.rel (0) target = $region37
    $region36: #{tpu_custom_call.1} parent=1 // pred_region
      _
    $region37: #{tpu_custom_call.1} parent=1 // pred_fallthru
      _
    // Predicated region
    $region38: #{tpu_custom_call.1} parent=1 // pred_check
      _
    $region39: #{tpu_custom_call.1} parent=1 // pred_check_branch
      %88 = sbr.rel (0) target = $region41
    $region40: #{tpu_custom_call.1} parent=1 // pred_region
      _
    $region41: #{tpu_custom_call.1} parent=1 // pred_fallthru
      _
    // Predicated region
    $region42: #{tpu_custom_call.1} parent=1 // pred_check
      _
    $region43: #{tpu_custom_call.1} parent=1 // pred_check_branch
      %90 = sbr.rel (0) target = $region45
    $region44: #{tpu_custom_call.1} parent=1 // pred_region
      %91 = dma.done [#allocation3], 256
    $region45: #{tpu_custom_call.1} parent=1 // pred_fallthru
      _
    // Predicated region
    $region46: #{tpu_custom_call.1} parent=1 // pred_check
      _
    $region47: #{tpu_custom_call.1} parent=1 // pred_check_branch
      %93 = sbr.rel (0) target = $region49
    $region48: #{tpu_custom_call.1} parent=1 // pred_region
      %94 = dma.done [#allocation6], 256
    $region49: #{tpu_custom_call.1} parent=1 // pred_fallthru
      _
    // Predicated region
    $region50: #{tpu_custom_call.1} parent=1 // pred_check
      _
    $region51: #{tpu_custom_call.1} parent=1 // pred_check_branch
      %96 = sbr.rel (0) target = $region53
    $region52: #{tpu_custom_call.1} parent=1 // pred_region
      %97 = dma.done [#allocation6], 512
    $region53: #{tpu_custom_call.1} parent=1 // pred_fallthru
      _
    // Predicated region
    $region54: #{tpu_custom_call.1} parent=1 // pred_check
      _
    $region55: #{tpu_custom_call.1} parent=1 // pred_check_branch
      %99 = sbr.rel (0) target = $region57
    $region56: #{tpu_custom_call.1} parent=1 // pred_region
      %100 = dma.done [#allocation9], 512
    $region57: #{tpu_custom_call.1} parent=1 // pred_fallthru
      _
    // Predicated region
    $region58: #{tpu_custom_call.1} parent=1 // pred_check
      _
    $region59: #{tpu_custom_call.1} parent=1 // pred_check_branch
      %102 = sbr.rel (0) target = $region61
    $region60: #{tpu_custom_call.1} parent=1 // pred_region
      %103 = dma.done [#allocation9], 512
    $region61: #{tpu_custom_call.1} parent=1 // pred_fallthru
      _
    %v104 = vld [vmem:[#allocation2] sm:$0xff]
    %v105 = vld [vmem:[#allocation2 + $0x8] sm:$0xff]
    %v106 = vld [vmem:[#allocation5] sm:$0xff]
    %v107 = vld [vmem:[#allocation5 + $0x8] sm:$0xff]
    %v108 = vadd.f32 %v104, %v106
    %v109 = vadd.f32 %v105, %v107
    %v110 = vld [vmem:[#allocation7] sm:$0xff]
    %v111 = vld [vmem:[#allocation7 + $0x8] sm:$0xff]
    %v112 = vld [vmem:[#allocation7 + $0x10] sm:$0xff]
    %v113 = vld [vmem:[#allocation7 + $0x18] sm:$0xff]
    %v114 = vld [vmem:[%s3] sm:$0x1]
    %v116 = vlaneseq
    %v117 = vshrl.u32 %v116, 7
    %v118 = vsub.s32 0, %v117
    %v119 = vrot.slane %v114, %v118
    %vm121 = vcmask 261120
    %v123 = vsel %vm121, %v108, 0
    %v126 = vsel %vm121, %v109, 0
    %128 = vmatprep.subr.mxu0 0.0
    %129 = vmatpush1.msra.mxu0 %v110
    %130 = vmatprep.subr.mxu0 0.0
    %131 = vmatpush1.msra.mxu0 %v111
    %132 = vmatprep.subr.mxu0 0.0
    %133 = vmatpush1.msra.mxu0 %v112
    %134 = vmatprep.subr.mxu0 0.0
    %135 = vmatpush1.msra.mxu0 %v113
    %136 = vmatprep.subr.mxu0 0.0
    %137 = vmatpush1.msra.mxu0 0.0
    %138 = vmatprep.subr.mxu0 0.0
    %139 = vmatpush1.msra.mxu0 0.0
    %140 = vmatprep.subr.mxu0 0.0
    %141 = vmatpush1.msra.mxu0 0.0
    %142 = vmatprep.subr.mxu0 0.0
    %143 = vmatpush1.msra.mxu0 0.0
    %144 = vmatprep.subr.mxu0 0.0
    %145 = vmatpush1.msra.mxu0 0.0
    %146 = vmatprep.subr.mxu0 0.0
    %147 = vmatpush1.msra.mxu0 0.0
    %148 = vmatprep.subr.mxu0 0.0
    %149 = vmatpush1.msra.mxu0 0.0
    %150 = vmatprep.subr.mxu0 0.0
    %151 = vmatpush1.msra.mxu0 0.0
    %152 = vmatprep.subr.mxu0 0.0
    %153 = vmatpush1.msra.mxu0 0.0
    %154 = vmatprep.subr.mxu0 0.0
    %155 = vmatpush1.msra.mxu0 0.0
    %156 = vmatprep.subr.mxu0 0.0
    %157 = vmatpush1.msra.mxu0 0.0
    %158 = vmatprep.subr.mxu0 0.0
    %159 = vmatpush1.msra.mxu0 0.0
    %160 = vmatprep.subr.mxu0 0.0
    %161 = vmatpush1.msra.mxu0 0.0
    %162 = vmatprep.subr.mxu0 0.0
    %163 = vmatpush1.msra.mxu0 0.0
    %164 = vmatprep.subr.mxu0 0.0
    %165 = vmatpush1.msra.mxu0 0.0
    %166 = vmatprep.subr.mxu0 0.0
    %167 = vmatpush1.msra.mxu0 0.0
    %168 = vmatprep.subr.mxu0 0.0
    %169 = vmatpush1.msra.mxu0 0.0
    %170 = vmatprep.subr.mxu0 0.0
    %171 = vmatpush1.msra.mxu0 0.0
    %172 = vmatprep.subr.mxu0 0.0
    %173 = vmatpush1.msra.mxu0 0.0
    %174 = vmatprep.subr.mxu0 0.0
    %175 = vmatpush1.msra.mxu0 0.0
    %176 = vmatprep.subr.mxu0 0.0
    %177 = vmatpush1.msra.mxu0 0.0
    %178 = vmatprep.subr.mxu0 0.0
    %179 = vmatpush1.msra.mxu0 0.0
    %180 = vmatprep.subr.mxu0 0.0
    %181 = vmatpush1.msra.mxu0 0.0
    %182 = vmatprep.subr.mxu0 0.0
    %183 = vmatpush1.msra.mxu0 0.0
    %184 = vmatprep.subr.mxu0 0.0
    %185 = vmatpush1.msra.mxu0 0.0
    %186 = vmatprep.subr.mxu0 0.0
    %187 = vmatpush1.msra.mxu0 0.0
    %188 = vmatprep.subr.mxu0 0.0
    %189 = vmatpush1.msra.mxu0 0.0
    %190 = vmatprep.subr.mxu0 0.0
    %191 = vmatpush1.msra.mxu0 0.0
    %192 = vmatprep.mubr.f32.mxu0 0.0
    %193 = vmatmul.mubr.f32.gmra.mrb[0].mxu0 %v123
    %v194 = vpop.f32.mrb[0].mxu0
    %v195 = vadd.f32 %v119, %v194
    %v196 = vpop.f32.mrb[0].mxu0
    %197 = vmatprep.mubr.f32.mxu0 0.0
    %198 = vmatmul.mubr.f32.gmra.mrb[0].mxu0 %v126
    %v199 = vpop.f32.mrb[0].mxu0
    %v200 = vadd.f32 %v119, %v199
    %v201 = vpop.f32.mrb[0].mxu0
    %202 = vdwg.mxu0
    %v203 = vld [vmem:[#allocation8] sm:$0xff]
    %v204 = vld [vmem:[#allocation8 + $0x8] sm:$0xff]
    %v205 = vld [vmem:[#allocation8 + $0x10] sm:$0xff]
    %v206 = vld [vmem:[#allocation8 + $0x18] sm:$0xff]
    %v207 = vld [vmem:[%s5] sm:$0x1]
    %v209 = vlaneseq
    %v210 = vshrl.u32 %v209, 7
    %v211 = vsub.s32 0, %v210
    %v212 = vrot.slane %v207, %v211
    %v215 = vsel %vm121, %v104, 0
    %v218 = vsel %vm121, %v105, 0
    %220 = vmatprep.subr.mxu0 0.0
    %221 = vmatpush1.msra.mxu0 %v203
    %222 = vmatprep.subr.mxu0 0.0
    %223 = vmatpush1.msra.mxu0 %v204
    %224 = vmatprep.subr.mxu0 0.0
    %225 = vmatpush1.msra.mxu0 %v205
    %226 = vmatprep.subr.mxu0 0.0
    %227 = vmatpush1.msra.mxu0 %v206
    %228 = vmatprep.subr.mxu0 0.0
    %229 = vmatpush1.msra.mxu0 0.0
    %230 = vmatprep.subr.mxu0 0.0
    %231 = vmatpush1.msra.mxu0 0.0
    %232 = vmatprep.subr.mxu0 0.0
    %233 = vmatpush1.msra.mxu0 0.0
    %234 = vmatprep.subr.mxu0 0.0
    %235 = vmatpush1.msra.mxu0 0.0
    %236 = vmatprep.subr.mxu0 0.0
    %237 = vmatpush1.msra.mxu0 0.0
    %238 = vmatprep.subr.mxu0 0.0
    %239 = vmatpush1.msra.mxu0 0.0
    %240 = vmatprep.subr.mxu0 0.0
    %241 = vmatpush1.msra.mxu0 0.0
    %242 = vmatprep.subr.mxu0 0.0
    %243 = vmatpush1.msra.mxu0 0.0
    %244 = vmatprep.subr.mxu0 0.0
    %245 = vmatpush1.msra.mxu0 0.0
    %246 = vmatprep.subr.mxu0 0.0
    %247 = vmatpush1.msra.mxu0 0.0
    %248 = vmatprep.subr.mxu0 0.0
    %249 = vmatpush1.msra.mxu0 0.0
    %250 = vmatprep.subr.mxu0 0.0
    %251 = vmatpush1.msra.mxu0 0.0
    %252 = vmatprep.subr.mxu0 0.0
    %253 = vmatpush1.msra.mxu0 0.0
    %254 = vmatprep.subr.mxu0 0.0
    %255 = vmatpush1.msra.mxu0 0.0
    %256 = vmatprep.subr.mxu0 0.0
    %257 = vmatpush1.msra.mxu0 0.0
    %258 = vmatprep.subr.mxu0 0.0
    %259 = vmatpush1.msra.mxu0 0.0
    %260 = vmatprep.subr.mxu0 0.0
    %261 = vmatpush1.msra.mxu0 0.0
    %262 = vmatprep.subr.mxu0 0.0
    %263 = vmatpush1.msra.mxu0 0.0
    %264 = vmatprep.subr.mxu0 0.0
    %265 = vmatpush1.msra.mxu0 0.0
    %266 = vmatprep.subr.mxu0 0.0
    %267 = vmatpush1.msra.mxu0 0.0
    %268 = vmatprep.subr.mxu0 0.0
    %269 = vmatpush1.msra.mxu0 0.0
    %270 = vmatprep.subr.mxu0 0.0
    %271 = vmatpush1.msra.mxu0 0.0
    %272 = vmatprep.subr.mxu0 0.0
    %273 = vmatpush1.msra.mxu0 0.0
    %274 = vmatprep.subr.mxu0 0.0
    %275 = vmatpush1.msra.mxu0 0.0
    %276 = vmatprep.subr.mxu0 0.0
    %277 = vmatpush1.msra.mxu0 0.0
    %278 = vmatprep.subr.mxu0 0.0
    %279 = vmatpush1.msra.mxu0 0.0
    %280 = vmatprep.subr.mxu0 0.0
    %281 = vmatpush1.msra.mxu0 0.0
    %282 = vmatprep.subr.mxu0 0.0
    %283 = vmatpush1.msra.mxu0 0.0
    %284 = vmatprep.mubr.f32.mxu0 0.0
    %285 = vmatmul.mubr.f32.gmra.mrb[0].mxu0 %v215
    %v286 = vpop.f32.mrb[0].mxu0
    %v287 = vadd.f32 %v212, %v286
    %v288 = vpop.f32.mrb[0].mxu0
    %289 = vmatprep.mubr.f32.mxu0 0.0
    %290 = vmatmul.mubr.f32.gmra.mrb[0].mxu0 %v218
    %v291 = vpop.f32.mrb[0].mxu0
    %v292 = vadd.f32 %v212, %v291
    %v293 = vpop.f32.mrb[0].mxu0
    %294 = vdwg.mxu0
    %297 = vrot.lane.b32.xlu0 %v195, 120
    %v298 = vpop.permute.xlu0 %297
    %299 = vrot.lane.b32.xlu0 %v200, 120
    %v300 = vpop.permute.xlu0 %299
    %303 = vrot.lane.b32.xlu0 %v195, 112
    %v304 = vpop.permute.xlu0 %303
    %305 = vrot.lane.b32.xlu0 %v200, 112
    %v306 = vpop.permute.xlu0 %305
    %309 = vrot.lane.b32.xlu0 %v195, 104
    %v310 = vpop.permute.xlu0 %309
    %311 = vrot.lane.b32.xlu0 %v200, 104
    %v312 = vpop.permute.xlu0 %311
    %v315 = vcombine.low %v195, %v304
    %v316 = vcombine.high %v195, %v304
    %v318 = vunpack.c.l.s4 1983009808
    %v319 = vunpack.c.0.s8 %v318
    %v320 = vlaneseq
    %v321 = vshrl.u32 %v320, 7
    %v322 = vsub.s32 %v319, %v321
    %v323 = vrot.slane %v315, %v322
    %v325 = vunpack.c.l.s4 1983009808
    %v326 = vunpack.c.0.s8 %v325
    %v327 = vlaneseq
    %v328 = vshrl.u32 %v327, 7
    %v329 = vsub.s32 %v326, %v328
    %v330 = vrot.slane %v316, %v329
    %v331 = vcombine.low %v298, %v310
    %v332 = vcombine.high %v298, %v310
    %v334 = vunpack.c.l.s4 1983009808
    %v335 = vunpack.c.0.s8 %v334
    %v336 = vlaneseq
    %v337 = vshrl.u32 %v336, 7
    %v338 = vsub.s32 %v335, %v337
    %v339 = vrot.slane %v331, %v338
    %v341 = vunpack.c.l.s4 1983009808
    %v342 = vunpack.c.0.s8 %v341
    %v343 = vlaneseq
    %v344 = vshrl.u32 %v343, 7
    %v345 = vsub.s32 %v342, %v344
    %v346 = vrot.slane %v332, %v345
    %v347 = vcombine.low %v323, %v339
    %v348 = vcombine.high %v323, %v339
    %v350 = vunpack.c.l.s4 1934713408
    %v351 = vunpack.c.0.s8 %v350
    %v352 = vlaneseq
    %v353 = vshrl.u32 %v352, 7
    %v354 = vsub.s32 %v351, %v353
    %v355 = vrot.slane %v347, %v354
    %v357 = vunpack.c.l.s4 1934713408
    %v358 = vunpack.c.0.s8 %v357
    %v359 = vlaneseq
    %v360 = vshrl.u32 %v359, 7
    %v361 = vsub.s32 %v358, %v360
    %v362 = vrot.slane %v348, %v361
    %v363 = vcombine.low %v330, %v346
    %v364 = vcombine.high %v330, %v346
    %v366 = vunpack.c.l.s4 1934713408
    %v367 = vunpack.c.0.s8 %v366
    %v368 = vlaneseq
    %v369 = vshrl.u32 %v368, 7
    %v370 = vsub.s32 %v367, %v369
    %v371 = vrot.slane %v363, %v370
    %v373 = vunpack.c.l.s4 1934713408
    %v374 = vunpack.c.0.s8 %v373
    %v375 = vlaneseq
    %v376 = vshrl.u32 %v375, 7
    %v377 = vsub.s32 %v374, %v376
    %v378 = vrot.slane %v364, %v377
    %v379 = vcombine.high %v355, 0.0
    %v380 = vcombine.high %v362, 0.0
    %v381 = vcombine.high %v371, 0.0
    %v382 = vcombine.high %v378, 0.0
    %v383 = vcombine.low %v200, %v306
    %v384 = vcombine.high %v200, %v306
    %v386 = vunpack.c.l.s4 1983009808
    %v387 = vunpack.c.0.s8 %v386
    %v388 = vlaneseq
    %v389 = vshrl.u32 %v388, 7
    %v390 = vsub.s32 %v387, %v389
    %v391 = vrot.slane %v383, %v390
    %v393 = vunpack.c.l.s4 1983009808
    %v394 = vunpack.c.0.s8 %v393
    %v395 = vlaneseq
    %v396 = vshrl.u32 %v395, 7
    %v397 = vsub.s32 %v394, %v396
    %v398 = vrot.slane %v384, %v397
    %v399 = vcombine.low %v300, %v312
    %v400 = vcombine.high %v300, %v312
    %v402 = vunpack.c.l.s4 1983009808
    %v403 = vunpack.c.0.s8 %v402
    %v404 = vlaneseq
    %v405 = vshrl.u32 %v404, 7
    %v406 = vsub.s32 %v403, %v405
    %v407 = vrot.slane %v399, %v406
    %v409 = vunpack.c.l.s4 1983009808
    %v410 = vunpack.c.0.s8 %v409
    %v411 = vlaneseq
    %v412 = vshrl.u32 %v411, 7
    %v413 = vsub.s32 %v410, %v412
    %v414 = vrot.slane %v400, %v413
    %v415 = vcombine.low %v391, %v407
    %v416 = vcombine.high %v391, %v407
    %v418 = vunpack.c.l.s4 1934713408
    %v419 = vunpack.c.0.s8 %v418
    %v420 = vlaneseq
    %v421 = vshrl.u32 %v420, 7
    %v422 = vsub.s32 %v419, %v421
    %v423 = vrot.slane %v415, %v422
    %v425 = vunpack.c.l.s4 1934713408
    %v426 = vunpack.c.0.s8 %v425
    %v427 = vlaneseq
    %v428 = vshrl.u32 %v427, 7
    %v429 = vsub.s32 %v426, %v428
    %v430 = vrot.slane %v416, %v429
    %v431 = vcombine.low %v398, %v414
    %v432 = vcombine.high %v398, %v414
    %v434 = vunpack.c.l.s4 1934713408
    %v435 = vunpack.c.0.s8 %v434
    %v436 = vlaneseq
    %v437 = vshrl.u32 %v436, 7
    %v438 = vsub.s32 %v435, %v437
    %v439 = vrot.slane %v431, %v438
    %v441 = vunpack.c.l.s4 1934713408
    %v442 = vunpack.c.0.s8 %v441
    %v443 = vlaneseq
    %v444 = vshrl.u32 %v443, 7
    %v445 = vsub.s32 %v442, %v444
    %v446 = vrot.slane %v432, %v445
    %v447 = vcombine.high %v423, 0.0
    %v448 = vcombine.high %v430, 0.0
    %v449 = vcombine.high %v439, 0.0
    %v450 = vcombine.high %v446, 0.0
    %v451 = vcombine.low %v355, %v362
    %v453 = vunpack.c.l.s4 1983009808
    %v454 = vunpack.c.0.s8 %v453
    %v455 = vlaneseq
    %v456 = vshrl.u32 %v455, 7
    %v457 = vsub.s32 %v454, %v456
    %v458 = vrot.slane %v451, %v457
    %v459 = vcombine.low %v379, %v380
    %v461 = vunpack.c.l.s4 1983009808
    %v462 = vunpack.c.0.s8 %v461
    %v463 = vlaneseq
    %v464 = vshrl.u32 %v463, 7
    %v465 = vsub.s32 %v462, %v464
    %v466 = vrot.slane %v459, %v465
    %v467 = vcombine.low %v371, %v378
    %v469 = vunpack.c.l.s4 1983009808
    %v470 = vunpack.c.0.s8 %v469
    %v471 = vlaneseq
    %v472 = vshrl.u32 %v471, 7
    %v473 = vsub.s32 %v470, %v472
    %v474 = vrot.slane %v467, %v473
    %v475 = vcombine.low %v381, %v382
    %v477 = vunpack.c.l.s4 1983009808
    %v478 = vunpack.c.0.s8 %v477
    %v479 = vlaneseq
    %v480 = vshrl.u32 %v479, 7
    %v481 = vsub.s32 %v478, %v480
    %v482 = vrot.slane %v475, %v481
    %v483 = vcombine.low %v458, %v466
    %v484 = vcombine.high %v458, %v466
    %v486 = vunpack.c.l.s4 1934713408
    %v487 = vunpack.c.0.s8 %v486
    %v488 = vlaneseq
    %v489 = vshrl.u32 %v488, 7
    %v490 = vsub.s32 %v487, %v489
    %v491 = vrot.slane %v483, %v490
    %v493 = vunpack.c.l.s4 1934713408
    %v494 = vunpack.c.0.s8 %v493
    %v495 = vlaneseq
    %v496 = vshrl.u32 %v495, 7
    %v497 = vsub.s32 %v494, %v496
    %v498 = vrot.slane %v484, %v497
    %v499 = vcombine.low %v474, %v482
    %v500 = vcombine.high %v474, %v482
    %v502 = vunpack.c.l.s4 1934713408
    %v503 = vunpack.c.0.s8 %v502
    %v504 = vlaneseq
    %v505 = vshrl.u32 %v504, 7
    %v506 = vsub.s32 %v503, %v505
    %v507 = vrot.slane %v499, %v506
    %v509 = vunpack.c.l.s4 1934713408
    %v510 = vunpack.c.0.s8 %v509
    %v511 = vlaneseq
    %v512 = vshrl.u32 %v511, 7
    %v513 = vsub.s32 %v510, %v512
    %v514 = vrot.slane %v500, %v513
    %v515 = vcombine.low %v491, %v507
    %v516 = vcombine.high %v491, %v507
    %v517 = vcombine.low %v498, %v514
    %v518 = vcombine.high %v498, %v514
    %v519 = vcombine.low %v423, %v430
    %v521 = vunpack.c.l.s4 1983009808
    %v522 = vunpack.c.0.s8 %v521
    %v523 = vlaneseq
    %v524 = vshrl.u32 %v523, 7
    %v525 = vsub.s32 %v522, %v524
    %v526 = vrot.slane %v519, %v525
    %v527 = vcombine.low %v447, %v448
    %v529 = vunpack.c.l.s4 1983009808
    %v530 = vunpack.c.0.s8 %v529
    %v531 = vlaneseq
    %v532 = vshrl.u32 %v531, 7
    %v533 = vsub.s32 %v530, %v532
    %v534 = vrot.slane %v527, %v533
    %v535 = vcombine.low %v439, %v446
    %v537 = vunpack.c.l.s4 1983009808
    %v538 = vunpack.c.0.s8 %v537
    %v539 = vlaneseq
    %v540 = vshrl.u32 %v539, 7
    %v541 = vsub.s32 %v538, %v540
    %v542 = vrot.slane %v535, %v541
    %v543 = vcombine.low %v449, %v450
    %v545 = vunpack.c.l.s4 1983009808
    %v546 = vunpack.c.0.s8 %v545
    %v547 = vlaneseq
    %v548 = vshrl.u32 %v547, 7
    %v549 = vsub.s32 %v546, %v548
    %v550 = vrot.slane %v543, %v549
    %v551 = vcombine.low %v526, %v534
    %v552 = vcombine.high %v526, %v534
    %v554 = vunpack.c.l.s4 1934713408
    %v555 = vunpack.c.0.s8 %v554
    %v556 = vlaneseq
    %v557 = vshrl.u32 %v556, 7
    %v558 = vsub.s32 %v555, %v557
    %v559 = vrot.slane %v551, %v558
    %v561 = vunpack.c.l.s4 1934713408
    %v562 = vunpack.c.0.s8 %v561
    %v563 = vlaneseq
    %v564 = vshrl.u32 %v563, 7
    %v565 = vsub.s32 %v562, %v564
    %v566 = vrot.slane %v552, %v565
    %v567 = vcombine.low %v542, %v550
    %v568 = vcombine.high %v542, %v550
    %v570 = vunpack.c.l.s4 1934713408
    %v571 = vunpack.c.0.s8 %v570
    %v572 = vlaneseq
    %v573 = vshrl.u32 %v572, 7
    %v574 = vsub.s32 %v571, %v573
    %v575 = vrot.slane %v567, %v574
    %v577 = vunpack.c.l.s4 1934713408
    %v578 = vunpack.c.0.s8 %v577
    %v579 = vlaneseq
    %v580 = vshrl.u32 %v579, 7
    %v581 = vsub.s32 %v578, %v580
    %v582 = vrot.slane %v568, %v581
    %v583 = vcombine.low %v559, %v575
    %v584 = vcombine.high %v559, %v575
    %v585 = vcombine.low %v566, %v582
    %v586 = vcombine.high %v566, %v582
    %587 = vrot.lane.b32.xlu0 %v195, 96
    %v588 = vpop.permute.xlu0 %587
    %589 = vrot.lane.b32.xlu0 %v200, 96
    %v590 = vpop.permute.xlu0 %589
    %591 = vrot.lane.b32.xlu0 %v298, 96
    %v592 = vpop.permute.xlu0 %591
    %593 = vrot.lane.b32.xlu0 %v300, 96
    %v594 = vpop.permute.xlu0 %593
    %595 = vrot.lane.b32.xlu0 %v304, 96
    %v596 = vpop.permute.xlu0 %595
    %597 = vrot.lane.b32.xlu0 %v306, 96
    %v598 = vpop.permute.xlu0 %597
    %599 = vrot.lane.b32.xlu0 %v310, 96
    %v600 = vpop.permute.xlu0 %599
    %601 = vrot.lane.b32.xlu0 %v312, 96
    %v602 = vpop.permute.xlu0 %601
    %v611 = vcombine.low %v588, %v596
    %v612 = vcombine.high %v588, %v596
    %v614 = vunpack.c.l.s4 1983009808
    %v615 = vunpack.c.0.s8 %v614
    %v616 = vlaneseq
    %v617 = vshrl.u32 %v616, 7
    %v618 = vsub.s32 %v615, %v617
    %v619 = vrot.slane %v611, %v618
    %v621 = vunpack.c.l.s4 1983009808
    %v622 = vunpack.c.0.s8 %v621
    %v623 = vlaneseq
    %v624 = vshrl.u32 %v623, 7
    %v625 = vsub.s32 %v622, %v624
    %v626 = vrot.slane %v612, %v625
    %v627 = vcombine.low %v592, %v600
    %v628 = vcombine.high %v592, %v600
    %v630 = vunpack.c.l.s4 1983009808
    %v631 = vunpack.c.0.s8 %v630
    %v632 = vlaneseq
    %v633 = vshrl.u32 %v632, 7
    %v634 = vsub.s32 %v631, %v633
    %v635 = vrot.slane %v627, %v634
    %v637 = vunpack.c.l.s4 1983009808
    %v638 = vunpack.c.0.s8 %v637
    %v639 = vlaneseq
    %v640 = vshrl.u32 %v639, 7
    %v641 = vsub.s32 %v638, %v640
    %v642 = vrot.slane %v628, %v641
    %v643 = vcombine.low %v619, %v635
    %v644 = vcombine.high %v619, %v635
    %v646 = vunpack.c.l.s4 1934713408
    %v647 = vunpack.c.0.s8 %v646
    %v648 = vlaneseq
    %v649 = vshrl.u32 %v648, 7
    %v650 = vsub.s32 %v647, %v649
    %v651 = vrot.slane %v643, %v650
    %v653 = vunpack.c.l.s4 1934713408
    %v654 = vunpack.c.0.s8 %v653
    %v655 = vlaneseq
    %v656 = vshrl.u32 %v655, 7
    %v657 = vsub.s32 %v654, %v656
    %v658 = vrot.slane %v644, %v657
    %v659 = vcombine.low %v626, %v642
    %v660 = vcombine.high %v626, %v642
    %v662 = vunpack.c.l.s4 1934713408
    %v663 = vunpack.c.0.s8 %v662
    %v664 = vlaneseq
    %v665 = vshrl.u32 %v664, 7
    %v666 = vsub.s32 %v663, %v665
    %v667 = vrot.slane %v659, %v666
    %v669 = vunpack.c.l.s4 1934713408
    %v670 = vunpack.c.0.s8 %v669
    %v671 = vlaneseq
    %v672 = vshrl.u32 %v671, 7
    %v673 = vsub.s32 %v670, %v672
    %v674 = vrot.slane %v660, %v673
    %v675 = vcombine.high %v651, 0.0
    %v676 = vcombine.high %v658, 0.0
    %v677 = vcombine.high %v667, 0.0
    %v678 = vcombine.high %v674, 0.0
    %v679 = vcombine.low %v590, %v598
    %v680 = vcombine.high %v590, %v598
    %v682 = vunpack.c.l.s4 1983009808
    %v683 = vunpack.c.0.s8 %v682
    %v684 = vlaneseq
    %v685 = vshrl.u32 %v684, 7
    %v686 = vsub.s32 %v683, %v685
    %v687 = vrot.slane %v679, %v686
    %v689 = vunpack.c.l.s4 1983009808
    %v690 = vunpack.c.0.s8 %v689
    %v691 = vlaneseq
    %v692 = vshrl.u32 %v691, 7
    %v693 = vsub.s32 %v690, %v692
    %v694 = vrot.slane %v680, %v693
    %v695 = vcombine.low %v594, %v602
    %v696 = vcombine.high %v594, %v602
    %v698 = vunpack.c.l.s4 1983009808
    %v699 = vunpack.c.0.s8 %v698
    %v700 = vlaneseq
    %v701 = vshrl.u32 %v700, 7
    %v702 = vsub.s32 %v699, %v701
    %v703 = vrot.slane %v695, %v702
    %v705 = vunpack.c.l.s4 1983009808
    %v706 = vunpack.c.0.s8 %v705
    %v707 = vlaneseq
    %v708 = vshrl.u32 %v707, 7
    %v709 = vsub.s32 %v706, %v708
    %v710 = vrot.slane %v696, %v709
    %v711 = vcombine.low %v687, %v703
    %v712 = vcombine.high %v687, %v703
    %v714 = vunpack.c.l.s4 1934713408
    %v715 = vunpack.c.0.s8 %v714
    %v716 = vlaneseq
    %v717 = vshrl.u32 %v716, 7
    %v718 = vsub.s32 %v715, %v717
    %v719 = vrot.slane %v711, %v718
    %v721 = vunpack.c.l.s4 1934713408
    %v722 = vunpack.c.0.s8 %v721
    %v723 = vlaneseq
    %v724 = vshrl.u32 %v723, 7
    %v725 = vsub.s32 %v722, %v724
    %v726 = vrot.slane %v712, %v725
    %v727 = vcombine.low %v694, %v710
    %v728 = vcombine.high %v694, %v710
    %v730 = vunpack.c.l.s4 1934713408
    %v731 = vunpack.c.0.s8 %v730
    %v732 = vlaneseq
    %v733 = vshrl.u32 %v732, 7
    %v734 = vsub.s32 %v731, %v733
    %v735 = vrot.slane %v727, %v734
    %v737 = vunpack.c.l.s4 1934713408
    %v738 = vunpack.c.0.s8 %v737
    %v739 = vlaneseq
    %v740 = vshrl.u32 %v739, 7
    %v741 = vsub.s32 %v738, %v740
    %v742 = vrot.slane %v728, %v741
    %v743 = vcombine.high %v719, 0.0
    %v744 = vcombine.high %v726, 0.0
    %v745 = vcombine.high %v735, 0.0
    %v746 = vcombine.high %v742, 0.0
    %v747 = vcombine.low %v651, %v658
    %v749 = vunpack.c.l.s4 1983009808
    %v750 = vunpack.c.0.s8 %v749
    %v751 = vlaneseq
    %v752 = vshrl.u32 %v751, 7
    %v753 = vsub.s32 %v750, %v752
    %v754 = vrot.slane %v747, %v753
    %v755 = vcombine.low %v675, %v676
    %v757 = vunpack.c.l.s4 1983009808
    %v758 = vunpack.c.0.s8 %v757
    %v759 = vlaneseq
    %v760 = vshrl.u32 %v759, 7
    %v761 = vsub.s32 %v758, %v760
    %v762 = vrot.slane %v755, %v761
    %v763 = vcombine.low %v667, %v674
    %v765 = vunpack.c.l.s4 1983009808
    %v766 = vunpack.c.0.s8 %v765
    %v767 = vlaneseq
    %v768 = vshrl.u32 %v767, 7
    %v769 = vsub.s32 %v766, %v768
    %v770 = vrot.slane %v763, %v769
    %v771 = vcombine.low %v677, %v678
    %v773 = vunpack.c.l.s4 1983009808
    %v774 = vunpack.c.0.s8 %v773
    %v775 = vlaneseq
    %v776 = vshrl.u32 %v775, 7
    %v777 = vsub.s32 %v774, %v776
    %v778 = vrot.slane %v771, %v777
    %v779 = vcombine.low %v754, %v762
    %v780 = vcombine.high %v754, %v762
    %v782 = vunpack.c.l.s4 1934713408
    %v783 = vunpack.c.0.s8 %v782
    %v784 = vlaneseq
    %v785 = vshrl.u32 %v784, 7
    %v786 = vsub.s32 %v783, %v785
    %v787 = vrot.slane %v779, %v786
    %v789 = vunpack.c.l.s4 1934713408
    %v790 = vunpack.c.0.s8 %v789
    %v791 = vlaneseq
    %v792 = vshrl.u32 %v791, 7
    %v793 = vsub.s32 %v790, %v792
    %v794 = vrot.slane %v780, %v793
    %v795 = vcombine.low %v770, %v778
    %v796 = vcombine.high %v770, %v778
    %v798 = vunpack.c.l.s4 1934713408
    %v799 = vunpack.c.0.s8 %v798
    %v800 = vlaneseq
    %v801 = vshrl.u32 %v800, 7
    %v802 = vsub.s32 %v799, %v801
    %v803 = vrot.slane %v795, %v802
    %v805 = vunpack.c.l.s4 1934713408
    %v806 = vunpack.c.0.s8 %v805
    %v807 = vlaneseq
    %v808 = vshrl.u32 %v807, 7
    %v809 = vsub.s32 %v806, %v808
    %v810 = vrot.slane %v796, %v809
    %v811 = vcombine.low %v787, %v803
    %v812 = vcombine.high %v787, %v803
    %v813 = vcombine.low %v794, %v810
    %v814 = vcombine.high %v794, %v810
    %v815 = vcombine.low %v719, %v726
    %v817 = vunpack.c.l.s4 1983009808
    %v818 = vunpack.c.0.s8 %v817
    %v819 = vlaneseq
    %v820 = vshrl.u32 %v819, 7
    %v821 = vsub.s32 %v818, %v820
    %v822 = vrot.slane %v815, %v821
    %v823 = vcombine.low %v743, %v744
    %v825 = vunpack.c.l.s4 1983009808
    %v826 = vunpack.c.0.s8 %v825
    %v827 = vlaneseq
    %v828 = vshrl.u32 %v827, 7
    %v829 = vsub.s32 %v826, %v828
    %v830 = vrot.slane %v823, %v829
    %v831 = vcombine.low %v735, %v742
    %v833 = vunpack.c.l.s4 1983009808
    %v834 = vunpack.c.0.s8 %v833
    %v835 = vlaneseq
    %v836 = vshrl.u32 %v835, 7
    %v837 = vsub.s32 %v834, %v836
    %v838 = vrot.slane %v831, %v837
    %v839 = vcombine.low %v745, %v746
    %v841 = vunpack.c.l.s4 1983009808
    %v842 = vunpack.c.0.s8 %v841
    %v843 = vlaneseq
    %v844 = vshrl.u32 %v843, 7
    %v845 = vsub.s32 %v842, %v844
    %v846 = vrot.slane %v839, %v845
    %v847 = vcombine.low %v822, %v830
    %v848 = vcombine.high %v822, %v830
    %v850 = vunpack.c.l.s4 1934713408
    %v851 = vunpack.c.0.s8 %v850
    %v852 = vlaneseq
    %v853 = vshrl.u32 %v852, 7
    %v854 = vsub.s32 %v851, %v853
    %v855 = vrot.slane %v847, %v854
    %v857 = vunpack.c.l.s4 1934713408
    %v858 = vunpack.c.0.s8 %v857
    %v859 = vlaneseq
    %v860 = vshrl.u32 %v859, 7
    %v861 = vsub.s32 %v858, %v860
    %v862 = vrot.slane %v848, %v861
    %v863 = vcombine.low %v838, %v846
    %v864 = vcombine.high %v838, %v846
    %v866 = vunpack.c.l.s4 1934713408
    %v867 = vunpack.c.0.s8 %v866
    %v868 = vlaneseq
    %v869 = vshrl.u32 %v868, 7
    %v870 = vsub.s32 %v867, %v869
    %v871 = vrot.slane %v863, %v870
    %v873 = vunpack.c.l.s4 1934713408
    %v874 = vunpack.c.0.s8 %v873
    %v875 = vlaneseq
    %v876 = vshrl.u32 %v875, 7
    %v877 = vsub.s32 %v874, %v876
    %v878 = vrot.slane %v864, %v877
    %v879 = vcombine.low %v855, %v871
    %v880 = vcombine.high %v855, %v871
    %v881 = vcombine.low %v862, %v878
    %v882 = vcombine.high %v862, %v878
    %885 = vrot.lane.b32.xlu0 %v287, 120
    %v886 = vpop.permute.xlu0 %885
    %887 = vrot.lane.b32.xlu0 %v292, 120
    %v888 = vpop.permute.xlu0 %887
    %891 = vrot.lane.b32.xlu0 %v287, 112
    %v892 = vpop.permute.xlu0 %891
    %893 = vrot.lane.b32.xlu0 %v292, 112
    %v894 = vpop.permute.xlu0 %893
    %897 = vrot.lane.b32.xlu0 %v287, 104
    %v898 = vpop.permute.xlu0 %897
    %899 = vrot.lane.b32.xlu0 %v292, 104
    %v900 = vpop.permute.xlu0 %899
    %v903 = vcombine.low %v287, %v892
    %v904 = vcombine.high %v287, %v892
    %v906 = vunpack.c.l.s4 1983009808
    %v907 = vunpack.c.0.s8 %v906
    %v908 = vlaneseq
    %v909 = vshrl.u32 %v908, 7
    %v910 = vsub.s32 %v907, %v909
    %v911 = vrot.slane %v903, %v910
    %v913 = vunpack.c.l.s4 1983009808
    %v914 = vunpack.c.0.s8 %v913
    %v915 = vlaneseq
    %v916 = vshrl.u32 %v915, 7
    %v917 = vsub.s32 %v914, %v916
    %v918 = vrot.slane %v904, %v917
    %v919 = vcombine.low %v886, %v898
    %v920 = vcombine.high %v886, %v898
    %v922 = vunpack.c.l.s4 1983009808
    %v923 = vunpack.c.0.s8 %v922
    %v924 = vlaneseq
    %v925 = vshrl.u32 %v924, 7
    %v926 = vsub.s32 %v923, %v925
    %v927 = vrot.slane %v919, %v926
    %v929 = vunpack.c.l.s4 1983009808
    %v930 = vunpack.c.0.s8 %v929
    %v931 = vlaneseq
    %v932 = vshrl.u32 %v931, 7
    %v933 = vsub.s32 %v930, %v932
    %v934 = vrot.slane %v920, %v933
    %v935 = vcombine.low %v911, %v927
    %v936 = vcombine.high %v911, %v927
    %v938 = vunpack.c.l.s4 1934713408
    %v939 = vunpack.c.0.s8 %v938
    %v940 = vlaneseq
    %v941 = vshrl.u32 %v940, 7
    %v942 = vsub.s32 %v939, %v941
    %v943 = vrot.slane %v935, %v942
    %v945 = vunpack.c.l.s4 1934713408
    %v946 = vunpack.c.0.s8 %v945
    %v947 = vlaneseq
    %v948 = vshrl.u32 %v947, 7
    %v949 = vsub.s32 %v946, %v948
    %v950 = vrot.slane %v936, %v949
    %v951 = vcombine.low %v918, %v934
    %v952 = vcombine.high %v918, %v934
    %v954 = vunpack.c.l.s4 1934713408
    %v955 = vunpack.c.0.s8 %v954
    %v956 = vlaneseq
    %v957 = vshrl.u32 %v956, 7
    %v958 = vsub.s32 %v955, %v957
    %v959 = vrot.slane %v951, %v958
    %v961 = vunpack.c.l.s4 1934713408
    %v962 = vunpack.c.0.s8 %v961
    %v963 = vlaneseq
    %v964 = vshrl.u32 %v963, 7
    %v965 = vsub.s32 %v962, %v964
    %v966 = vrot.slane %v952, %v965
    %v967 = vcombine.high %v943, 0.0
    %v968 = vcombine.high %v950, 0.0
    %v969 = vcombine.high %v959, 0.0
    %v970 = vcombine.high %v966, 0.0
    %v971 = vcombine.low %v292, %v894
    %v972 = vcombine.high %v292, %v894
    %v974 = vunpack.c.l.s4 1983009808
    %v975 = vunpack.c.0.s8 %v974
    %v976 = vlaneseq
    %v977 = vshrl.u32 %v976, 7
    %v978 = vsub.s32 %v975, %v977
    %v979 = vrot.slane %v971, %v978
    %v981 = vunpack.c.l.s4 1983009808
    %v982 = vunpack.c.0.s8 %v981
    %v983 = vlaneseq
    %v984 = vshrl.u32 %v983, 7
    %v985 = vsub.s32 %v982, %v984
    %v986 = vrot.slane %v972, %v985
    %v987 = vcombine.low %v888, %v900
    %v988 = vcombine.high %v888, %v900
    %v990 = vunpack.c.l.s4 1983009808
    %v991 = vunpack.c.0.s8 %v990
    %v992 = vlaneseq
    %v993 = vshrl.u32 %v992, 7
    %v994 = vsub.s32 %v991, %v993
    %v995 = vrot.slane %v987, %v994
    %v997 = vunpack.c.l.s4 1983009808
    %v998 = vunpack.c.0.s8 %v997
    %v999 = vlaneseq
    %v1000 = vshrl.u32 %v999, 7
    %v1001 = vsub.s32 %v998, %v1000
    %v1002 = vrot.slane %v988, %v1001
    %v1003 = vcombine.low %v979, %v995
    %v1004 = vcombine.high %v979, %v995
    %v1006 = vunpack.c.l.s4 1934713408
    %v1007 = vunpack.c.0.s8 %v1006
    %v1008 = vlaneseq
    %v1009 = vshrl.u32 %v1008, 7
    %v1010 = vsub.s32 %v1007, %v1009
    %v1011 = vrot.slane %v1003, %v1010
    %v1013 = vunpack.c.l.s4 1934713408
    %v1014 = vunpack.c.0.s8 %v1013
    %v1015 = vlaneseq
    %v1016 = vshrl.u32 %v1015, 7
    %v1017 = vsub.s32 %v1014, %v1016
    %v1018 = vrot.slane %v1004, %v1017
    %v1019 = vcombine.low %v986, %v1002
    %v1020 = vcombine.high %v986, %v1002
    %v1022 = vunpack.c.l.s4 1934713408
    %v1023 = vunpack.c.0.s8 %v1022
    %v1024 = vlaneseq
    %v1025 = vshrl.u32 %v1024, 7
    %v1026 = vsub.s32 %v1023, %v1025
    %v1027 = vrot.slane %v1019, %v1026
    %v1029 = vunpack.c.l.s4 1934713408
    %v1030 = vunpack.c.0.s8 %v1029
    %v1031 = vlaneseq
    %v1032 = vshrl.u32 %v1031, 7
    %v1033 = vsub.s32 %v1030, %v1032
    %v1034 = vrot.slane %v1020, %v1033
    %v1035 = vcombine.high %v1011, 0.0
    %v1036 = vcombine.high %v1018, 0.0
    %v1037 = vcombine.high %v1027, 0.0
    %v1038 = vcombine.high %v1034, 0.0
    %v1039 = vcombine.low %v943, %v950
    %v1041 = vunpack.c.l.s4 1983009808
    %v1042 = vunpack.c.0.s8 %v1041
    %v1043 = vlaneseq
    %v1044 = vshrl.u32 %v1043, 7
    %v1045 = vsub.s32 %v1042, %v1044
    %v1046 = vrot.slane %v1039, %v1045
    %v1047 = vcombine.low %v967, %v968
    %v1049 = vunpack.c.l.s4 1983009808
    %v1050 = vunpack.c.0.s8 %v1049
    %v1051 = vlaneseq
    %v1052 = vshrl.u32 %v1051, 7
    %v1053 = vsub.s32 %v1050, %v1052
    %v1054 = vrot.slane %v1047, %v1053
    %v1055 = vcombine.low %v959, %v966
    %v1057 = vunpack.c.l.s4 1983009808
    %v1058 = vunpack.c.0.s8 %v1057
    %v1059 = vlaneseq
    %v1060 = vshrl.u32 %v1059, 7
    %v1061 = vsub.s32 %v1058, %v1060
    %v1062 = vrot.slane %v1055, %v1061
    %v1063 = vcombine.low %v969, %v970
    %v1065 = vunpack.c.l.s4 1983009808
    %v1066 = vunpack.c.0.s8 %v1065
    %v1067 = vlaneseq
    %v1068 = vshrl.u32 %v1067, 7
    %v1069 = vsub.s32 %v1066, %v1068
    %v1070 = vrot.slane %v1063, %v1069
    %v1071 = vcombine.low %v1046, %v1054
    %v1072 = vcombine.high %v1046, %v1054
    %v1074 = vunpack.c.l.s4 1934713408
    %v1075 = vunpack.c.0.s8 %v1074
    %v1076 = vlaneseq
    %v1077 = vshrl.u32 %v1076, 7
    %v1078 = vsub.s32 %v1075, %v1077
    %v1079 = vrot.slane %v1071, %v1078
    %v1081 = vunpack.c.l.s4 1934713408
    %v1082 = vunpack.c.0.s8 %v1081
    %v1083 = vlaneseq
    %v1084 = vshrl.u32 %v1083, 7
    %v1085 = vsub.s32 %v1082, %v1084
    %v1086 = vrot.slane %v1072, %v1085
    %v1087 = vcombine.low %v1062, %v1070
    %v1088 = vcombine.high %v1062, %v1070
    %v1090 = vunpack.c.l.s4 1934713408
    %v1091 = vunpack.c.0.s8 %v1090
    %v1092 = vlaneseq
    %v1093 = vshrl.u32 %v1092, 7
    %v1094 = vsub.s32 %v1091, %v1093
    %v1095 = vrot.slane %v1087, %v1094
    %v1097 = vunpack.c.l.s4 1934713408
    %v1098 = vunpack.c.0.s8 %v1097
    %v1099 = vlaneseq
    %v1100 = vshrl.u32 %v1099, 7
    %v1101 = vsub.s32 %v1098, %v1100
    %v1102 = vrot.slane %v1088, %v1101
    %v1103 = vcombine.low %v1079, %v1095
    %v1104 = vcombine.high %v1079, %v1095
    %v1105 = vcombine.low %v1086, %v1102
    %v1106 = vcombine.high %v1086, %v1102
    %v1107 = vcombine.low %v1011, %v1018
    %v1109 = vunpack.c.l.s4 1983009808
    %v1110 = vunpack.c.0.s8 %v1109
    %v1111 = vlaneseq
    %v1112 = vshrl.u32 %v1111, 7
    %v1113 = vsub.s32 %v1110, %v1112
    %v1114 = vrot.slane %v1107, %v1113
    %v1115 = vcombine.low %v1035, %v1036
    %v1117 = vunpack.c.l.s4 1983009808
    %v1118 = vunpack.c.0.s8 %v1117
    %v1119 = vlaneseq
    %v1120 = vshrl.u32 %v1119, 7
    %v1121 = vsub.s32 %v1118, %v1120
    %v1122 = vrot.slane %v1115, %v1121
    %v1123 = vcombine.low %v1027, %v1034
    %v1125 = vunpack.c.l.s4 1983009808
    %v1126 = vunpack.c.0.s8 %v1125
    %v1127 = vlaneseq
    %v1128 = vshrl.u32 %v1127, 7
    %v1129 = vsub.s32 %v1126, %v1128
    %v1130 = vrot.slane %v1123, %v1129
    %v1131 = vcombine.low %v1037, %v1038
    %v1133 = vunpack.c.l.s4 1983009808
    %v1134 = vunpack.c.0.s8 %v1133
    %v1135 = vlaneseq
    %v1136 = vshrl.u32 %v1135, 7
    %v1137 = vsub.s32 %v1134, %v1136
    %v1138 = vrot.slane %v1131, %v1137
    %v1139 = vcombine.low %v1114, %v1122
    %v1140 = vcombine.high %v1114, %v1122
    %v1142 = vunpack.c.l.s4 1934713408
    %v1143 = vunpack.c.0.s8 %v1142
    %v1144 = vlaneseq
    %v1145 = vshrl.u32 %v1144, 7
    %v1146 = vsub.s32 %v1143, %v1145
    %v1147 = vrot.slane %v1139, %v1146
    %v1149 = vunpack.c.l.s4 1934713408
    %v1150 = vunpack.c.0.s8 %v1149
    %v1151 = vlaneseq
    %v1152 = vshrl.u32 %v1151, 7
    %v1153 = vsub.s32 %v1150, %v1152
    %v1154 = vrot.slane %v1140, %v1153
    %v1155 = vcombine.low %v1130, %v1138
    %v1156 = vcombine.high %v1130, %v1138
    %v1158 = vunpack.c.l.s4 1934713408
    %v1159 = vunpack.c.0.s8 %v1158
    %v1160 = vlaneseq
    %v1161 = vshrl.u32 %v1160, 7
    %v1162 = vsub.s32 %v1159, %v1161
    %v1163 = vrot.slane %v1155, %v1162
    %v1165 = vunpack.c.l.s4 1934713408
    %v1166 = vunpack.c.0.s8 %v1165
    %v1167 = vlaneseq
    %v1168 = vshrl.u32 %v1167, 7
    %v1169 = vsub.s32 %v1166, %v1168
    %v1170 = vrot.slane %v1156, %v1169
    %v1171 = vcombine.low %v1147, %v1163
    %v1172 = vcombine.high %v1147, %v1163
    %v1173 = vcombine.low %v1154, %v1170
    %v1174 = vcombine.high %v1154, %v1170
    %vm1175 = vcmask 64512
    %v1177 = vsel %vm1175, %v515, 0
    %v1180 = vsel %vm1175, %v811, 0
    %1182 = vmatprep.subr.mxu0 0.0
    %1183 = vmatpush1.xpose.msra.mxu0 %v1180
    %1184 = vmatprep.subr.mxu0 0.0
    %1185 = vmatpush1.xpose.msra.mxu0 0.0
    %1186 = vmatprep.subr.mxu0 0.0
    %1187 = vmatpush1.xpose.msra.mxu0 0.0
    %1188 = vmatprep.subr.mxu0 0.0
    %1189 = vmatpush1.xpose.msra.mxu0 0.0
    %1190 = vmatprep.subr.mxu0 0.0
    %1191 = vmatpush1.xpose.msra.mxu0 0.0
    %1192 = vmatprep.subr.mxu0 0.0
    %1193 = vmatpush1.xpose.msra.mxu0 0.0
    %1194 = vmatprep.subr.mxu0 0.0
    %1195 = vmatpush1.xpose.msra.mxu0 0.0
    %1196 = vmatprep.subr.mxu0 0.0
    %1197 = vmatpush1.xpose.msra.mxu0 0.0
    %1198 = vmatprep.subr.mxu0 0.0
    %1199 = vmatpush1.xpose.msra.mxu0 0.0
    %1200 = vmatprep.subr.mxu0 0.0
    %1201 = vmatpush1.xpose.msra.mxu0 0.0
    %1202 = vmatprep.subr.mxu0 0.0
    %1203 = vmatpush1.xpose.msra.mxu0 0.0
    %1204 = vmatprep.subr.mxu0 0.0
    %1205 = vmatpush1.xpose.msra.mxu0 0.0
    %1206 = vmatprep.subr.mxu0 0.0
    %1207 = vmatpush1.xpose.msra.mxu0 0.0
    %1208 = vmatprep.subr.mxu0 0.0
    %1209 = vmatpush1.xpose.msra.mxu0 0.0
    %1210 = vmatprep.subr.mxu0 0.0
    %1211 = vmatpush1.xpose.msra.mxu0 0.0
    %1212 = vmatprep.subr.mxu0 0.0
    %1213 = vmatpush1.xpose.msra.mxu0 0.0
    %1214 = vmatprep.subr.mxu0 0.0
    %1215 = vmatpush1.xpose.msra.mxu0 0.0
    %1216 = vmatprep.subr.mxu0 0.0
    %1217 = vmatpush1.xpose.msra.mxu0 0.0
    %1218 = vmatprep.subr.mxu0 0.0
    %1219 = vmatpush1.xpose.msra.mxu0 0.0
    %1220 = vmatprep.subr.mxu0 0.0
    %1221 = vmatpush1.xpose.msra.mxu0 0.0
    %1222 = vmatprep.subr.mxu0 0.0
    %1223 = vmatpush1.xpose.msra.mxu0 0.0
    %1224 = vmatprep.subr.mxu0 0.0
    %1225 = vmatpush1.xpose.msra.mxu0 0.0
    %1226 = vmatprep.subr.mxu0 0.0
    %1227 = vmatpush1.xpose.msra.mxu0 0.0
    %1228 = vmatprep.subr.mxu0 0.0
    %1229 = vmatpush1.xpose.msra.mxu0 0.0
    %1230 = vmatprep.subr.mxu0 0.0
    %1231 = vmatpush1.xpose.msra.mxu0 0.0
    %1232 = vmatprep.subr.mxu0 0.0
    %1233 = vmatpush1.xpose.msra.mxu0 0.0
    %1234 = vmatprep.subr.mxu0 0.0
    %1235 = vmatpush1.xpose.msra.mxu0 0.0
    %1236 = vmatprep.subr.mxu0 0.0
    %1237 = vmatpush1.xpose.msra.mxu0 0.0
    %1238 = vmatprep.subr.mxu0 0.0
    %1239 = vmatpush1.xpose.msra.mxu0 0.0
    %1240 = vmatprep.subr.mxu0 0.0
    %1241 = vmatpush1.xpose.msra.mxu0 0.0
    %1242 = vmatprep.subr.mxu0 0.0
    %1243 = vmatpush1.xpose.msra.mxu0 0.0
    %1244 = vmatprep.subr.mxu0 0.0
    %1245 = vmatpush1.xpose.msra.mxu0 0.0
    %1246 = vmatprep.mubr.f32.mxu0 0.0
    %1247 = vmatmul.mubr.f32.gmra.mrb[0].mxu0 %v1177
    %v1248 = vpop.f32.mrb[0].mxu0
    %v1249 = vadd.f32 0.0, %v1248
    %v1250 = vpop.f32.mrb[0].mxu0
    %1251 = vdwg.mxu0
    %v1253 = vsel %vm1175, %v516, 0
    %v1256 = vsel %vm1175, %v812, 0
    %1258 = vmatprep.subr.mxu0 0.0
    %1259 = vmatpush1.xpose.msra.mxu0 %v1256
    %1260 = vmatprep.subr.mxu0 0.0
    %1261 = vmatpush1.xpose.msra.mxu0 0.0
    %1262 = vmatprep.subr.mxu0 0.0
    %1263 = vmatpush1.xpose.msra.mxu0 0.0
    %1264 = vmatprep.subr.mxu0 0.0
    %1265 = vmatpush1.xpose.msra.mxu0 0.0
    %1266 = vmatprep.subr.mxu0 0.0
    %1267 = vmatpush1.xpose.msra.mxu0 0.0
    %1268 = vmatprep.subr.mxu0 0.0
    %1269 = vmatpush1.xpose.msra.mxu0 0.0
    %1270 = vmatprep.subr.mxu0 0.0
    %1271 = vmatpush1.xpose.msra.mxu0 0.0
    %1272 = vmatprep.subr.mxu0 0.0
    %1273 = vmatpush1.xpose.msra.mxu0 0.0
    %1274 = vmatprep.subr.mxu0 0.0
    %1275 = vmatpush1.xpose.msra.mxu0 0.0
    %1276 = vmatprep.subr.mxu0 0.0
    %1277 = vmatpush1.xpose.msra.mxu0 0.0
    %1278 = vmatprep.subr.mxu0 0.0
    %1279 = vmatpush1.xpose.msra.mxu0 0.0
    %1280 = vmatprep.subr.mxu0 0.0
    %1281 = vmatpush1.xpose.msra.mxu0 0.0
    %1282 = vmatprep.subr.mxu0 0.0
    %1283 = vmatpush1.xpose.msra.mxu0 0.0
    %1284 = vmatprep.subr.mxu0 0.0
    %1285 = vmatpush1.xpose.msra.mxu0 0.0
    %1286 = vmatprep.subr.mxu0 0.0
    %1287 = vmatpush1.xpose.msra.mxu0 0.0
    %1288 = vmatprep.subr.mxu0 0.0
    %1289 = vmatpush1.xpose.msra.mxu0 0.0
    %1290 = vmatprep.subr.mxu0 0.0
    %1291 = vmatpush1.xpose.msra.mxu0 0.0
    %1292 = vmatprep.subr.mxu0 0.0
    %1293 = vmatpush1.xpose.msra.mxu0 0.0
    %1294 = vmatprep.subr.mxu0 0.0
    %1295 = vmatpush1.xpose.msra.mxu0 0.0
    %1296 = vmatprep.subr.mxu0 0.0
    %1297 = vmatpush1.xpose.msra.mxu0 0.0
    %1298 = vmatprep.subr.mxu0 0.0
    %1299 = vmatpush1.xpose.msra.mxu0 0.0
    %1300 = vmatprep.subr.mxu0 0.0
    %1301 = vmatpush1.xpose.msra.mxu0 0.0
    %1302 = vmatprep.subr.mxu0 0.0
    %1303 = vmatpush1.xpose.msra.mxu0 0.0
    %1304 = vmatprep.subr.mxu0 0.0
    %1305 = vmatpush1.xpose.msra.mxu0 0.0
    %1306 = vmatprep.subr.mxu0 0.0
    %1307 = vmatpush1.xpose.msra.mxu0 0.0
    %1308 = vmatprep.subr.mxu0 0.0
    %1309 = vmatpush1.xpose.msra.mxu0 0.0
    %1310 = vmatprep.subr.mxu0 0.0
    %1311 = vmatpush1.xpose.msra.mxu0 0.0
    %1312 = vmatprep.subr.mxu0 0.0
    %1313 = vmatpush1.xpose.msra.mxu0 0.0
    %1314 = vmatprep.subr.mxu0 0.0
    %1315 = vmatpush1.xpose.msra.mxu0 0.0
    %1316 = vmatprep.subr.mxu0 0.0
    %1317 = vmatpush1.xpose.msra.mxu0 0.0
    %1318 = vmatprep.subr.mxu0 0.0
    %1319 = vmatpush1.xpose.msra.mxu0 0.0
    %1320 = vmatprep.subr.mxu0 0.0
    %1321 = vmatpush1.xpose.msra.mxu0 0.0
    %1322 = vmatprep.mubr.f32.mxu0 0.0
    %1323 = vmatmul.mubr.f32.gmra.mrb[0].mxu0 %v1253
    %v1324 = vpop.f32.mrb[0].mxu0
    %v1325 = vadd.f32 0.0, %v1324
    %v1326 = vpop.f32.mrb[0].mxu0
    %1327 = vdwg.mxu0
    %v1329 = vsel %vm1175, %v517, 0
    %v1332 = vsel %vm1175, %v813, 0
    %1334 = vmatprep.subr.mxu0 0.0
    %1335 = vmatpush1.xpose.msra.mxu0 %v1332
    %1336 = vmatprep.subr.mxu0 0.0
    %1337 = vmatpush1.xpose.msra.mxu0 0.0
    %1338 = vmatprep.subr.mxu0 0.0
    %1339 = vmatpush1.xpose.msra.mxu0 0.0
    %1340 = vmatprep.subr.mxu0 0.0
    %1341 = vmatpush1.xpose.msra.mxu0 0.0
    %1342 = vmatprep.subr.mxu0 0.0
    %1343 = vmatpush1.xpose.msra.mxu0 0.0
    %1344 = vmatprep.subr.mxu0 0.0
    %1345 = vmatpush1.xpose.msra.mxu0 0.0
    %1346 = vmatprep.subr.mxu0 0.0
    %1347 = vmatpush1.xpose.msra.mxu0 0.0
    %1348 = vmatprep.subr.mxu0 0.0
    %1349 = vmatpush1.xpose.msra.mxu0 0.0
    %1350 = vmatprep.subr.mxu0 0.0
    %1351 = vmatpush1.xpose.msra.mxu0 0.0
    %1352 = vmatprep.subr.mxu0 0.0
    %1353 = vmatpush1.xpose.msra.mxu0 0.0
    %1354 = vmatprep.subr.mxu0 0.0
    %1355 = vmatpush1.xpose.msra.mxu0 0.0
    %1356 = vmatprep.subr.mxu0 0.0
    %1357 = vmatpush1.xpose.msra.mxu0 0.0
    %1358 = vmatprep.subr.mxu0 0.0
    %1359 = vmatpush1.xpose.msra.mxu0 0.0
    %1360 = vmatprep.subr.mxu0 0.0
    %1361 = vmatpush1.xpose.msra.mxu0 0.0
    %1362 = vmatprep.subr.mxu0 0.0
    %1363 = vmatpush1.xpose.msra.mxu0 0.0
    %1364 = vmatprep.subr.mxu0 0.0
    %1365 = vmatpush1.xpose.msra.mxu0 0.0
    %1366 = vmatprep.subr.mxu0 0.0
    %1367 = vmatpush1.xpose.msra.mxu0 0.0
    %1368 = vmatprep.subr.mxu0 0.0
    %1369 = vmatpush1.xpose.msra.mxu0 0.0
    %1370 = vmatprep.subr.mxu0 0.0
    %1371 = vmatpush1.xpose.msra.mxu0 0.0
    %1372 = vmatprep.subr.mxu0 0.0
    %1373 = vmatpush1.xpose.msra.mxu0 0.0
    %1374 = vmatprep.subr.mxu0 0.0
    %1375 = vmatpush1.xpose.msra.mxu0 0.0
    %1376 = vmatprep.subr.mxu0 0.0
    %1377 = vmatpush1.xpose.msra.mxu0 0.0
    %1378 = vmatprep.subr.mxu0 0.0
    %1379 = vmatpush1.xpose.msra.mxu0 0.0
    %1380 = vmatprep.subr.mxu0 0.0
    %1381 = vmatpush1.xpose.msra.mxu0 0.0
    %1382 = vmatprep.subr.mxu0 0.0
    %1383 = vmatpush1.xpose.msra.mxu0 0.0
    %1384 = vmatprep.subr.mxu0 0.0
    %1385 = vmatpush1.xpose.msra.mxu0 0.0
    %1386 = vmatprep.subr.mxu0 0.0
    %1387 = vmatpush1.xpose.msra.mxu0 0.0
    %1388 = vmatprep.subr.mxu0 0.0
    %1389 = vmatpush1.xpose.msra.mxu0 0.0
    %1390 = vmatprep.subr.mxu0 0.0
    %1391 = vmatpush1.xpose.msra.mxu0 0.0
    %1392 = vmatprep.subr.mxu0 0.0
    %1393 = vmatpush1.xpose.msra.mxu0 0.0
    %1394 = vmatprep.subr.mxu0 0.0
    %1395 = vmatpush1.xpose.msra.mxu0 0.0
    %1396 = vmatprep.subr.mxu0 0.0
    %1397 = vmatpush1.xpose.msra.mxu0 0.0
    %1398 = vmatprep.mubr.f32.mxu0 0.0
    %1399 = vmatmul.mubr.f32.gmra.mrb[0].mxu0 %v1329
    %v1400 = vpop.f32.mrb[0].mxu0
    %v1401 = vadd.f32 0.0, %v1400
    %v1402 = vpop.f32.mrb[0].mxu0
    %1403 = vdwg.mxu0
    %v1405 = vsel %vm1175, %v518, 0
    %v1408 = vsel %vm1175, %v814, 0
    %1410 = vmatprep.subr.mxu0 0.0
    %1411 = vmatpush1.xpose.msra.mxu0 %v1408
    %1412 = vmatprep.subr.mxu0 0.0
    %1413 = vmatpush1.xpose.msra.mxu0 0.0
    %1414 = vmatprep.subr.mxu0 0.0
    %1415 = vmatpush1.xpose.msra.mxu0 0.0
    %1416 = vmatprep.subr.mxu0 0.0
    %1417 = vmatpush1.xpose.msra.mxu0 0.0
    %1418 = vmatprep.subr.mxu0 0.0
    %1419 = vmatpush1.xpose.msra.mxu0 0.0
    %1420 = vmatprep.subr.mxu0 0.0
    %1421 = vmatpush1.xpose.msra.mxu0 0.0
    %1422 = vmatprep.subr.mxu0 0.0
    %1423 = vmatpush1.xpose.msra.mxu0 0.0
    %1424 = vmatprep.subr.mxu0 0.0
    %1425 = vmatpush1.xpose.msra.mxu0 0.0
    %1426 = vmatprep.subr.mxu0 0.0
    %1427 = vmatpush1.xpose.msra.mxu0 0.0
    %1428 = vmatprep.subr.mxu0 0.0
    %1429 = vmatpush1.xpose.msra.mxu0 0.0
    %1430 = vmatprep.subr.mxu0 0.0
    %1431 = vmatpush1.xpose.msra.mxu0 0.0
    %1432 = vmatprep.subr.mxu0 0.0
    %1433 = vmatpush1.xpose.msra.mxu0 0.0
    %1434 = vmatprep.subr.mxu0 0.0
    %1435 = vmatpush1.xpose.msra.mxu0 0.0
    %1436 = vmatprep.subr.mxu0 0.0
    %1437 = vmatpush1.xpose.msra.mxu0 0.0
    %1438 = vmatprep.subr.mxu0 0.0
    %1439 = vmatpush1.xpose.msra.mxu0 0.0
    %1440 = vmatprep.subr.mxu0 0.0
    %1441 = vmatpush1.xpose.msra.mxu0 0.0
    %1442 = vmatprep.subr.mxu0 0.0
    %1443 = vmatpush1.xpose.msra.mxu0 0.0
    %1444 = vmatprep.subr.mxu0 0.0
    %1445 = vmatpush1.xpose.msra.mxu0 0.0
    %1446 = vmatprep.subr.mxu0 0.0
    %1447 = vmatpush1.xpose.msra.mxu0 0.0
    %1448 = vmatprep.subr.mxu0 0.0
    %1449 = vmatpush1.xpose.msra.mxu0 0.0
    %1450 = vmatprep.subr.mxu0 0.0
    %1451 = vmatpush1.xpose.msra.mxu0 0.0
    %1452 = vmatprep.subr.mxu0 0.0
    %1453 = vmatpush1.xpose.msra.mxu0 0.0
    %1454 = vmatprep.subr.mxu0 0.0
    %1455 = vmatpush1.xpose.msra.mxu0 0.0
    %1456 = vmatprep.subr.mxu0 0.0
    %1457 = vmatpush1.xpose.msra.mxu0 0.0
    %1458 = vmatprep.subr.mxu0 0.0
    %1459 = vmatpush1.xpose.msra.mxu0 0.0
    %1460 = vmatprep.subr.mxu0 0.0
    %1461 = vmatpush1.xpose.msra.mxu0 0.0
    %1462 = vmatprep.subr.mxu0 0.0
    %1463 = vmatpush1.xpose.msra.mxu0 0.0
    %1464 = vmatprep.subr.mxu0 0.0
    %1465 = vmatpush1.xpose.msra.mxu0 0.0
    %1466 = vmatprep.subr.mxu0 0.0
    %1467 = vmatpush1.xpose.msra.mxu0 0.0
    %1468 = vmatprep.subr.mxu0 0.0
    %1469 = vmatpush1.xpose.msra.mxu0 0.0
    %1470 = vmatprep.subr.mxu0 0.0
    %1471 = vmatpush1.xpose.msra.mxu0 0.0
    %1472 = vmatprep.subr.mxu0 0.0
    %1473 = vmatpush1.xpose.msra.mxu0 0.0
    %1474 = vmatprep.mubr.f32.mxu0 0.0
    %1475 = vmatmul.mubr.f32.gmra.mrb[0].mxu0 %v1405
    %v1476 = vpop.f32.mrb[0].mxu0
    %v1477 = vadd.f32 0.0, %v1476
    %v1478 = vpop.f32.mrb[0].mxu0
    %1479 = vdwg.mxu0
    %v1481 = vsel %vm1175, %v583, 0
    %v1484 = vsel %vm1175, %v879, 0
    %1486 = vmatprep.subr.mxu0 0.0
    %1487 = vmatpush1.xpose.msra.mxu0 %v1484
    %1488 = vmatprep.subr.mxu0 0.0
    %1489 = vmatpush1.xpose.msra.mxu0 0.0
    %1490 = vmatprep.subr.mxu0 0.0
    %1491 = vmatpush1.xpose.msra.mxu0 0.0
    %1492 = vmatprep.subr.mxu0 0.0
    %1493 = vmatpush1.xpose.msra.mxu0 0.0
    %1494 = vmatprep.subr.mxu0 0.0
    %1495 = vmatpush1.xpose.msra.mxu0 0.0
    %1496 = vmatprep.subr.mxu0 0.0
    %1497 = vmatpush1.xpose.msra.mxu0 0.0
    %1498 = vmatprep.subr.mxu0 0.0
    %1499 = vmatpush1.xpose.msra.mxu0 0.0
    %1500 = vmatprep.subr.mxu0 0.0
    %1501 = vmatpush1.xpose.msra.mxu0 0.0
    %1502 = vmatprep.subr.mxu0 0.0
    %1503 = vmatpush1.xpose.msra.mxu0 0.0
    %1504 = vmatprep.subr.mxu0 0.0
    %1505 = vmatpush1.xpose.msra.mxu0 0.0
    %1506 = vmatprep.subr.mxu0 0.0
    %1507 = vmatpush1.xpose.msra.mxu0 0.0
    %1508 = vmatprep.subr.mxu0 0.0
    %1509 = vmatpush1.xpose.msra.mxu0 0.0
    %1510 = vmatprep.subr.mxu0 0.0
    %1511 = vmatpush1.xpose.msra.mxu0 0.0
    %1512 = vmatprep.subr.mxu0 0.0
    %1513 = vmatpush1.xpose.msra.mxu0 0.0
    %1514 = vmatprep.subr.mxu0 0.0
    %1515 = vmatpush1.xpose.msra.mxu0 0.0
    %1516 = vmatprep.subr.mxu0 0.0
    %1517 = vmatpush1.xpose.msra.mxu0 0.0
    %1518 = vmatprep.subr.mxu0 0.0
    %1519 = vmatpush1.xpose.msra.mxu0 0.0
    %1520 = vmatprep.subr.mxu0 0.0
    %1521 = vmatpush1.xpose.msra.mxu0 0.0
    %1522 = vmatprep.subr.mxu0 0.0
    %1523 = vmatpush1.xpose.msra.mxu0 0.0
    %1524 = vmatprep.subr.mxu0 0.0
    %1525 = vmatpush1.xpose.msra.mxu0 0.0
    %1526 = vmatprep.subr.mxu0 0.0
    %1527 = vmatpush1.xpose.msra.mxu0 0.0
    %1528 = vmatprep.subr.mxu0 0.0
    %1529 = vmatpush1.xpose.msra.mxu0 0.0
    %1530 = vmatprep.subr.mxu0 0.0
    %1531 = vmatpush1.xpose.msra.mxu0 0.0
    %1532 = vmatprep.subr.mxu0 0.0
    %1533 = vmatpush1.xpose.msra.mxu0 0.0
    %1534 = vmatprep.subr.mxu0 0.0
    %1535 = vmatpush1.xpose.msra.mxu0 0.0
    %1536 = vmatprep.subr.mxu0 0.0
    %1537 = vmatpush1.xpose.msra.mxu0 0.0
    %1538 = vmatprep.subr.mxu0 0.0
    %1539 = vmatpush1.xpose.msra.mxu0 0.0
    %1540 = vmatprep.subr.mxu0 0.0
    %1541 = vmatpush1.xpose.msra.mxu0 0.0
    %1542 = vmatprep.subr.mxu0 0.0
    %1543 = vmatpush1.xpose.msra.mxu0 0.0
    %1544 = vmatprep.subr.mxu0 0.0
    %1545 = vmatpush1.xpose.msra.mxu0 0.0
    %1546 = vmatprep.subr.mxu0 0.0
    %1547 = vmatpush1.xpose.msra.mxu0 0.0
    %1548 = vmatprep.subr.mxu0 0.0
    %1549 = vmatpush1.xpose.msra.mxu0 0.0
    %1550 = vmatprep.mubr.f32.mxu0 0.0
    %1551 = vmatmul.mubr.f32.gmra.mrb[0].mxu0 %v1481
    %v1552 = vpop.f32.mrb[0].mxu0
    %v1553 = vadd.f32 0.0, %v1552
    %v1554 = vpop.f32.mrb[0].mxu0
    %1555 = vdwg.mxu0
    %v1557 = vsel %vm1175, %v584, 0
    %v1560 = vsel %vm1175, %v880, 0
    %1562 = vmatprep.subr.mxu0 0.0
    %1563 = vmatpush1.xpose.msra.mxu0 %v1560
    %1564 = vmatprep.subr.mxu0 0.0
    %1565 = vmatpush1.xpose.msra.mxu0 0.0
    %1566 = vmatprep.subr.mxu0 0.0
    %1567 = vmatpush1.xpose.msra.mxu0 0.0
    %1568 = vmatprep.subr.mxu0 0.0
    %1569 = vmatpush1.xpose.msra.mxu0 0.0
    %1570 = vmatprep.subr.mxu0 0.0
    %1571 = vmatpush1.xpose.msra.mxu0 0.0
    %1572 = vmatprep.subr.mxu0 0.0
    %1573 = vmatpush1.xpose.msra.mxu0 0.0
    %1574 = vmatprep.subr.mxu0 0.0
    %1575 = vmatpush1.xpose.msra.mxu0 0.0
    %1576 = vmatprep.subr.mxu0 0.0
    %1577 = vmatpush1.xpose.msra.mxu0 0.0
    %1578 = vmatprep.subr.mxu0 0.0
    %1579 = vmatpush1.xpose.msra.mxu0 0.0
    %1580 = vmatprep.subr.mxu0 0.0
    %1581 = vmatpush1.xpose.msra.mxu0 0.0
    %1582 = vmatprep.subr.mxu0 0.0
    %1583 = vmatpush1.xpose.msra.mxu0 0.0
    %1584 = vmatprep.subr.mxu0 0.0
    %1585 = vmatpush1.xpose.msra.mxu0 0.0
    %1586 = vmatprep.subr.mxu0 0.0
    %1587 = vmatpush1.xpose.msra.mxu0 0.0
    %1588 = vmatprep.subr.mxu0 0.0
    %1589 = vmatpush1.xpose.msra.mxu0 0.0
    %1590 = vmatprep.subr.mxu0 0.0
    %1591 = vmatpush1.xpose.msra.mxu0 0.0
    %1592 = vmatprep.subr.mxu0 0.0
    %1593 = vmatpush1.xpose.msra.mxu0 0.0
    %1594 = vmatprep.subr.mxu0 0.0
    %1595 = vmatpush1.xpose.msra.mxu0 0.0
    %1596 = vmatprep.subr.mxu0 0.0
    %1597 = vmatpush1.xpose.msra.mxu0 0.0
    %1598 = vmatprep.subr.mxu0 0.0
    %1599 = vmatpush1.xpose.msra.mxu0 0.0
    %1600 = vmatprep.subr.mxu0 0.0
    %1601 = vmatpush1.xpose.msra.mxu0 0.0
    %1602 = vmatprep.subr.mxu0 0.0
    %1603 = vmatpush1.xpose.msra.mxu0 0.0
    %1604 = vmatprep.subr.mxu0 0.0
    %1605 = vmatpush1.xpose.msra.mxu0 0.0
    %1606 = vmatprep.subr.mxu0 0.0
    %1607 = vmatpush1.xpose.msra.mxu0 0.0
    %1608 = vmatprep.subr.mxu0 0.0
    %1609 = vmatpush1.xpose.msra.mxu0 0.0
    %1610 = vmatprep.subr.mxu0 0.0
    %1611 = vmatpush1.xpose.msra.mxu0 0.0
    %1612 = vmatprep.subr.mxu0 0.0
    %1613 = vmatpush1.xpose.msra.mxu0 0.0
    %1614 = vmatprep.subr.mxu0 0.0
    %1615 = vmatpush1.xpose.msra.mxu0 0.0
    %1616 = vmatprep.subr.mxu0 0.0
    %1617 = vmatpush1.xpose.msra.mxu0 0.0
    %1618 = vmatprep.subr.mxu0 0.0
    %1619 = vmatpush1.xpose.msra.mxu0 0.0
    %1620 = vmatprep.subr.mxu0 0.0
    %1621 = vmatpush1.xpose.msra.mxu0 0.0
    %1622 = vmatprep.subr.mxu0 0.0
    %1623 = vmatpush1.xpose.msra.mxu0 0.0
    %1624 = vmatprep.subr.mxu0 0.0
    %1625 = vmatpush1.xpose.msra.mxu0 0.0
    %1626 = vmatprep.mubr.f32.mxu0 0.0
    %1627 = vmatmul.mubr.f32.gmra.mrb[0].mxu0 %v1557
    %v1628 = vpop.f32.mrb[0].mxu0
    %v1629 = vadd.f32 0.0, %v1628
    %v1630 = vpop.f32.mrb[0].mxu0
    %1631 = vdwg.mxu0
    %v1633 = vsel %vm1175, %v585, 0
    %v1636 = vsel %vm1175, %v881, 0
    %1638 = vmatprep.subr.mxu0 0.0
    %1639 = vmatpush1.xpose.msra.mxu0 %v1636
    %1640 = vmatprep.subr.mxu0 0.0
    %1641 = vmatpush1.xpose.msra.mxu0 0.0
    %1642 = vmatprep.subr.mxu0 0.0
    %1643 = vmatpush1.xpose.msra.mxu0 0.0
    %1644 = vmatprep.subr.mxu0 0.0
    %1645 = vmatpush1.xpose.msra.mxu0 0.0
    %1646 = vmatprep.subr.mxu0 0.0
    %1647 = vmatpush1.xpose.msra.mxu0 0.0
    %1648 = vmatprep.subr.mxu0 0.0
    %1649 = vmatpush1.xpose.msra.mxu0 0.0
    %1650 = vmatprep.subr.mxu0 0.0
    %1651 = vmatpush1.xpose.msra.mxu0 0.0
    %1652 = vmatprep.subr.mxu0 0.0
    %1653 = vmatpush1.xpose.msra.mxu0 0.0
    %1654 = vmatprep.subr.mxu0 0.0
    %1655 = vmatpush1.xpose.msra.mxu0 0.0
    %1656 = vmatprep.subr.mxu0 0.0
    %1657 = vmatpush1.xpose.msra.mxu0 0.0
    %1658 = vmatprep.subr.mxu0 0.0
    %1659 = vmatpush1.xpose.msra.mxu0 0.0
    %1660 = vmatprep.subr.mxu0 0.0
    %1661 = vmatpush1.xpose.msra.mxu0 0.0
    %1662 = vmatprep.subr.mxu0 0.0
    %1663 = vmatpush1.xpose.msra.mxu0 0.0
    %1664 = vmatprep.subr.mxu0 0.0
    %1665 = vmatpush1.xpose.msra.mxu0 0.0
    %1666 = vmatprep.subr.mxu0 0.0
    %1667 = vmatpush1.xpose.msra.mxu0 0.0
    %1668 = vmatprep.subr.mxu0 0.0
    %1669 = vmatpush1.xpose.msra.mxu0 0.0
    %1670 = vmatprep.subr.mxu0 0.0
    %1671 = vmatpush1.xpose.msra.mxu0 0.0
    %1672 = vmatprep.subr.mxu0 0.0
    %1673 = vmatpush1.xpose.msra.mxu0 0.0
    %1674 = vmatprep.subr.mxu0 0.0
    %1675 = vmatpush1.xpose.msra.mxu0 0.0
    %1676 = vmatprep.subr.mxu0 0.0
    %1677 = vmatpush1.xpose.msra.mxu0 0.0
    %1678 = vmatprep.subr.mxu0 0.0
    %1679 = vmatpush1.xpose.msra.mxu0 0.0
    %1680 = vmatprep.subr.mxu0 0.0
    %1681 = vmatpush1.xpose.msra.mxu0 0.0
    %1682 = vmatprep.subr.mxu0 0.0
    %1683 = vmatpush1.xpose.msra.mxu0 0.0
    %1684 = vmatprep.subr.mxu0 0.0
    %1685 = vmatpush1.xpose.msra.mxu0 0.0
    %1686 = vmatprep.subr.mxu0 0.0
    %1687 = vmatpush1.xpose.msra.mxu0 0.0
    %1688 = vmatprep.subr.mxu0 0.0
    %1689 = vmatpush1.xpose.msra.mxu0 0.0
    %1690 = vmatprep.subr.mxu0 0.0
    %1691 = vmatpush1.xpose.msra.mxu0 0.0
    %1692 = vmatprep.subr.mxu0 0.0
    %1693 = vmatpush1.xpose.msra.mxu0 0.0
    %1694 = vmatprep.subr.mxu0 0.0
    %1695 = vmatpush1.xpose.msra.mxu0 0.0
    %1696 = vmatprep.subr.mxu0 0.0
    %1697 = vmatpush1.xpose.msra.mxu0 0.0
    %1698 = vmatprep.subr.mxu0 0.0
    %1699 = vmatpush1.xpose.msra.mxu0 0.0
    %1700 = vmatprep.subr.mxu0 0.0
    %1701 = vmatpush1.xpose.msra.mxu0 0.0
    %1702 = vmatprep.mubr.f32.mxu0 0.0
    %1703 = vmatmul.mubr.f32.gmra.mrb[0].mxu0 %v1633
    %v1704 = vpop.f32.mrb[0].mxu0
    %v1705 = vadd.f32 0.0, %v1704
    %v1706 = vpop.f32.mrb[0].mxu0
    %1707 = vdwg.mxu0
    %v1709 = vsel %vm1175, %v586, 0
    %v1712 = vsel %vm1175, %v882, 0
    %1714 = vmatprep.subr.mxu0 0.0
    %1715 = vmatpush1.xpose.msra.mxu0 %v1712
    %1716 = vmatprep.subr.mxu0 0.0
    %1717 = vmatpush1.xpose.msra.mxu0 0.0
    %1718 = vmatprep.subr.mxu0 0.0
    %1719 = vmatpush1.xpose.msra.mxu0 0.0
    %1720 = vmatprep.subr.mxu0 0.0
    %1721 = vmatpush1.xpose.msra.mxu0 0.0
    %1722 = vmatprep.subr.mxu0 0.0
    %1723 = vmatpush1.xpose.msra.mxu0 0.0
    %1724 = vmatprep.subr.mxu0 0.0
    %1725 = vmatpush1.xpose.msra.mxu0 0.0
    %1726 = vmatprep.subr.mxu0 0.0
    %1727 = vmatpush1.xpose.msra.mxu0 0.0
    %1728 = vmatprep.subr.mxu0 0.0
    %1729 = vmatpush1.xpose.msra.mxu0 0.0
    %1730 = vmatprep.subr.mxu0 0.0
    %1731 = vmatpush1.xpose.msra.mxu0 0.0
    %1732 = vmatprep.subr.mxu0 0.0
    %1733 = vmatpush1.xpose.msra.mxu0 0.0
    %1734 = vmatprep.subr.mxu0 0.0
    %1735 = vmatpush1.xpose.msra.mxu0 0.0
    %1736 = vmatprep.subr.mxu0 0.0
    %1737 = vmatpush1.xpose.msra.mxu0 0.0
    %1738 = vmatprep.subr.mxu0 0.0
    %1739 = vmatpush1.xpose.msra.mxu0 0.0
    %1740 = vmatprep.subr.mxu0 0.0
    %1741 = vmatpush1.xpose.msra.mxu0 0.0
    %1742 = vmatprep.subr.mxu0 0.0
    %1743 = vmatpush1.xpose.msra.mxu0 0.0
    %1744 = vmatprep.subr.mxu0 0.0
    %1745 = vmatpush1.xpose.msra.mxu0 0.0
    %1746 = vmatprep.subr.mxu0 0.0
    %1747 = vmatpush1.xpose.msra.mxu0 0.0
    %1748 = vmatprep.subr.mxu0 0.0
    %1749 = vmatpush1.xpose.msra.mxu0 0.0
    %1750 = vmatprep.subr.mxu0 0.0
    %1751 = vmatpush1.xpose.msra.mxu0 0.0
    %1752 = vmatprep.subr.mxu0 0.0
    %1753 = vmatpush1.xpose.msra.mxu0 0.0
    %1754 = vmatprep.subr.mxu0 0.0
    %1755 = vmatpush1.xpose.msra.mxu0 0.0
    %1756 = vmatprep.subr.mxu0 0.0
    %1757 = vmatpush1.xpose.msra.mxu0 0.0
    %1758 = vmatprep.subr.mxu0 0.0
    %1759 = vmatpush1.xpose.msra.mxu0 0.0
    %1760 = vmatprep.subr.mxu0 0.0
    %1761 = vmatpush1.xpose.msra.mxu0 0.0
    %1762 = vmatprep.subr.mxu0 0.0
    %1763 = vmatpush1.xpose.msra.mxu0 0.0
    %1764 = vmatprep.subr.mxu0 0.0
    %1765 = vmatpush1.xpose.msra.mxu0 0.0
    %1766 = vmatprep.subr.mxu0 0.0
    %1767 = vmatpush1.xpose.msra.mxu0 0.0
    %1768 = vmatprep.subr.mxu0 0.0
    %1769 = vmatpush1.xpose.msra.mxu0 0.0
    %1770 = vmatprep.subr.mxu0 0.0
    %1771 = vmatpush1.xpose.msra.mxu0 0.0
    %1772 = vmatprep.subr.mxu0 0.0
    %1773 = vmatpush1.xpose.msra.mxu0 0.0
    %1774 = vmatprep.subr.mxu0 0.0
    %1775 = vmatpush1.xpose.msra.mxu0 0.0
    %1776 = vmatprep.subr.mxu0 0.0
    %1777 = vmatpush1.xpose.msra.mxu0 0.0
    %1778 = vmatprep.mubr.f32.mxu0 0.0
    %1779 = vmatmul.mubr.f32.gmra.mrb[0].mxu0 %v1709
    %v1780 = vpop.f32.mrb[0].mxu0
    %v1781 = vadd.f32 0.0, %v1780
    %v1782 = vpop.f32.mrb[0].mxu0
    %1783 = vdwg.mxu0
    %v1784 = vsel %vm1175, %v1249, -inf
    %1785 = vmax.xlane.f32.xlu0 %v1784
    %v1786 = vpop.xlane.xlu0 %1785
    %v1787 = vsel %vm1175, %v1325, -inf
    %1788 = vmax.xlane.f32.xlu0 %v1787
    %v1789 = vpop.xlane.xlu0 %1788
    %v1790 = vsel %vm1175, %v1401, -inf
    %1791 = vmax.xlane.f32.xlu0 %v1790
    %v1792 = vpop.xlane.xlu0 %1791
    %v1793 = vsel %vm1175, %v1477, -inf
    %1794 = vmax.xlane.f32.xlu0 %v1793
    %v1795 = vpop.xlane.xlu0 %1794
    %v1796 = vsel %vm1175, %v1553, -inf
    %1797 = vmax.xlane.f32.xlu0 %v1796
    %v1798 = vpop.xlane.xlu0 %1797
    %v1799 = vsel %vm1175, %v1629, -inf
    %1800 = vmax.xlane.f32.xlu0 %v1799
    %v1801 = vpop.xlane.xlu0 %1800
    %v1802 = vsel %vm1175, %v1705, -inf
    %1803 = vmax.xlane.f32.xlu0 %v1802
    %v1804 = vpop.xlane.xlu0 %1803
    %v1805 = vsel %vm1175, %v1781, -inf
    %1806 = vmax.xlane.f32.xlu0 %v1805
    %v1807 = vpop.xlane.xlu0 %1806
    %v1808 = vsub.f32 %v1249, %v1786
    %v1809 = vsub.f32 %v1325, %v1789
    %v1810 = vsub.f32 %v1401, %v1792
    %v1811 = vsub.f32 %v1477, %v1795
    %v1812 = vsub.f32 %v1553, %v1798
    %v1813 = vsub.f32 %v1629, %v1801
    %v1814 = vsub.f32 %v1705, %v1804
    %v1815 = vsub.f32 %v1781, %v1807
    %v1816 = vmul.f32 %v1808, 1.442695
    %v1817 = vpow.pop %v1816
    %v1818 = vmul.f32 %v1809, 1.442695
    %v1819 = vpow.pop %v1818
    %v1820 = vmul.f32 %v1810, 1.442695
    %v1821 = vpow.pop %v1820
    %v1822 = vmul.f32 %v1811, 1.442695
    %v1823 = vpow.pop %v1822
    %v1824 = vmul.f32 %v1812, 1.442695
    %v1825 = vpow.pop %v1824
    %v1826 = vmul.f32 %v1813, 1.442695
    %v1827 = vpow.pop %v1826
    %v1828 = vmul.f32 %v1814, 1.442695
    %v1829 = vpow.pop %v1828
    %v1830 = vmul.f32 %v1815, 1.442695
    %v1831 = vpow.pop %v1830
    %v1832 = vsel %vm1175, %v1817, 0.0
    %1833 = vadd.xlane.f32.xlu0 %v1832
    %v1834 = vpop.xlane.xlu0 %1833
    %v1835 = vsel %vm1175, %v1819, 0.0
    %1836 = vadd.xlane.f32.xlu0 %v1835
    %v1837 = vpop.xlane.xlu0 %1836
    %v1838 = vsel %vm1175, %v1821, 0.0
    %1839 = vadd.xlane.f32.xlu0 %v1838
    %v1840 = vpop.xlane.xlu0 %1839
    %v1841 = vsel %vm1175, %v1823, 0.0
    %1842 = vadd.xlane.f32.xlu0 %v1841
    %v1843 = vpop.xlane.xlu0 %1842
    %v1844 = vsel %vm1175, %v1825, 0.0
    %1845 = vadd.xlane.f32.xlu0 %v1844
    %v1846 = vpop.xlane.xlu0 %1845
    %v1847 = vsel %vm1175, %v1827, 0.0
    %1848 = vadd.xlane.f32.xlu0 %v1847
    %v1849 = vpop.xlane.xlu0 %1848
    %v1850 = vsel %vm1175, %v1829, 0.0
    %1851 = vadd.xlane.f32.xlu0 %v1850
    %v1852 = vpop.xlane.xlu0 %1851
    %v1853 = vsel %vm1175, %v1831, 0.0
    %1854 = vadd.xlane.f32.xlu0 %v1853
    %v1855 = vpop.xlane.xlu0 %1854
    %v1857 = vsel %vm1175, %v1817, 0
    %1859 = vmatprep.subr.mxu0 0.0
    %1860 = vmatpush1.msra.mxu0 %v1103
    %1861 = vmatprep.subr.mxu0 0.0
    %1862 = vmatpush1.msra.mxu0 0.0
    %1863 = vmatprep.subr.mxu0 0.0
    %1864 = vmatpush1.msra.mxu0 0.0
    %1865 = vmatprep.subr.mxu0 0.0
    %1866 = vmatpush1.msra.mxu0 0.0
    %1867 = vmatprep.subr.mxu0 0.0
    %1868 = vmatpush1.msra.mxu0 0.0
    %1869 = vmatprep.subr.mxu0 0.0
    %1870 = vmatpush1.msra.mxu0 0.0
    %1871 = vmatprep.subr.mxu0 0.0
    %1872 = vmatpush1.msra.mxu0 0.0
    %1873 = vmatprep.subr.mxu0 0.0
    %1874 = vmatpush1.msra.mxu0 0.0
    %1875 = vmatprep.subr.mxu0 0.0
    %1876 = vmatpush1.msra.mxu0 0.0
    %1877 = vmatprep.subr.mxu0 0.0
    %1878 = vmatpush1.msra.mxu0 0.0
    %1879 = vmatprep.subr.mxu0 0.0
    %1880 = vmatpush1.msra.mxu0 0.0
    %1881 = vmatprep.subr.mxu0 0.0
    %1882 = vmatpush1.msra.mxu0 0.0
    %1883 = vmatprep.subr.mxu0 0.0
    %1884 = vmatpush1.msra.mxu0 0.0
    %1885 = vmatprep.subr.mxu0 0.0
    %1886 = vmatpush1.msra.mxu0 0.0
    %1887 = vmatprep.subr.mxu0 0.0
    %1888 = vmatpush1.msra.mxu0 0.0
    %1889 = vmatprep.subr.mxu0 0.0
    %1890 = vmatpush1.msra.mxu0 0.0
    %1891 = vmatprep.subr.mxu0 0.0
    %1892 = vmatpush1.msra.mxu0 0.0
    %1893 = vmatprep.subr.mxu0 0.0
    %1894 = vmatpush1.msra.mxu0 0.0
    %1895 = vmatprep.subr.mxu0 0.0
    %1896 = vmatpush1.msra.mxu0 0.0
    %1897 = vmatprep.subr.mxu0 0.0
    %1898 = vmatpush1.msra.mxu0 0.0
    %1899 = vmatprep.subr.mxu0 0.0
    %1900 = vmatpush1.msra.mxu0 0.0
    %1901 = vmatprep.subr.mxu0 0.0
    %1902 = vmatpush1.msra.mxu0 0.0
    %1903 = vmatprep.subr.mxu0 0.0
    %1904 = vmatpush1.msra.mxu0 0.0
    %1905 = vmatprep.subr.mxu0 0.0
    %1906 = vmatpush1.msra.mxu0 0.0
    %1907 = vmatprep.subr.mxu0 0.0
    %1908 = vmatpush1.msra.mxu0 0.0
    %1909 = vmatprep.subr.mxu0 0.0
    %1910 = vmatpush1.msra.mxu0 0.0
    %1911 = vmatprep.subr.mxu0 0.0
    %1912 = vmatpush1.msra.mxu0 0.0
    %1913 = vmatprep.subr.mxu0 0.0
    %1914 = vmatpush1.msra.mxu0 0.0
    %1915 = vmatprep.subr.mxu0 0.0
    %1916 = vmatpush1.msra.mxu0 0.0
    %1917 = vmatprep.subr.mxu0 0.0
    %1918 = vmatpush1.msra.mxu0 0.0
    %1919 = vmatprep.subr.mxu0 0.0
    %1920 = vmatpush1.msra.mxu0 0.0
    %1921 = vmatprep.subr.mxu0 0.0
    %1922 = vmatpush1.msra.mxu0 0.0
    %1923 = vmatprep.mubr.f32.mxu0 0.0
    %1924 = vmatmul.mubr.f32.gmra.mrb[0].mxu0 %v1857
    %v1925 = vpop.f32.mrb[0].mxu0
    %v1926 = vadd.f32 0.0, %v1925
    %v1927 = vpop.f32.mrb[0].mxu0
    %1928 = vdwg.mxu0
    %v1930 = vsel %vm1175, %v1819, 0
    %1932 = vmatprep.subr.mxu0 0.0
    %1933 = vmatpush1.msra.mxu0 %v1104
    %1934 = vmatprep.subr.mxu0 0.0
    %1935 = vmatpush1.msra.mxu0 0.0
    %1936 = vmatprep.subr.mxu0 0.0
    %1937 = vmatpush1.msra.mxu0 0.0
    %1938 = vmatprep.subr.mxu0 0.0
    %1939 = vmatpush1.msra.mxu0 0.0
    %1940 = vmatprep.subr.mxu0 0.0
    %1941 = vmatpush1.msra.mxu0 0.0
    %1942 = vmatprep.subr.mxu0 0.0
    %1943 = vmatpush1.msra.mxu0 0.0
    %1944 = vmatprep.subr.mxu0 0.0
    %1945 = vmatpush1.msra.mxu0 0.0
    %1946 = vmatprep.subr.mxu0 0.0
    %1947 = vmatpush1.msra.mxu0 0.0
    %1948 = vmatprep.subr.mxu0 0.0
    %1949 = vmatpush1.msra.mxu0 0.0
    %1950 = vmatprep.subr.mxu0 0.0
    %1951 = vmatpush1.msra.mxu0 0.0
    %1952 = vmatprep.subr.mxu0 0.0
    %1953 = vmatpush1.msra.mxu0 0.0
    %1954 = vmatprep.subr.mxu0 0.0
    %1955 = vmatpush1.msra.mxu0 0.0
    %1956 = vmatprep.subr.mxu0 0.0
    %1957 = vmatpush1.msra.mxu0 0.0
    %1958 = vmatprep.subr.mxu0 0.0
    %1959 = vmatpush1.msra.mxu0 0.0
    %1960 = vmatprep.subr.mxu0 0.0
    %1961 = vmatpush1.msra.mxu0 0.0
    %1962 = vmatprep.subr.mxu0 0.0
    %1963 = vmatpush1.msra.mxu0 0.0
    %1964 = vmatprep.subr.mxu0 0.0
    %1965 = vmatpush1.msra.mxu0 0.0
    %1966 = vmatprep.subr.mxu0 0.0
    %1967 = vmatpush1.msra.mxu0 0.0
    %1968 = vmatprep.subr.mxu0 0.0
    %1969 = vmatpush1.msra.mxu0 0.0
    %1970 = vmatprep.subr.mxu0 0.0
    %1971 = vmatpush1.msra.mxu0 0.0
    %1972 = vmatprep.subr.mxu0 0.0
    %1973 = vmatpush1.msra.mxu0 0.0
    %1974 = vmatprep.subr.mxu0 0.0
    %1975 = vmatpush1.msra.mxu0 0.0
    %1976 = vmatprep.subr.mxu0 0.0
    %1977 = vmatpush1.msra.mxu0 0.0
    %1978 = vmatprep.subr.mxu0 0.0
    %1979 = vmatpush1.msra.mxu0 0.0
    %1980 = vmatprep.subr.mxu0 0.0
    %1981 = vmatpush1.msra.mxu0 0.0
    %1982 = vmatprep.subr.mxu0 0.0
    %1983 = vmatpush1.msra.mxu0 0.0
    %1984 = vmatprep.subr.mxu0 0.0
    %1985 = vmatpush1.msra.mxu0 0.0
    %1986 = vmatprep.subr.mxu0 0.0
    %1987 = vmatpush1.msra.mxu0 0.0
    %1988 = vmatprep.subr.mxu0 0.0
    %1989 = vmatpush1.msra.mxu0 0.0
    %1990 = vmatprep.subr.mxu0 0.0
    %1991 = vmatpush1.msra.mxu0 0.0
    %1992 = vmatprep.subr.mxu0 0.0
    %1993 = vmatpush1.msra.mxu0 0.0
    %1994 = vmatprep.subr.mxu0 0.0
    %1995 = vmatpush1.msra.mxu0 0.0
    %1996 = vmatprep.mubr.f32.mxu0 0.0
    %1997 = vmatmul.mubr.f32.gmra.mrb[0].mxu0 %v1930
    %v1998 = vpop.f32.mrb[0].mxu0
    %v1999 = vadd.f32 0.0, %v1998
    %v2000 = vpop.f32.mrb[0].mxu0
    %2001 = vdwg.mxu0
    %v2003 = vsel %vm1175, %v1821, 0
    %2005 = vmatprep.subr.mxu0 0.0
    %2006 = vmatpush1.msra.mxu0 %v1105
    %2007 = vmatprep.subr.mxu0 0.0
    %2008 = vmatpush1.msra.mxu0 0.0
    %2009 = vmatprep.subr.mxu0 0.0
    %2010 = vmatpush1.msra.mxu0 0.0
    %2011 = vmatprep.subr.mxu0 0.0
    %2012 = vmatpush1.msra.mxu0 0.0
    %2013 = vmatprep.subr.mxu0 0.0
    %2014 = vmatpush1.msra.mxu0 0.0
    %2015 = vmatprep.subr.mxu0 0.0
    %2016 = vmatpush1.msra.mxu0 0.0
    %2017 = vmatprep.subr.mxu0 0.0
    %2018 = vmatpush1.msra.mxu0 0.0
    %2019 = vmatprep.subr.mxu0 0.0
    %2020 = vmatpush1.msra.mxu0 0.0
    %2021 = vmatprep.subr.mxu0 0.0
    %2022 = vmatpush1.msra.mxu0 0.0
    %2023 = vmatprep.subr.mxu0 0.0
    %2024 = vmatpush1.msra.mxu0 0.0
    %2025 = vmatprep.subr.mxu0 0.0
    %2026 = vmatpush1.msra.mxu0 0.0
    %2027 = vmatprep.subr.mxu0 0.0
    %2028 = vmatpush1.msra.mxu0 0.0
    %2029 = vmatprep.subr.mxu0 0.0
    %2030 = vmatpush1.msra.mxu0 0.0
    %2031 = vmatprep.subr.mxu0 0.0
    %2032 = vmatpush1.msra.mxu0 0.0
    %2033 = vmatprep.subr.mxu0 0.0
    %2034 = vmatpush1.msra.mxu0 0.0
    %2035 = vmatprep.subr.mxu0 0.0
    %2036 = vmatpush1.msra.mxu0 0.0
    %2037 = vmatprep.subr.mxu0 0.0
    %2038 = vmatpush1.msra.mxu0 0.0
    %2039 = vmatprep.subr.mxu0 0.0
    %2040 = vmatpush1.msra.mxu0 0.0
    %2041 = vmatprep.subr.mxu0 0.0
    %2042 = vmatpush1.msra.mxu0 0.0
    %2043 = vmatprep.subr.mxu0 0.0
    %2044 = vmatpush1.msra.mxu0 0.0
    %2045 = vmatprep.subr.mxu0 0.0
    %2046 = vmatpush1.msra.mxu0 0.0
    %2047 = vmatprep.subr.mxu0 0.0
    %2048 = vmatpush1.msra.mxu0 0.0
    %2049 = vmatprep.subr.mxu0 0.0
    %2050 = vmatpush1.msra.mxu0 0.0
    %2051 = vmatprep.subr.mxu0 0.0
    %2052 = vmatpush1.msra.mxu0 0.0
    %2053 = vmatprep.subr.mxu0 0.0
    %2054 = vmatpush1.msra.mxu0 0.0
    %2055 = vmatprep.subr.mxu0 0.0
    %2056 = vmatpush1.msra.mxu0 0.0
    %2057 = vmatprep.subr.mxu0 0.0
    %2058 = vmatpush1.msra.mxu0 0.0
    %2059 = vmatprep.subr.mxu0 0.0
    %2060 = vmatpush1.msra.mxu0 0.0
    %2061 = vmatprep.subr.mxu0 0.0
    %2062 = vmatpush1.msra.mxu0 0.0
    %2063 = vmatprep.subr.mxu0 0.0
    %2064 = vmatpush1.msra.mxu0 0.0
    %2065 = vmatprep.subr.mxu0 0.0
    %2066 = vmatpush1.msra.mxu0 0.0
    %2067 = vmatprep.subr.mxu0 0.0
    %2068 = vmatpush1.msra.mxu0 0.0
    %2069 = vmatprep.mubr.f32.mxu0 0.0
    %2070 = vmatmul.mubr.f32.gmra.mrb[0].mxu0 %v2003
    %v2071 = vpop.f32.mrb[0].mxu0
    %v2072 = vadd.f32 0.0, %v2071
    %v2073 = vpop.f32.mrb[0].mxu0
    %2074 = vdwg.mxu0
    %v2076 = vsel %vm1175, %v1823, 0
    %2078 = vmatprep.subr.mxu0 0.0
    %2079 = vmatpush1.msra.mxu0 %v1106
    %2080 = vmatprep.subr.mxu0 0.0
    %2081 = vmatpush1.msra.mxu0 0.0
    %2082 = vmatprep.subr.mxu0 0.0
    %2083 = vmatpush1.msra.mxu0 0.0
    %2084 = vmatprep.subr.mxu0 0.0
    %2085 = vmatpush1.msra.mxu0 0.0
    %2086 = vmatprep.subr.mxu0 0.0
    %2087 = vmatpush1.msra.mxu0 0.0
    %2088 = vmatprep.subr.mxu0 0.0
    %2089 = vmatpush1.msra.mxu0 0.0
    %2090 = vmatprep.subr.mxu0 0.0
    %2091 = vmatpush1.msra.mxu0 0.0
    %2092 = vmatprep.subr.mxu0 0.0
    %2093 = vmatpush1.msra.mxu0 0.0
    %2094 = vmatprep.subr.mxu0 0.0
    %2095 = vmatpush1.msra.mxu0 0.0
    %2096 = vmatprep.subr.mxu0 0.0
    %2097 = vmatpush1.msra.mxu0 0.0
    %2098 = vmatprep.subr.mxu0 0.0
    %2099 = vmatpush1.msra.mxu0 0.0
    %2100 = vmatprep.subr.mxu0 0.0
    %2101 = vmatpush1.msra.mxu0 0.0
    %2102 = vmatprep.subr.mxu0 0.0
    %2103 = vmatpush1.msra.mxu0 0.0
    %2104 = vmatprep.subr.mxu0 0.0
    %2105 = vmatpush1.msra.mxu0 0.0
    %2106 = vmatprep.subr.mxu0 0.0
    %2107 = vmatpush1.msra.mxu0 0.0
    %2108 = vmatprep.subr.mxu0 0.0
    %2109 = vmatpush1.msra.mxu0 0.0
    %2110 = vmatprep.subr.mxu0 0.0
    %2111 = vmatpush1.msra.mxu0 0.0
    %2112 = vmatprep.subr.mxu0 0.0
    %2113 = vmatpush1.msra.mxu0 0.0
    %2114 = vmatprep.subr.mxu0 0.0
    %2115 = vmatpush1.msra.mxu0 0.0
    %2116 = vmatprep.subr.mxu0 0.0
    %2117 = vmatpush1.msra.mxu0 0.0
    %2118 = vmatprep.subr.mxu0 0.0
    %2119 = vmatpush1.msra.mxu0 0.0
    %2120 = vmatprep.subr.mxu0 0.0
    %2121 = vmatpush1.msra.mxu0 0.0
    %2122 = vmatprep.subr.mxu0 0.0
    %2123 = vmatpush1.msra.mxu0 0.0
    %2124 = vmatprep.subr.mxu0 0.0
    %2125 = vmatpush1.msra.mxu0 0.0
    %2126 = vmatprep.subr.mxu0 0.0
    %2127 = vmatpush1.msra.mxu0 0.0
    %2128 = vmatprep.subr.mxu0 0.0
    %2129 = vmatpush1.msra.mxu0 0.0
    %2130 = vmatprep.subr.mxu0 0.0
    %2131 = vmatpush1.msra.mxu0 0.0
    %2132 = vmatprep.subr.mxu0 0.0
    %2133 = vmatpush1.msra.mxu0 0.0
    %2134 = vmatprep.subr.mxu0 0.0
    %2135 = vmatpush1.msra.mxu0 0.0
    %2136 = vmatprep.subr.mxu0 0.0
    %2137 = vmatpush1.msra.mxu0 0.0
    %2138 = vmatprep.subr.mxu0 0.0
    %2139 = vmatpush1.msra.mxu0 0.0
    %2140 = vmatprep.subr.mxu0 0.0
    %2141 = vmatpush1.msra.mxu0 0.0
    %2142 = vmatprep.mubr.f32.mxu0 0.0
    %2143 = vmatmul.mubr.f32.gmra.mrb[0].mxu0 %v2076
    %v2144 = vpop.f32.mrb[0].mxu0
    %v2145 = vadd.f32 0.0, %v2144
    %v2146 = vpop.f32.mrb[0].mxu0
    %2147 = vdwg.mxu0
    %v2149 = vsel %vm1175, %v1825, 0
    %2151 = vmatprep.subr.mxu0 0.0
    %2152 = vmatpush1.msra.mxu0 %v1171
    %2153 = vmatprep.subr.mxu0 0.0
    %2154 = vmatpush1.msra.mxu0 0.0
    %2155 = vmatprep.subr.mxu0 0.0
    %2156 = vmatpush1.msra.mxu0 0.0
    %2157 = vmatprep.subr.mxu0 0.0
    %2158 = vmatpush1.msra.mxu0 0.0
    %2159 = vmatprep.subr.mxu0 0.0
    %2160 = vmatpush1.msra.mxu0 0.0
    %2161 = vmatprep.subr.mxu0 0.0
    %2162 = vmatpush1.msra.mxu0 0.0
    %2163 = vmatprep.subr.mxu0 0.0
    %2164 = vmatpush1.msra.mxu0 0.0
    %2165 = vmatprep.subr.mxu0 0.0
    %2166 = vmatpush1.msra.mxu0 0.0
    %2167 = vmatprep.subr.mxu0 0.0
    %2168 = vmatpush1.msra.mxu0 0.0
    %2169 = vmatprep.subr.mxu0 0.0
    %2170 = vmatpush1.msra.mxu0 0.0
    %2171 = vmatprep.subr.mxu0 0.0
    %2172 = vmatpush1.msra.mxu0 0.0
    %2173 = vmatprep.subr.mxu0 0.0
    %2174 = vmatpush1.msra.mxu0 0.0
    %2175 = vmatprep.subr.mxu0 0.0
    %2176 = vmatpush1.msra.mxu0 0.0
    %2177 = vmatprep.subr.mxu0 0.0
    %2178 = vmatpush1.msra.mxu0 0.0
    %2179 = vmatprep.subr.mxu0 0.0
    %2180 = vmatpush1.msra.mxu0 0.0
    %2181 = vmatprep.subr.mxu0 0.0
    %2182 = vmatpush1.msra.mxu0 0.0
    %2183 = vmatprep.subr.mxu0 0.0
    %2184 = vmatpush1.msra.mxu0 0.0
    %2185 = vmatprep.subr.mxu0 0.0
    %2186 = vmatpush1.msra.mxu0 0.0
    %2187 = vmatprep.subr.mxu0 0.0
    %2188 = vmatpush1.msra.mxu0 0.0
    %2189 = vmatprep.subr.mxu0 0.0
    %2190 = vmatpush1.msra.mxu0 0.0
    %2191 = vmatprep.subr.mxu0 0.0
    %2192 = vmatpush1.msra.mxu0 0.0
    %2193 = vmatprep.subr.mxu0 0.0
    %2194 = vmatpush1.msra.mxu0 0.0
    %2195 = vmatprep.subr.mxu0 0.0
    %2196 = vmatpush1.msra.mxu0 0.0
    %2197 = vmatprep.subr.mxu0 0.0
    %2198 = vmatpush1.msra.mxu0 0.0
    %2199 = vmatprep.subr.mxu0 0.0
    %2200 = vmatpush1.msra.mxu0 0.0
    %2201 = vmatprep.subr.mxu0 0.0
    %2202 = vmatpush1.msra.mxu0 0.0
    %2203 = vmatprep.subr.mxu0 0.0
    %2204 = vmatpush1.msra.mxu0 0.0
    %2205 = vmatprep.subr.mxu0 0.0
    %2206 = vmatpush1.msra.mxu0 0.0
    %2207 = vmatprep.subr.mxu0 0.0
    %2208 = vmatpush1.msra.mxu0 0.0
    %2209 = vmatprep.subr.mxu0 0.0
    %2210 = vmatpush1.msra.mxu0 0.0
    %2211 = vmatprep.subr.mxu0 0.0
    %2212 = vmatpush1.msra.mxu0 0.0
    %2213 = vmatprep.subr.mxu0 0.0
    %2214 = vmatpush1.msra.mxu0 0.0
    %2215 = vmatprep.mubr.f32.mxu0 0.0
    %2216 = vmatmul.mubr.f32.gmra.mrb[0].mxu0 %v2149
    %v2217 = vpop.f32.mrb[0].mxu0
    %v2218 = vadd.f32 0.0, %v2217
    %v2219 = vpop.f32.mrb[0].mxu0
    %2220 = vdwg.mxu0
    %v2222 = vsel %vm1175, %v1827, 0
    %2224 = vmatprep.subr.mxu0 0.0
    %2225 = vmatpush1.msra.mxu0 %v1172
    %2226 = vmatprep.subr.mxu0 0.0
    %2227 = vmatpush1.msra.mxu0 0.0
    %2228 = vmatprep.subr.mxu0 0.0
    %2229 = vmatpush1.msra.mxu0 0.0
    %2230 = vmatprep.subr.mxu0 0.0
    %2231 = vmatpush1.msra.mxu0 0.0
    %2232 = vmatprep.subr.mxu0 0.0
    %2233 = vmatpush1.msra.mxu0 0.0
    %2234 = vmatprep.subr.mxu0 0.0
    %2235 = vmatpush1.msra.mxu0 0.0
    %2236 = vmatprep.subr.mxu0 0.0
    %2237 = vmatpush1.msra.mxu0 0.0
    %2238 = vmatprep.subr.mxu0 0.0
    %2239 = vmatpush1.msra.mxu0 0.0
    %2240 = vmatprep.subr.mxu0 0.0
    %2241 = vmatpush1.msra.mxu0 0.0
    %2242 = vmatprep.subr.mxu0 0.0
    %2243 = vmatpush1.msra.mxu0 0.0
    %2244 = vmatprep.subr.mxu0 0.0
    %2245 = vmatpush1.msra.mxu0 0.0
    %2246 = vmatprep.subr.mxu0 0.0
    %2247 = vmatpush1.msra.mxu0 0.0
    %2248 = vmatprep.subr.mxu0 0.0
    %2249 = vmatpush1.msra.mxu0 0.0
    %2250 = vmatprep.subr.mxu0 0.0
    %2251 = vmatpush1.msra.mxu0 0.0
    %2252 = vmatprep.subr.mxu0 0.0
    %2253 = vmatpush1.msra.mxu0 0.0
    %2254 = vmatprep.subr.mxu0 0.0
    %2255 = vmatpush1.msra.mxu0 0.0
    %2256 = vmatprep.subr.mxu0 0.0
    %2257 = vmatpush1.msra.mxu0 0.0
    %2258 = vmatprep.subr.mxu0 0.0
    %2259 = vmatpush1.msra.mxu0 0.0
    %2260 = vmatprep.subr.mxu0 0.0
    %2261 = vmatpush1.msra.mxu0 0.0
    %2262 = vmatprep.subr.mxu0 0.0
    %2263 = vmatpush1.msra.mxu0 0.0
    %2264 = vmatprep.subr.mxu0 0.0
    %2265 = vmatpush1.msra.mxu0 0.0
    %2266 = vmatprep.subr.mxu0 0.0
    %2267 = vmatpush1.msra.mxu0 0.0
    %2268 = vmatprep.subr.mxu0 0.0
    %2269 = vmatpush1.msra.mxu0 0.0
    %2270 = vmatprep.subr.mxu0 0.0
    %2271 = vmatpush1.msra.mxu0 0.0
    %2272 = vmatprep.subr.mxu0 0.0
    %2273 = vmatpush1.msra.mxu0 0.0
    %2274 = vmatprep.subr.mxu0 0.0
    %2275 = vmatpush1.msra.mxu0 0.0
    %2276 = vmatprep.subr.mxu0 0.0
    %2277 = vmatpush1.msra.mxu0 0.0
    %2278 = vmatprep.subr.mxu0 0.0
    %2279 = vmatpush1.msra.mxu0 0.0
    %2280 = vmatprep.subr.mxu0 0.0
    %2281 = vmatpush1.msra.mxu0 0.0
    %2282 = vmatprep.subr.mxu0 0.0
    %2283 = vmatpush1.msra.mxu0 0.0
    %2284 = vmatprep.subr.mxu0 0.0
    %2285 = vmatpush1.msra.mxu0 0.0
    %2286 = vmatprep.subr.mxu0 0.0
    %2287 = vmatpush1.msra.mxu0 0.0
    %2288 = vmatprep.mubr.f32.mxu0 0.0
    %2289 = vmatmul.mubr.f32.gmra.mrb[0].mxu0 %v2222
    %v2290 = vpop.f32.mrb[0].mxu0
    %v2291 = vadd.f32 0.0, %v2290
    %v2292 = vpop.f32.mrb[0].mxu0
    %2293 = vdwg.mxu0
    %v2295 = vsel %vm1175, %v1829, 0
    %2297 = vmatprep.subr.mxu0 0.0
    %2298 = vmatpush1.msra.mxu0 %v1173
    %2299 = vmatprep.subr.mxu0 0.0
    %2300 = vmatpush1.msra.mxu0 0.0
    %2301 = vmatprep.subr.mxu0 0.0
    %2302 = vmatpush1.msra.mxu0 0.0
    %2303 = vmatprep.subr.mxu0 0.0
    %2304 = vmatpush1.msra.mxu0 0.0
    %2305 = vmatprep.subr.mxu0 0.0
    %2306 = vmatpush1.msra.mxu0 0.0
    %2307 = vmatprep.subr.mxu0 0.0
    %2308 = vmatpush1.msra.mxu0 0.0
    %2309 = vmatprep.subr.mxu0 0.0
    %2310 = vmatpush1.msra.mxu0 0.0
    %2311 = vmatprep.subr.mxu0 0.0
    %2312 = vmatpush1.msra.mxu0 0.0
    %2313 = vmatprep.subr.mxu0 0.0
    %2314 = vmatpush1.msra.mxu0 0.0
    %2315 = vmatprep.subr.mxu0 0.0
    %2316 = vmatpush1.msra.mxu0 0.0
    %2317 = vmatprep.subr.mxu0 0.0
    %2318 = vmatpush1.msra.mxu0 0.0
    %2319 = vmatprep.subr.mxu0 0.0
    %2320 = vmatpush1.msra.mxu0 0.0
    %2321 = vmatprep.subr.mxu0 0.0
    %2322 = vmatpush1.msra.mxu0 0.0
    %2323 = vmatprep.subr.mxu0 0.0
    %2324 = vmatpush1.msra.mxu0 0.0
    %2325 = vmatprep.subr.mxu0 0.0
    %2326 = vmatpush1.msra.mxu0 0.0
    %2327 = vmatprep.subr.mxu0 0.0
    %2328 = vmatpush1.msra.mxu0 0.0
    %2329 = vmatprep.subr.mxu0 0.0
    %2330 = vmatpush1.msra.mxu0 0.0
    %2331 = vmatprep.subr.mxu0 0.0
    %2332 = vmatpush1.msra.mxu0 0.0
    %2333 = vmatprep.subr.mxu0 0.0
    %2334 = vmatpush1.msra.mxu0 0.0
    %2335 = vmatprep.subr.mxu0 0.0
    %2336 = vmatpush1.msra.mxu0 0.0
    %2337 = vmatprep.subr.mxu0 0.0
    %2338 = vmatpush1.msra.mxu0 0.0
    %2339 = vmatprep.subr.mxu0 0.0
    %2340 = vmatpush1.msra.mxu0 0.0
    %2341 = vmatprep.subr.mxu0 0.0
    %2342 = vmatpush1.msra.mxu0 0.0
    %2343 = vmatprep.subr.mxu0 0.0
    %2344 = vmatpush1.msra.mxu0 0.0
    %2345 = vmatprep.subr.mxu0 0.0
    %2346 = vmatpush1.msra.mxu0 0.0
    %2347 = vmatprep.subr.mxu0 0.0
    %2348 = vmatpush1.msra.mxu0 0.0
    %2349 = vmatprep.subr.mxu0 0.0
    %2350 = vmatpush1.msra.mxu0 0.0
    %2351 = vmatprep.subr.mxu0 0.0
    %2352 = vmatpush1.msra.mxu0 0.0
    %2353 = vmatprep.subr.mxu0 0.0
    %2354 = vmatpush1.msra.mxu0 0.0
    %2355 = vmatprep.subr.mxu0 0.0
    %2356 = vmatpush1.msra.mxu0 0.0
    %2357 = vmatprep.subr.mxu0 0.0
    %2358 = vmatpush1.msra.mxu0 0.0
    %2359 = vmatprep.subr.mxu0 0.0
    %2360 = vmatpush1.msra.mxu0 0.0
    %2361 = vmatprep.mubr.f32.mxu0 0.0
    %2362 = vmatmul.mubr.f32.gmra.mrb[0].mxu0 %v2295
    %v2363 = vpop.f32.mrb[0].mxu0
    %v2364 = vadd.f32 0.0, %v2363
    %v2365 = vpop.f32.mrb[0].mxu0
    %2366 = vdwg.mxu0
    %v2368 = vsel %vm1175, %v1831, 0
    %2370 = vmatprep.subr.mxu0 0.0
    %2371 = vmatpush1.msra.mxu0 %v1174
    %2372 = vmatprep.subr.mxu0 0.0
    %2373 = vmatpush1.msra.mxu0 0.0
    %2374 = vmatprep.subr.mxu0 0.0
    %2375 = vmatpush1.msra.mxu0 0.0
    %2376 = vmatprep.subr.mxu0 0.0
    %2377 = vmatpush1.msra.mxu0 0.0
    %2378 = vmatprep.subr.mxu0 0.0
    %2379 = vmatpush1.msra.mxu0 0.0
    %2380 = vmatprep.subr.mxu0 0.0
    %2381 = vmatpush1.msra.mxu0 0.0
    %2382 = vmatprep.subr.mxu0 0.0
    %2383 = vmatpush1.msra.mxu0 0.0
    %2384 = vmatprep.subr.mxu0 0.0
    %2385 = vmatpush1.msra.mxu0 0.0
    %2386 = vmatprep.subr.mxu0 0.0
    %2387 = vmatpush1.msra.mxu0 0.0
    %2388 = vmatprep.subr.mxu0 0.0
    %2389 = vmatpush1.msra.mxu0 0.0
    %2390 = vmatprep.subr.mxu0 0.0
    %2391 = vmatpush1.msra.mxu0 0.0
    %2392 = vmatprep.subr.mxu0 0.0
    %2393 = vmatpush1.msra.mxu0 0.0
    %2394 = vmatprep.subr.mxu0 0.0
    %2395 = vmatpush1.msra.mxu0 0.0
    %2396 = vmatprep.subr.mxu0 0.0
    %2397 = vmatpush1.msra.mxu0 0.0
    %2398 = vmatprep.subr.mxu0 0.0
    %2399 = vmatpush1.msra.mxu0 0.0
    %2400 = vmatprep.subr.mxu0 0.0
    %2401 = vmatpush1.msra.mxu0 0.0
    %2402 = vmatprep.subr.mxu0 0.0
    %2403 = vmatpush1.msra.mxu0 0.0
    %2404 = vmatprep.subr.mxu0 0.0
    %2405 = vmatpush1.msra.mxu0 0.0
    %2406 = vmatprep.subr.mxu0 0.0
    %2407 = vmatpush1.msra.mxu0 0.0
    %2408 = vmatprep.subr.mxu0 0.0
    %2409 = vmatpush1.msra.mxu0 0.0
    %2410 = vmatprep.subr.mxu0 0.0
    %2411 = vmatpush1.msra.mxu0 0.0
    %2412 = vmatprep.subr.mxu0 0.0
    %2413 = vmatpush1.msra.mxu0 0.0
    %2414 = vmatprep.subr.mxu0 0.0
    %2415 = vmatpush1.msra.mxu0 0.0
    %2416 = vmatprep.subr.mxu0 0.0
    %2417 = vmatpush1.msra.mxu0 0.0
    %2418 = vmatprep.subr.mxu0 0.0
    %2419 = vmatpush1.msra.mxu0 0.0
    %2420 = vmatprep.subr.mxu0 0.0
    %2421 = vmatpush1.msra.mxu0 0.0
    %2422 = vmatprep.subr.mxu0 0.0
    %2423 = vmatpush1.msra.mxu0 0.0
    %2424 = vmatprep.subr.mxu0 0.0
    %2425 = vmatpush1.msra.mxu0 0.0
    %2426 = vmatprep.subr.mxu0 0.0
    %2427 = vmatpush1.msra.mxu0 0.0
    %2428 = vmatprep.subr.mxu0 0.0
    %2429 = vmatpush1.msra.mxu0 0.0
    %2430 = vmatprep.subr.mxu0 0.0
    %2431 = vmatpush1.msra.mxu0 0.0
    %2432 = vmatprep.subr.mxu0 0.0
    %2433 = vmatpush1.msra.mxu0 0.0
    %2434 = vmatprep.mubr.f32.mxu0 0.0
    %2435 = vmatmul.mubr.f32.gmra.mrb[0].mxu0 %v2368
    %v2436 = vpop.f32.mrb[0].mxu0
    %v2437 = vadd.f32 0.0, %v2436
    %v2438 = vpop.f32.mrb[0].mxu0
    %2439 = vdwg.mxu0
    %v2440 = vrcp.pop %v1834
    %v2441 = vrcp.pop %v1837
    %v2442 = vrcp.pop %v1840
    %v2443 = vrcp.pop %v1843
    %v2444 = vrcp.pop %v1846
    %v2445 = vrcp.pop %v1849
    %v2446 = vrcp.pop %v1852
    %v2447 = vrcp.pop %v1855
    %v2448 = vmul.f32 %v1926, %v2440
    %v2449 = vmul.f32 %v1999, %v2441
    %v2450 = vmul.f32 %v2072, %v2442
    %v2451 = vmul.f32 %v2145, %v2443
    %v2452 = vmul.f32 %v2218, %v2444
    %v2453 = vmul.f32 %v2291, %v2445
    %v2454 = vmul.f32 %v2364, %v2446
    %v2455 = vmul.f32 %v2437, %v2447
    %v2456 = vcombine.low %v2448, %v2450
    %v2457 = vcombine.high %v2448, %v2450
    %v2459 = vunpack.c.l.s4 1983009808
    %v2460 = vunpack.c.0.s8 %v2459
    %v2461 = vlaneseq
    %v2462 = vshrl.u32 %v2461, 7
    %v2463 = vsub.s32 %v2460, %v2462
    %v2464 = vrot.slane %v2456, %v2463
    %v2466 = vunpack.c.l.s4 1983009808
    %v2467 = vunpack.c.0.s8 %v2466
    %v2468 = vlaneseq
    %v2469 = vshrl.u32 %v2468, 7
    %v2470 = vsub.s32 %v2467, %v2469
    %v2471 = vrot.slane %v2457, %v2470
    %v2472 = vcombine.low %v2449, %v2451
    %v2473 = vcombine.high %v2449, %v2451
    %v2475 = vunpack.c.l.s4 1983009808
    %v2476 = vunpack.c.0.s8 %v2475
    %v2477 = vlaneseq
    %v2478 = vshrl.u32 %v2477, 7
    %v2479 = vsub.s32 %v2476, %v2478
    %v2480 = vrot.slane %v2472, %v2479
    %v2482 = vunpack.c.l.s4 1983009808
    %v2483 = vunpack.c.0.s8 %v2482
    %v2484 = vlaneseq
    %v2485 = vshrl.u32 %v2484, 7
    %v2486 = vsub.s32 %v2483, %v2485
    %v2487 = vrot.slane %v2473, %v2486
    %v2488 = vcombine.low %v2464, %v2480
    %v2489 = vcombine.high %v2464, %v2480
    %v2491 = vunpack.c.l.s4 1934713408
    %v2492 = vunpack.c.0.s8 %v2491
    %v2493 = vlaneseq
    %v2494 = vshrl.u32 %v2493, 7
    %v2495 = vsub.s32 %v2492, %v2494
    %v2496 = vrot.slane %v2488, %v2495
    %v2498 = vunpack.c.l.s4 1934713408
    %v2499 = vunpack.c.0.s8 %v2498
    %v2500 = vlaneseq
    %v2501 = vshrl.u32 %v2500, 7
    %v2502 = vsub.s32 %v2499, %v2501
    %v2503 = vrot.slane %v2489, %v2502
    %v2504 = vcombine.low %v2471, %v2487
    %v2505 = vcombine.high %v2471, %v2487
    %v2507 = vunpack.c.l.s4 1934713408
    %v2508 = vunpack.c.0.s8 %v2507
    %v2509 = vlaneseq
    %v2510 = vshrl.u32 %v2509, 7
    %v2511 = vsub.s32 %v2508, %v2510
    %v2512 = vrot.slane %v2504, %v2511
    %v2514 = vunpack.c.l.s4 1934713408
    %v2515 = vunpack.c.0.s8 %v2514
    %v2516 = vlaneseq
    %v2517 = vshrl.u32 %v2516, 7
    %v2518 = vsub.s32 %v2515, %v2517
    %v2519 = vrot.slane %v2505, %v2518
    %v2520 = vcombine.high %v2496, 0.0
    %v2521 = vcombine.high %v2503, 0.0
    %v2522 = vcombine.high %v2512, 0.0
    %v2523 = vcombine.high %v2519, 0.0
    %v2524 = vcombine.low %v2452, %v2454
    %v2525 = vcombine.high %v2452, %v2454
    %v2527 = vunpack.c.l.s4 1983009808
    %v2528 = vunpack.c.0.s8 %v2527
    %v2529 = vlaneseq
    %v2530 = vshrl.u32 %v2529, 7
    %v2531 = vsub.s32 %v2528, %v2530
    %v2532 = vrot.slane %v2524, %v2531
    %v2534 = vunpack.c.l.s4 1983009808
    %v2535 = vunpack.c.0.s8 %v2534
    %v2536 = vlaneseq
    %v2537 = vshrl.u32 %v2536, 7
    %v2538 = vsub.s32 %v2535, %v2537
    %v2539 = vrot.slane %v2525, %v2538
    %v2540 = vcombine.low %v2453, %v2455
    %v2541 = vcombine.high %v2453, %v2455
    %v2543 = vunpack.c.l.s4 1983009808
    %v2544 = vunpack.c.0.s8 %v2543
    %v2545 = vlaneseq
    %v2546 = vshrl.u32 %v2545, 7
    %v2547 = vsub.s32 %v2544, %v2546
    %v2548 = vrot.slane %v2540, %v2547
    %v2550 = vunpack.c.l.s4 1983009808
    %v2551 = vunpack.c.0.s8 %v2550
    %v2552 = vlaneseq
    %v2553 = vshrl.u32 %v2552, 7
    %v2554 = vsub.s32 %v2551, %v2553
    %v2555 = vrot.slane %v2541, %v2554
    %v2556 = vcombine.low %v2532, %v2548
    %v2557 = vcombine.high %v2532, %v2548
    %v2559 = vunpack.c.l.s4 1934713408
    %v2560 = vunpack.c.0.s8 %v2559
    %v2561 = vlaneseq
    %v2562 = vshrl.u32 %v2561, 7
    %v2563 = vsub.s32 %v2560, %v2562
    %v2564 = vrot.slane %v2556, %v2563
    %v2566 = vunpack.c.l.s4 1934713408
    %v2567 = vunpack.c.0.s8 %v2566
    %v2568 = vlaneseq
    %v2569 = vshrl.u32 %v2568, 7
    %v2570 = vsub.s32 %v2567, %v2569
    %v2571 = vrot.slane %v2557, %v2570
    %v2572 = vcombine.low %v2539, %v2555
    %v2573 = vcombine.high %v2539, %v2555
    %v2575 = vunpack.c.l.s4 1934713408
    %v2576 = vunpack.c.0.s8 %v2575
    %v2577 = vlaneseq
    %v2578 = vshrl.u32 %v2577, 7
    %v2579 = vsub.s32 %v2576, %v2578
    %v2580 = vrot.slane %v2572, %v2579
    %v2582 = vunpack.c.l.s4 1934713408
    %v2583 = vunpack.c.0.s8 %v2582
    %v2584 = vlaneseq
    %v2585 = vshrl.u32 %v2584, 7
    %v2586 = vsub.s32 %v2583, %v2585
    %v2587 = vrot.slane %v2573, %v2586
    %v2588 = vcombine.high %v2564, 0.0
    %v2589 = vcombine.high %v2571, 0.0
    %v2590 = vcombine.high %v2580, 0.0
    %v2591 = vcombine.high %v2587, 0.0
    %v2592 = vcombine.low %v2496, %v2503
    %v2594 = vunpack.c.l.s4 1983009808
    %v2595 = vunpack.c.0.s8 %v2594
    %v2596 = vlaneseq
    %v2597 = vshrl.u32 %v2596, 7
    %v2598 = vsub.s32 %v2595, %v2597
    %v2599 = vrot.slane %v2592, %v2598
    %v2600 = vcombine.low %v2520, %v2521
    %v2602 = vunpack.c.l.s4 1983009808
    %v2603 = vunpack.c.0.s8 %v2602
    %v2604 = vlaneseq
    %v2605 = vshrl.u32 %v2604, 7
    %v2606 = vsub.s32 %v2603, %v2605
    %v2607 = vrot.slane %v2600, %v2606
    %v2608 = vcombine.low %v2512, %v2519
    %v2610 = vunpack.c.l.s4 1983009808
    %v2611 = vunpack.c.0.s8 %v2610
    %v2612 = vlaneseq
    %v2613 = vshrl.u32 %v2612, 7
    %v2614 = vsub.s32 %v2611, %v2613
    %v2615 = vrot.slane %v2608, %v2614
    %v2616 = vcombine.low %v2522, %v2523
    %v2618 = vunpack.c.l.s4 1983009808
    %v2619 = vunpack.c.0.s8 %v2618
    %v2620 = vlaneseq
    %v2621 = vshrl.u32 %v2620, 7
    %v2622 = vsub.s32 %v2619, %v2621
    %v2623 = vrot.slane %v2616, %v2622
    %v2624 = vcombine.low %v2599, %v2607
    %v2625 = vcombine.high %v2599, %v2607
    %v2627 = vunpack.c.l.s4 1934713408
    %v2628 = vunpack.c.0.s8 %v2627
    %v2629 = vlaneseq
    %v2630 = vshrl.u32 %v2629, 7
    %v2631 = vsub.s32 %v2628, %v2630
    %v2632 = vrot.slane %v2624, %v2631
    %v2634 = vunpack.c.l.s4 1934713408
    %v2635 = vunpack.c.0.s8 %v2634
    %v2636 = vlaneseq
    %v2637 = vshrl.u32 %v2636, 7
    %v2638 = vsub.s32 %v2635, %v2637
    %v2639 = vrot.slane %v2625, %v2638
    %v2640 = vcombine.low %v2615, %v2623
    %v2641 = vcombine.high %v2615, %v2623
    %v2643 = vunpack.c.l.s4 1934713408
    %v2644 = vunpack.c.0.s8 %v2643
    %v2645 = vlaneseq
    %v2646 = vshrl.u32 %v2645, 7
    %v2647 = vsub.s32 %v2644, %v2646
    %v2648 = vrot.slane %v2640, %v2647
    %v2650 = vunpack.c.l.s4 1934713408
    %v2651 = vunpack.c.0.s8 %v2650
    %v2652 = vlaneseq
    %v2653 = vshrl.u32 %v2652, 7
    %v2654 = vsub.s32 %v2651, %v2653
    %v2655 = vrot.slane %v2641, %v2654
    %v2656 = vcombine.low %v2632, %v2648
    %v2657 = vcombine.high %v2632, %v2648
    %v2658 = vcombine.low %v2639, %v2655
    %v2659 = vcombine.high %v2639, %v2655
    %v2660 = vcombine.low %v2564, %v2571
    %v2662 = vunpack.c.l.s4 1983009808
    %v2663 = vunpack.c.0.s8 %v2662
    %v2664 = vlaneseq
    %v2665 = vshrl.u32 %v2664, 7
    %v2666 = vsub.s32 %v2663, %v2665
    %v2667 = vrot.slane %v2660, %v2666
    %v2668 = vcombine.low %v2588, %v2589
    %v2670 = vunpack.c.l.s4 1983009808
    %v2671 = vunpack.c.0.s8 %v2670
    %v2672 = vlaneseq
    %v2673 = vshrl.u32 %v2672, 7
    %v2674 = vsub.s32 %v2671, %v2673
    %v2675 = vrot.slane %v2668, %v2674
    %v2676 = vcombine.low %v2580, %v2587
    %v2678 = vunpack.c.l.s4 1983009808
    %v2679 = vunpack.c.0.s8 %v2678
    %v2680 = vlaneseq
    %v2681 = vshrl.u32 %v2680, 7
    %v2682 = vsub.s32 %v2679, %v2681
    %v2683 = vrot.slane %v2676, %v2682
    %v2684 = vcombine.low %v2590, %v2591
    %v2686 = vunpack.c.l.s4 1983009808
    %v2687 = vunpack.c.0.s8 %v2686
    %v2688 = vlaneseq
    %v2689 = vshrl.u32 %v2688, 7
    %v2690 = vsub.s32 %v2687, %v2689
    %v2691 = vrot.slane %v2684, %v2690
    %v2692 = vcombine.low %v2667, %v2675
    %v2693 = vcombine.high %v2667, %v2675
    %v2695 = vunpack.c.l.s4 1934713408
    %v2696 = vunpack.c.0.s8 %v2695
    %v2697 = vlaneseq
    %v2698 = vshrl.u32 %v2697, 7
    %v2699 = vsub.s32 %v2696, %v2698
    %v2700 = vrot.slane %v2692, %v2699
    %v2702 = vunpack.c.l.s4 1934713408
    %v2703 = vunpack.c.0.s8 %v2702
    %v2704 = vlaneseq
    %v2705 = vshrl.u32 %v2704, 7
    %v2706 = vsub.s32 %v2703, %v2705
    %v2707 = vrot.slane %v2693, %v2706
    %v2708 = vcombine.low %v2683, %v2691
    %v2709 = vcombine.high %v2683, %v2691
    %v2711 = vunpack.c.l.s4 1934713408
    %v2712 = vunpack.c.0.s8 %v2711
    %v2713 = vlaneseq
    %v2714 = vshrl.u32 %v2713, 7
    %v2715 = vsub.s32 %v2712, %v2714
    %v2716 = vrot.slane %v2708, %v2715
    %v2718 = vunpack.c.l.s4 1934713408
    %v2719 = vunpack.c.0.s8 %v2718
    %v2720 = vlaneseq
    %v2721 = vshrl.u32 %v2720, 7
    %v2722 = vsub.s32 %v2719, %v2721
    %v2723 = vrot.slane %v2709, %v2722
    %v2724 = vcombine.low %v2700, %v2716
    %v2725 = vcombine.high %v2700, %v2716
    %v2726 = vcombine.low %v2707, %v2723
    %v2727 = vcombine.high %v2707, %v2723
    %2730 = vrot.lane.b32.xlu0 %v2657, 8
    %v2731 = vpop.permute.xlu0 %2730
    %2732 = vrot.lane.b32.xlu0 %v2725, 8
    %v2733 = vpop.permute.xlu0 %2732
    %2738 = vrot.lane.b32.xlu0 %v2658, 16
    %v2739 = vpop.permute.xlu0 %2738
    %2740 = vrot.lane.b32.xlu0 %v2726, 16
    %v2741 = vpop.permute.xlu0 %2740
    %2746 = vrot.lane.b32.xlu0 %v2659, 24
    %v2747 = vpop.permute.xlu0 %2746
    %2748 = vrot.lane.b32.xlu0 %v2727, 24
    %v2749 = vpop.permute.xlu0 %2748
    %v2752 = vsel %vm1175, %v2656, %v2731
    %v2753 = vsel %vm1175, %v2724, %v2733
    %vm2754 = vcmask 130048
    %v2755 = vsel %vm2754, %v2752, %v2739
    %v2756 = vsel %vm2754, %v2753, %v2741
    %vm2757 = vcmask 195584
    %v2758 = vsel %vm2757, %v2755, %v2747
    %v2759 = vsel %vm2757, %v2756, %v2749
    %v2760 = vld [vmem:[#allocation10] sm:$0xff]
    %v2761 = vld [vmem:[#allocation10 + $0x8] sm:$0xff]
    %v2762 = vld [vmem:[#allocation10 + $0x10] sm:$0xff]
    %v2763 = vld [vmem:[#allocation10 + $0x18] sm:$0xff]
    %v2764 = vld [vmem:[%s7] sm:$0x1]
    %v2766 = vlaneseq
    %v2767 = vshrl.u32 %v2766, 7
    %v2768 = vsub.s32 0, %v2767
    %v2769 = vrot.slane %v2764, %v2768
    %v2772 = vsel %vm121, %v2758, 0
    %v2775 = vsel %vm121, %v2759, 0
    %2777 = vmatprep.subr.mxu0 0.0
    %2778 = vmatpush1.msra.mxu0 %v2760
    %2779 = vmatprep.subr.mxu0 0.0
    %2780 = vmatpush1.msra.mxu0 %v2761
    %2781 = vmatprep.subr.mxu0 0.0
    %2782 = vmatpush1.msra.mxu0 %v2762
    %2783 = vmatprep.subr.mxu0 0.0
    %2784 = vmatpush1.msra.mxu0 %v2763
    %2785 = vmatprep.subr.mxu0 0.0
    %2786 = vmatpush1.msra.mxu0 0.0
    %2787 = vmatprep.subr.mxu0 0.0
    %2788 = vmatpush1.msra.mxu0 0.0
    %2789 = vmatprep.subr.mxu0 0.0
    %2790 = vmatpush1.msra.mxu0 0.0
    %2791 = vmatprep.subr.mxu0 0.0
    %2792 = vmatpush1.msra.mxu0 0.0
    %2793 = vmatprep.subr.mxu0 0.0
    %2794 = vmatpush1.msra.mxu0 0.0
    %2795 = vmatprep.subr.mxu0 0.0
    %2796 = vmatpush1.msra.mxu0 0.0
    %2797 = vmatprep.subr.mxu0 0.0
    %2798 = vmatpush1.msra.mxu0 0.0
    %2799 = vmatprep.subr.mxu0 0.0
    %2800 = vmatpush1.msra.mxu0 0.0
    %2801 = vmatprep.subr.mxu0 0.0
    %2802 = vmatpush1.msra.mxu0 0.0
    %2803 = vmatprep.subr.mxu0 0.0
    %2804 = vmatpush1.msra.mxu0 0.0
    %2805 = vmatprep.subr.mxu0 0.0
    %2806 = vmatpush1.msra.mxu0 0.0
    %2807 = vmatprep.subr.mxu0 0.0
    %2808 = vmatpush1.msra.mxu0 0.0
    %2809 = vmatprep.subr.mxu0 0.0
    %2810 = vmatpush1.msra.mxu0 0.0
    %2811 = vmatprep.subr.mxu0 0.0
    %2812 = vmatpush1.msra.mxu0 0.0
    %2813 = vmatprep.subr.mxu0 0.0
    %2814 = vmatpush1.msra.mxu0 0.0
    %2815 = vmatprep.subr.mxu0 0.0
    %2816 = vmatpush1.msra.mxu0 0.0
    %2817 = vmatprep.subr.mxu0 0.0
    %2818 = vmatpush1.msra.mxu0 0.0
    %2819 = vmatprep.subr.mxu0 0.0
    %2820 = vmatpush1.msra.mxu0 0.0
    %2821 = vmatprep.subr.mxu0 0.0
    %2822 = vmatpush1.msra.mxu0 0.0
    %2823 = vmatprep.subr.mxu0 0.0
    %2824 = vmatpush1.msra.mxu0 0.0
    %2825 = vmatprep.subr.mxu0 0.0
    %2826 = vmatpush1.msra.mxu0 0.0
    %2827 = vmatprep.subr.mxu0 0.0
    %2828 = vmatpush1.msra.mxu0 0.0
    %2829 = vmatprep.subr.mxu0 0.0
    %2830 = vmatpush1.msra.mxu0 0.0
    %2831 = vmatprep.subr.mxu0 0.0
    %2832 = vmatpush1.msra.mxu0 0.0
    %2833 = vmatprep.subr.mxu0 0.0
    %2834 = vmatpush1.msra.mxu0 0.0
    %2835 = vmatprep.subr.mxu0 0.0
    %2836 = vmatpush1.msra.mxu0 0.0
    %2837 = vmatprep.subr.mxu0 0.0
    %2838 = vmatpush1.msra.mxu0 0.0
    %2839 = vmatprep.subr.mxu0 0.0
    %2840 = vmatpush1.msra.mxu0 0.0
    %2841 = vmatprep.mubr.f32.mxu0 0.0
    %2842 = vmatmul.mubr.f32.gmra.mrb[0].mxu0 %v2772
    %v2843 = vpop.f32.mrb[0].mxu0
    %v2844 = vadd.f32 %v2769, %v2843
    %v2845 = vpop.f32.mrb[0].mxu0
    %2846 = vmatprep.mubr.f32.mxu0 0.0
    %2847 = vmatmul.mubr.f32.gmra.mrb[0].mxu0 %v2775
    %v2848 = vpop.f32.mrb[0].mxu0
    %v2849 = vadd.f32 %v2769, %v2848
    %v2850 = vpop.f32.mrb[0].mxu0
    %2851 = vdwg.mxu0
    %v2852 = vadd.f32 %v104, %v2844
    %v2853 = vadd.f32 %v105, %v2849
    %v2854 = vsel %vm121, %v2852, 0.0
    %2855 = vadd.xlane.f32.xlu0 %v2854
    %v2856 = vpop.xlane.xlu0 %2855
    %v2857 = vsel %vm121, %v2853, 0.0
    %2858 = vadd.xlane.f32.xlu0 %v2857
    %v2859 = vpop.xlane.xlu0 %2858
    %v2860 = vrcp.pop 32.0
    %v2861 = vmul.f32 %v2856, %v2860
    %v2862 = vmul.f32 %v2859, %v2860
    %v2863 = vsub.f32 %v2852, %v2861
    %v2864 = vsub.f32 %v2853, %v2862
    %v2865 = vmul.f32 %v2863, %v2863
    %v2866 = vmul.f32 %v2864, %v2864
    %v2867 = vsel %vm121, %v2865, 0.0
    %2868 = vadd.xlane.f32.xlu0 %v2867
    %v2869 = vpop.xlane.xlu0 %2868
    %v2870 = vsel %vm121, %v2866, 0.0
    %2871 = vadd.xlane.f32.xlu0 %v2870
    %v2872 = vpop.xlane.xlu0 %2871
    %v2873 = vmul.f32 %v2869, %v2860
    %v2874 = vmul.f32 %v2872, %v2860
    %v2875 = vadd.f32 %v2873, 1e-05
    %v2876 = vadd.f32 %v2874, 1e-05
    %v2877 = vrsqrt.pop %v2875
    %v2878 = vrsqrt.pop %v2876
    %v2879 = vmul.f32 %v2863, %v2877
    %v2880 = vmul.f32 %v2864, %v2878
    %v2881 = vld [vmem:[%s8] sm:$0x1]
    %v2883 = vlaneseq
    %v2884 = vshrl.u32 %v2883, 7
    %v2885 = vsub.s32 0, %v2884
    %v2886 = vrot.slane %v2881, %v2885
    %v2888 = vmul.f32 %v2879, %v2886
    %v2889 = vmul.f32 %v2880, %v2886
    %v2890 = vld [vmem:[%s9] sm:$0x1]
    %v2892 = vlaneseq
    %v2893 = vshrl.u32 %v2892, 7
    %v2894 = vsub.s32 0, %v2893
    %v2895 = vrot.slane %v2890, %v2894
    %v2897 = vadd.f32 %v2888, %v2895
    %v2898 = vadd.f32 %v2889, %v2895
    %2899 = vst.msk [vmem:[#allocation11] sm:$0xff] %vm121, %v2897
    %2900 = vst.msk [vmem:[#allocation11 + $0x8] sm:$0xff] %vm121, %v2898
    // Predicated region
    $region62: #{tpu_custom_call.1} parent=1 // pred_check
      _
    $region63: #{tpu_custom_call.1} parent=1 // pred_check_branch
      %2902 = sbr.rel (0) target = $region65
    $region64: #{tpu_custom_call.1} parent=1 // pred_region
      %s2904 = ssub.s32 256, 256
      %2905 = vsyncadd [#allocation4], %s2904
      %s2906 = sshll.u32 [#allocation11], 4
      %s2907 = int_to_ptr.vmem [resolvable:$true] %s2906
      %2912 = dma.vmem_to_hbm [thread:$0]  %s2907, 256, %s10, [#allocation4], 128, 128, 8
    $region65: #{tpu_custom_call.1} parent=1 // pred_fallthru
      _
    // Predicated region
    $region66: #{tpu_custom_call.1} parent=1 // pred_check
      _
    $region67: #{tpu_custom_call.1} parent=1 // pred_check_branch
      %2914 = sbr.rel (0) target = $region69
    $region68: #{tpu_custom_call.1} parent=1 // pred_region
      %2915 = dma.done [#allocation4], 256
    $region69: #{tpu_custom_call.1} parent=1 // pred_fallthru
      _
    %2916 = vsyncpa [#allocation3], 1
    %2917 = vsyncpa [#allocation6], 1
    %2918 = vsyncpa [#allocation9], 1
    %2919 = vsyncpa [#allocation4], 1

// kernel: tpu_custom_call.1
$region0: #{tpu_custom_call.1}
  #allocation0 [shape = 'u32[]', space=smem, size = 0x4, offset = 0x4, fixed_abs, tag = 'smem constant byte address 0x4 - core index']
  #allocation1 [shape = 'u32[144,128]{1,0:T(1,128)}', space=vmem, size = 0x12000, scoped, tag = 'internal scratch']
  %s0 = inlined_call_operand.hbm [shape: f32[2,8,32], index: 0, kind: input, shape index: {}]
  %s1 = inlined_call_operand.hbm [shape: f32[2,8,32], index: 1, kind: input, shape index: {}]
  %s2 = inlined_call_operand.hbm [shape: f32[32,64], index: 2, kind: input, shape index: {}]
  %s3 = inlined_call_operand.vmem [shape: f32[1,64], index: 3, kind: input, shape index: {}]
  %s4 = inlined_call_operand.hbm [shape: f32[32,32], index: 4, kind: input, shape index: {}]
  %s5 = inlined_call_operand.vmem [shape: f32[1,32], index: 5, kind: input, shape index: {}]
  %s6 = inlined_call_operand.hbm [shape: f32[32,32], index: 6, kind: input, shape index: {}]
  %s7 = inlined_call_operand.vmem [shape: f32[1,32], index: 7, kind: input, shape index: {}]
  %s8 = inlined_call_operand.vmem [shape: f32[1,32], index: 8, kind: input, shape index: {}]
  %s9 = inlined_call_operand.vmem [shape: f32[1,32], index: 9, kind: input, shape index: {}]
  %s10 = inlined_call_operand.hbm [shape: f32[2,8,32], index: 10, kind: output, shape index: {}]
  %s11 = sld [smem:[#allocation0]]
  $region70: #{tpu_custom_call.1} parent=0
    _
  %s13 = ssub.s32 1, %s11
  %s14 = scalar_select 0, %s13, %s11
  $region1: #{tpu_custom_call.1} parent=0
    #allocation2 [shape = 'u8[8192]{0}', space=vmem, size = 0x2000, scoped, tag = 'input window, operand 0, single buffered']
    #allocation3 [shape = 's32[1]{0}', space=sflag, size = 0x4, scoped, tag = 'scoped memory for tpu_custom_call.1']
    #allocation4 [shape = 's32[1]{0}', space=sflag, size = 0x4, scoped, tag = 'scoped memory for tpu_custom_call.1']
    #allocation5 [shape = 'u8[8192]{0}', space=vmem, size = 0x2000, scoped, tag = 'input window, operand 1, single buffered']
    #allocation6 [shape = 's32[1]{0}', space=sflag, size = 0x4, scoped, tag = 'scoped memory for tpu_custom_call.1']
    #allocation7 [shape = 'u8[16384]{0}', space=vmem, size = 0x4000, scoped, tag = 'input window, operand 2, single buffered']
    #allocation8 [shape = 'u8[16384]{0}', space=vmem, size = 0x4000, scoped, tag = 'input window, operand 4, single buffered']
    #allocation9 [shape = 's32[1]{0}', space=sflag, size = 0x4, scoped, tag = 'scoped memory for tpu_custom_call.1']
    #allocation10 [shape = 'u8[16384]{0}', space=vmem, size = 0x4000, scoped, tag = 'input window, operand 6, single buffered']
    #allocation11 [shape = 'u8[8192]{0}', space=vmem, size = 0x2000, scoped, tag = 'output window, operand 0, single buffered']
    %15 = vsyncpa [#allocation3], 0
    %16 = vsyncpa [#allocation6], 0
    %17 = vsyncpa [#allocation9], 0
    %18 = vsyncpa [#allocation4], 0
    // Predicated region
    $region2: #{tpu_custom_call.1} parent=1 // pred_check
      _
    $region3: #{tpu_custom_call.1} parent=1 // pred_check_branch
      %20 = sbr.rel (0) target = $region5
    $region4: #{tpu_custom_call.1} parent=1 // pred_region
      %s22 = ssub.s32 256, 256
      %23 = vsyncadd [#allocation3], %s22
      %s24 = sshll.u32 [#allocation2], 4
      %s25 = int_to_ptr.vmem [resolvable:$true] %s24
      %30 = dma.hbm_to_vmem [thread:$0]  %s0, 256, %s25, [#allocation3], 128, 128, 8
    $region5: #{tpu_custom_call.1} parent=1 // pred_fallthru
      _
    // Predicated region
    $region6: #{tpu_custom_call.1} parent=1 // pred_check
      _
    $region7: #{tpu_custom_call.1} parent=1 // pred_check_branch
      %32 = sbr.rel (0) target = $region9
    $region8: #{tpu_custom_call.1} parent=1 // pred_region
      %s34 = ssub.s32 256, 256
      %35 = vsyncadd [#allocation6], %s34
      %s36 = sshll.u32 [#allocation5], 4
      %s37 = int_to_ptr.vmem [resolvable:$true] %s36
      %42 = dma.hbm_to_vmem [thread:$0]  %s1, 256, %s37, [#allocation6], 128, 128, 8
    $region9: #{tpu_custom_call.1} parent=1 // pred_fallthru
      _
    // Predicated region
    $region10: #{tpu_custom_call.1} parent=1 // pred_check
      _
    $region11: #{tpu_custom_call.1} parent=1 // pred_check_branch
      %44 = sbr.rel (0) target = $region13
    $region12: #{tpu_custom_call.1} parent=1 // pred_region
      %s46 = ssub.s32 512, 512
      %47 = vsyncadd [#allocation6], %s46
      %s48 = sshll.u32 [#allocation7], 4
      %s49 = int_to_ptr.vmem [resolvable:$true] %s48
      %54 = dma.hbm_to_vmem [thread:$0]  %s2, 512, %s49, [#allocation6], 128, 128, 8
    $region13: #{tpu_custom_call.1} parent=1 // pred_fallthru
      _
    // Predicated region
    $region14: #{tpu_custom_call.1} parent=1 // pred_check
      _
    $region15: #{tpu_custom_call.1} parent=1 // pred_check_branch
      %56 = sbr.rel (0) target = $region17
    $region16: #{tpu_custom_call.1} parent=1 // pred_region
      _
    $region17: #{tpu_custom_call.1} parent=1 // pred_fallthru
      _
    // Predicated region
    $region18: #{tpu_custom_call.1} parent=1 // pred_check
      _
    $region19: #{tpu_custom_call.1} parent=1 // pred_check_branch
      %58 = sbr.rel (0) target = $region21
    $region20: #{tpu_custom_call.1} parent=1 // pred_region
      %s60 = ssub.s32 512, 512
      %61 = vsyncadd [#allocation9], %s60
      %s62 = sshll.u32 [#allocation8], 4
      %s63 = int_to_ptr.vmem [resolvable:$true] %s62
      %68 = dma.hbm_to_vmem [thread:$0]  %s4, 512, %s63, [#allocation9], 128, 128, 8
    $region21: #{tpu_custom_call.1} parent=1 // pred_fallthru
      _
    // Predicated region
    $region22: #{tpu_custom_call.1} parent=1 // pred_check
      _
    $region23: #{tpu_custom_call.1} parent=1 // pred_check_branch
      %70 = sbr.rel (0) target = $region25
    $region24: #{tpu_custom_call.1} parent=1 // pred_region
      _
    $region25: #{tpu_custom_call.1} parent=1 // pred_fallthru
      _
    // Predicated region
    $region26: #{tpu_custom_call.1} parent=1 // pred_check
      _
    $region27: #{tpu_custom_call.1} parent=1 // pred_check_branch
      %72 = sbr.rel (0) target = $region29
    $region28: #{tpu_custom_call.1} parent=1 // pred_region
      %s74 = ssub.s32 512, 512
      %75 = vsyncadd [#allocation9], %s74
      %s76 = sshll.u32 [#allocation10], 4
      %s77 = int_to_ptr.vmem [resolvable:$true] %s76
      %82 = dma.hbm_to_vmem [thread:$0]  %s6, 512, %s77, [#allocation9], 128, 128, 8
    $region29: #{tpu_custom_call.1} parent=1 // pred_fallthru
      _
    // Predicated region
    $region30: #{tpu_custom_call.1} parent=1 // pred_check
      _
    $region31: #{tpu_custom_call.1} parent=1 // pred_check_branch
      %84 = sbr.rel (0) target = $region33
    $region32: #{tpu_custom_call.1} parent=1 // pred_region
      _
    $region33: #{tpu_custom_call.1} parent=1 // pred_fallthru
      _
    // Predicated region
    $region34: #{tpu_custom_call.1} parent=1 // pred_check
      _
    $region35: #{tpu_custom_call.1} parent=1 // pred_check_branch
      %86 = sbr.rel (0) target = $region37
    $region36: #{tpu_custom_call.1} parent=1 // pred_region
      _
    $region37: #{tpu_custom_call.1} parent=1 // pred_fallthru
      _
    // Predicated region
    $region38: #{tpu_custom_call.1} parent=1 // pred_check
      _
    $region39: #{tpu_custom_call.1} parent=1 // pred_check_branch
      %88 = sbr.rel (0) target = $region41
    $region40: #{tpu_custom_call.1} parent=1 // pred_region
      _
    $region41: #{tpu_custom_call.1} parent=1 // pred_fallthru
      _
    // Predicated region
    $region42: #{tpu_custom_call.1} parent=1 // pred_check
      _
    $region43: #{tpu_custom_call.1} parent=1 // pred_check_branch
      %90 = sbr.rel (0) target = $region45
    $region44: #{tpu_custom_call.1} parent=1 // pred_region
      %91 = dma.done [#allocation3], 256
    $region45: #{tpu_custom_call.1} parent=1 // pred_fallthru
      _
    // Predicated region
    $region46: #{tpu_custom_call.1} parent=1 // pred_check
      _
    $region47: #{tpu_custom_call.1} parent=1 // pred_check_branch
      %93 = sbr.rel (0) target = $region49
    $region48: #{tpu_custom_call.1} parent=1 // pred_region
      %94 = dma.done [#allocation6], 256
    $region49: #{tpu_custom_call.1} parent=1 // pred_fallthru
      _
    // Predicated region
    $region50: #{tpu_custom_call.1} parent=1 // pred_check
      _
    $region51: #{tpu_custom_call.1} parent=1 // pred_check_branch
      %96 = sbr.rel (0) target = $region53
    $region52: #{tpu_custom_call.1} parent=1 // pred_region
      %97 = dma.done [#allocation6], 512
    $region53: #{tpu_custom_call.1} parent=1 // pred_fallthru
      _
    // Predicated region
    $region54: #{tpu_custom_call.1} parent=1 // pred_check
      _
    $region55: #{tpu_custom_call.1} parent=1 // pred_check_branch
      %99 = sbr.rel (0) target = $region57
    $region56: #{tpu_custom_call.1} parent=1 // pred_region
      %100 = dma.done [#allocation9], 512
    $region57: #{tpu_custom_call.1} parent=1 // pred_fallthru
      _
    // Predicated region
    $region58: #{tpu_custom_call.1} parent=1 // pred_check
      _
    $region59: #{tpu_custom_call.1} parent=1 // pred_check_branch
      %102 = sbr.rel (0) target = $region61
    $region60: #{tpu_custom_call.1} parent=1 // pred_region
      %103 = dma.done [#allocation9], 512
    $region61: #{tpu_custom_call.1} parent=1 // pred_fallthru
      _
    %v104 = vld [vmem:[#allocation2] sm:$0xff]
    %v105 = vld [vmem:[#allocation2 + $0x8] sm:$0xff]
    %v106 = vld [vmem:[#allocation5] sm:$0xff]
    %v107 = vld [vmem:[#allocation5 + $0x8] sm:$0xff]
    %v108 = vadd.f32 %v104, %v106
    %v109 = vadd.f32 %v105, %v107
    %v110 = vld [vmem:[#allocation7] sm:$0xff]
    %v111 = vld [vmem:[#allocation7 + $0x8] sm:$0xff]
    %v112 = vld [vmem:[#allocation7 + $0x10] sm:$0xff]
    %v113 = vld [vmem:[#allocation7 + $0x18] sm:$0xff]
    %v114 = vld [vmem:[%s3] sm:$0x1]
    %v116 = vlaneseq
    %v117 = vshrl.u32 %v116, 7
    %v118 = vsub.s32 0, %v117
    %v119 = vrot.slane %v114, %v118
    %vm121 = vcmask 261120
    %v123 = vsel %vm121, %v108, 0
    %v126 = vsel %vm121, %v109, 0
    %128 = vmatprep.subr.mxu0 0.0
    %129 = vmatpush1.msra.mxu0 %v110
    %130 = vmatprep.subr.mxu0 0.0
    %131 = vmatpush1.msra.mxu0 %v111
    %132 = vmatprep.subr.mxu0 0.0
    %133 = vmatpush1.msra.mxu0 %v112
    %134 = vmatprep.subr.mxu0 0.0
    %135 = vmatpush1.msra.mxu0 %v113
    %136 = vmatprep.subr.mxu0 0.0
    %137 = vmatpush1.msra.mxu0 0.0
    %138 = vmatprep.subr.mxu0 0.0
    %139 = vmatpush1.msra.mxu0 0.0
    %140 = vmatprep.subr.mxu0 0.0
    %141 = vmatpush1.msra.mxu0 0.0
    %142 = vmatprep.subr.mxu0 0.0
    %143 = vmatpush1.msra.mxu0 0.0
    %144 = vmatprep.subr.mxu0 0.0
    %145 = vmatpush1.msra.mxu0 0.0
    %146 = vmatprep.subr.mxu0 0.0
    %147 = vmatpush1.msra.mxu0 0.0
    %148 = vmatprep.subr.mxu0 0.0
    %149 = vmatpush1.msra.mxu0 0.0
    %150 = vmatprep.subr.mxu0 0.0
    %151 = vmatpush1.msra.mxu0 0.0
    %152 = vmatprep.subr.mxu0 0.0
    %153 = vmatpush1.msra.mxu0 0.0
    %154 = vmatprep.subr.mxu0 0.0
    %155 = vmatpush1.msra.mxu0 0.0
    %156 = vmatprep.subr.mxu0 0.0
    %157 = vmatpush1.msra.mxu0 0.0
    %158 = vmatprep.subr.mxu0 0.0
    %159 = vmatpush1.msra.mxu0 0.0
    %160 = vmatprep.subr.mxu0 0.0
    %161 = vmatpush1.msra.mxu0 0.0
    %162 = vmatprep.subr.mxu0 0.0
    %163 = vmatpush1.msra.mxu0 0.0
    %164 = vmatprep.subr.mxu0 0.0
    %165 = vmatpush1.msra.mxu0 0.0
    %166 = vmatprep.subr.mxu0 0.0
    %167 = vmatpush1.msra.mxu0 0.0
    %168 = vmatprep.subr.mxu0 0.0
    %169 = vmatpush1.msra.mxu0 0.0
    %170 = vmatprep.subr.mxu0 0.0
    %171 = vmatpush1.msra.mxu0 0.0
    %172 = vmatprep.subr.mxu0 0.0
    %173 = vmatpush1.msra.mxu0 0.0
    %174 = vmatprep.subr.mxu0 0.0
    %175 = vmatpush1.msra.mxu0 0.0
    %176 = vmatprep.subr.mxu0 0.0
    %177 = vmatpush1.msra.mxu0 0.0
    %178 = vmatprep.subr.mxu0 0.0
    %179 = vmatpush1.msra.mxu0 0.0
    %180 = vmatprep.subr.mxu0 0.0
    %181 = vmatpush1.msra.mxu0 0.0
    %182 = vmatprep.subr.mxu0 0.0
    %183 = vmatpush1.msra.mxu0 0.0
    %184 = vmatprep.subr.mxu0 0.0
    %185 = vmatpush1.msra.mxu0 0.0
    %186 = vmatprep.subr.mxu0 0.0
    %187 = vmatpush1.msra.mxu0 0.0
    %188 = vmatprep.subr.mxu0 0.0
    %189 = vmatpush1.msra.mxu0 0.0
    %190 = vmatprep.subr.mxu0 0.0
    %191 = vmatpush1.msra.mxu0 0.0
    %192 = vmatprep.mubr.f32.mxu0 0.0
    %193 = vmatmul.mubr.f32.gmra.mrb[0].mxu0 %v123
    %v194 = vpop.f32.mrb[0].mxu0
    %v195 = vadd.f32 %v119, %v194
    %v196 = vpop.f32.mrb[0].mxu0
    %197 = vmatprep.mubr.f32.mxu0 0.0
    %198 = vmatmul.mubr.f32.gmra.mrb[0].mxu0 %v126
    %v199 = vpop.f32.mrb[0].mxu0
    %v200 = vadd.f32 %v119, %v199
    %v201 = vpop.f32.mrb[0].mxu0
    %202 = vdwg.mxu0
    %v203 = vld [vmem:[#allocation8] sm:$0xff]
    %v204 = vld [vmem:[#allocation8 + $0x8] sm:$0xff]
    %v205 = vld [vmem:[#allocation8 + $0x10] sm:$0xff]
    %v206 = vld [vmem:[#allocation8 + $0x18] sm:$0xff]
    %v207 = vld [vmem:[%s5] sm:$0x1]
    %v209 = vlaneseq
    %v210 = vshrl.u32 %v209, 7
    %v211 = vsub.s32 0, %v210
    %v212 = vrot.slane %v207, %v211
    %v215 = vsel %vm121, %v104, 0
    %v218 = vsel %vm121, %v105, 0
    %220 = vmatprep.subr.mxu0 0.0
    %221 = vmatpush1.msra.mxu0 %v203
    %222 = vmatprep.subr.mxu0 0.0
    %223 = vmatpush1.msra.mxu0 %v204
    %224 = vmatprep.subr.mxu0 0.0
    %225 = vmatpush1.msra.mxu0 %v205
    %226 = vmatprep.subr.mxu0 0.0
    %227 = vmatpush1.msra.mxu0 %v206
    %228 = vmatprep.subr.mxu0 0.0
    %229 = vmatpush1.msra.mxu0 0.0
    %230 = vmatprep.subr.mxu0 0.0
    %231 = vmatpush1.msra.mxu0 0.0
    %232 = vmatprep.subr.mxu0 0.0
    %233 = vmatpush1.msra.mxu0 0.0
    %234 = vmatprep.subr.mxu0 0.0
    %235 = vmatpush1.msra.mxu0 0.0
    %236 = vmatprep.subr.mxu0 0.0
    %237 = vmatpush1.msra.mxu0 0.0
    %238 = vmatprep.subr.mxu0 0.0
    %239 = vmatpush1.msra.mxu0 0.0
    %240 = vmatprep.subr.mxu0 0.0
    %241 = vmatpush1.msra.mxu0 0.0
    %242 = vmatprep.subr.mxu0 0.0
    %243 = vmatpush1.msra.mxu0 0.0
    %244 = vmatprep.subr.mxu0 0.0
    %245 = vmatpush1.msra.mxu0 0.0
    %246 = vmatprep.subr.mxu0 0.0
    %247 = vmatpush1.msra.mxu0 0.0
    %248 = vmatprep.subr.mxu0 0.0
    %249 = vmatpush1.msra.mxu0 0.0
    %250 = vmatprep.subr.mxu0 0.0
    %251 = vmatpush1.msra.mxu0 0.0
    %252 = vmatprep.subr.mxu0 0.0
    %253 = vmatpush1.msra.mxu0 0.0
    %254 = vmatprep.subr.mxu0 0.0
    %255 = vmatpush1.msra.mxu0 0.0
    %256 = vmatprep.subr.mxu0 0.0
    %257 = vmatpush1.msra.mxu0 0.0
    %258 = vmatprep.subr.mxu0 0.0
    %259 = vmatpush1.msra.mxu0 0.0
    %260 = vmatprep.subr.mxu0 0.0
    %261 = vmatpush1.msra.mxu0 0.0
    %262 = vmatprep.subr.mxu0 0.0
    %263 = vmatpush1.msra.mxu0 0.0
    %264 = vmatprep.subr.mxu0 0.0
    %265 = vmatpush1.msra.mxu0 0.0
    %266 = vmatprep.subr.mxu0 0.0
    %267 = vmatpush1.msra.mxu0 0.0
    %268 = vmatprep.subr.mxu0 0.0
    %269 = vmatpush1.msra.mxu0 0.0
    %270 = vmatprep.subr.mxu0 0.0
    %271 = vmatpush1.msra.mxu0 0.0
    %272 = vmatprep.subr.mxu0 0.0
    %273 = vmatpush1.msra.mxu0 0.0
    %274 = vmatprep.subr.mxu0 0.0
    %275 = vmatpush1.msra.mxu0 0.0
    %276 = vmatprep.subr.mxu0 0.0
    %277 = vmatpush1.msra.mxu0 0.0
    %278 = vmatprep.subr.mxu0 0.0
    %279 = vmatpush1.msra.mxu0 0.0
    %280 = vmatprep.subr.mxu0 0.0
    %281 = vmatpush1.msra.mxu0 0.0
    %282 = vmatprep.subr.mxu0 0.0
    %283 = vmatpush1.msra.mxu0 0.0
    %284 = vmatprep.mubr.f32.mxu0 0.0
    %285 = vmatmul.mubr.f32.gmra.mrb[0].mxu0 %v215
    %v286 = vpop.f32.mrb[0].mxu0
    %v287 = vadd.f32 %v212, %v286
    %v288 = vpop.f32.mrb[0].mxu0
    %289 = vmatprep.mubr.f32.mxu0 0.0
    %290 = vmatmul.mubr.f32.gmra.mrb[0].mxu0 %v218
    %v291 = vpop.f32.mrb[0].mxu0
    %v292 = vadd.f32 %v212, %v291
    %v293 = vpop.f32.mrb[0].mxu0
    %294 = vdwg.mxu0
    %297 = vrot.lane.b32.xlu0 %v195, 120
    %v298 = vpop.permute.xlu0 %297
    %299 = vrot.lane.b32.xlu0 %v200, 120
    %v300 = vpop.permute.xlu0 %299
    %303 = vrot.lane.b32.xlu0 %v195, 112
    %v304 = vpop.permute.xlu0 %303
    %305 = vrot.lane.b32.xlu0 %v200, 112
    %v306 = vpop.permute.xlu0 %305
    %309 = vrot.lane.b32.xlu0 %v195, 104
    %v310 = vpop.permute.xlu0 %309
    %311 = vrot.lane.b32.xlu0 %v200, 104
    %v312 = vpop.permute.xlu0 %311
    %v315 = vcombine.low %v195, %v304
    %v316 = vcombine.high %v195, %v304
    %v318 = vunpack.c.l.s4 1983009808
    %v319 = vunpack.c.0.s8 %v318
    %v320 = vlaneseq
    %v321 = vshrl.u32 %v320, 7
    %v322 = vsub.s32 %v319, %v321
    %v323 = vrot.slane %v315, %v322
    %v325 = vunpack.c.l.s4 1983009808
    %v326 = vunpack.c.0.s8 %v325
    %v327 = vlaneseq
    %v328 = vshrl.u32 %v327, 7
    %v329 = vsub.s32 %v326, %v328
    %v330 = vrot.slane %v316, %v329
    %v331 = vcombine.low %v298, %v310
    %v332 = vcombine.high %v298, %v310
    %v334 = vunpack.c.l.s4 1983009808
    %v335 = vunpack.c.0.s8 %v334
    %v336 = vlaneseq
    %v337 = vshrl.u32 %v336, 7
    %v338 = vsub.s32 %v335, %v337
    %v339 = vrot.slane %v331, %v338
    %v341 = vunpack.c.l.s4 1983009808
    %v342 = vunpack.c.0.s8 %v341
    %v343 = vlaneseq
    %v344 = vshrl.u32 %v343, 7
    %v345 = vsub.s32 %v342, %v344
    %v346 = vrot.slane %v332, %v345
    %v347 = vcombine.low %v323, %v339
    %v348 = vcombine.high %v323, %v339
    %v350 = vunpack.c.l.s4 1934713408
    %v351 = vunpack.c.0.s8 %v350
    %v352 = vlaneseq
    %v353 = vshrl.u32 %v352, 7
    %v354 = vsub.s32 %v351, %v353
    %v355 = vrot.slane %v347, %v354
    %v357 = vunpack.c.l.s4 1934713408
    %v358 = vunpack.c.0.s8 %v357
    %v359 = vlaneseq
    %v360 = vshrl.u32 %v359, 7
    %v361 = vsub.s32 %v358, %v360
    %v362 = vrot.slane %v348, %v361
    %v363 = vcombine.low %v330, %v346
    %v364 = vcombine.high %v330, %v346
    %v366 = vunpack.c.l.s4 1934713408
    %v367 = vunpack.c.0.s8 %v366
    %v368 = vlaneseq
    %v369 = vshrl.u32 %v368, 7
    %v370 = vsub.s32 %v367, %v369
    %v371 = vrot.slane %v363, %v370
    %v373 = vunpack.c.l.s4 1934713408
    %v374 = vunpack.c.0.s8 %v373
    %v375 = vlaneseq
    %v376 = vshrl.u32 %v375, 7
    %v377 = vsub.s32 %v374, %v376
    %v378 = vrot.slane %v364, %v377
    %v379 = vcombine.high %v355, 0.0
    %v380 = vcombine.high %v362, 0.0
    %v381 = vcombine.high %v371, 0.0
    %v382 = vcombine.high %v378, 0.0
    %v383 = vcombine.low %v200, %v306
    %v384 = vcombine.high %v200, %v306
    %v386 = vunpack.c.l.s4 1983009808
    %v387 = vunpack.c.0.s8 %v386
    %v388 = vlaneseq
    %v389 = vshrl.u32 %v388, 7
    %v390 = vsub.s32 %v387, %v389
    %v391 = vrot.slane %v383, %v390
    %v393 = vunpack.c.l.s4 1983009808
    %v394 = vunpack.c.0.s8 %v393
    %v395 = vlaneseq
    %v396 = vshrl.u32 %v395, 7
    %v397 = vsub.s32 %v394, %v396
    %v398 = vrot.slane %v384, %v397
    %v399 = vcombine.low %v300, %v312
    %v400 = vcombine.high %v300, %v312
    %v402 = vunpack.c.l.s4 1983009808
    %v403 = vunpack.c.0.s8 %v402
    %v404 = vlaneseq
    %v405 = vshrl.u32 %v404, 7
    %v406 = vsub.s32 %v403, %v405
    %v407 = vrot.slane %v399, %v406
    %v409 = vunpack.c.l.s4 1983009808
    %v410 = vunpack.c.0.s8 %v409
    %v411 = vlaneseq
    %v412 = vshrl.u32 %v411, 7
    %v413 = vsub.s32 %v410, %v412
    %v414 = vrot.slane %v400, %v413
    %v415 = vcombine.low %v391, %v407
    %v416 = vcombine.high %v391, %v407
    %v418 = vunpack.c.l.s4 1934713408
    %v419 = vunpack.c.0.s8 %v418
    %v420 = vlaneseq
    %v421 = vshrl.u32 %v420, 7
    %v422 = vsub.s32 %v419, %v421
    %v423 = vrot.slane %v415, %v422
    %v425 = vunpack.c.l.s4 1934713408
    %v426 = vunpack.c.0.s8 %v425
    %v427 = vlaneseq
    %v428 = vshrl.u32 %v427, 7
    %v429 = vsub.s32 %v426, %v428
    %v430 = vrot.slane %v416, %v429
    %v431 = vcombine.low %v398, %v414
    %v432 = vcombine.high %v398, %v414
    %v434 = vunpack.c.l.s4 1934713408
    %v435 = vunpack.c.0.s8 %v434
    %v436 = vlaneseq
    %v437 = vshrl.u32 %v436, 7
    %v438 = vsub.s32 %v435, %v437
    %v439 = vrot.slane %v431, %v438
    %v441 = vunpack.c.l.s4 1934713408
    %v442 = vunpack.c.0.s8 %v441
    %v443 = vlaneseq
    %v444 = vshrl.u32 %v443, 7
    %v445 = vsub.s32 %v442, %v444
    %v446 = vrot.slane %v432, %v445
    %v447 = vcombine.high %v423, 0.0
    %v448 = vcombine.high %v430, 0.0
    %v449 = vcombine.high %v439, 0.0
    %v450 = vcombine.high %v446, 0.0
    %v451 = vcombine.low %v355, %v362
    %v453 = vunpack.c.l.s4 1983009808
    %v454 = vunpack.c.0.s8 %v453
    %v455 = vlaneseq
    %v456 = vshrl.u32 %v455, 7
    %v457 = vsub.s32 %v454, %v456
    %v458 = vrot.slane %v451, %v457
    %v459 = vcombine.low %v379, %v380
    %v461 = vunpack.c.l.s4 1983009808
    %v462 = vunpack.c.0.s8 %v461
    %v463 = vlaneseq
    %v464 = vshrl.u32 %v463, 7
    %v465 = vsub.s32 %v462, %v464
    %v466 = vrot.slane %v459, %v465
    %v467 = vcombine.low %v371, %v378
    %v469 = vunpack.c.l.s4 1983009808
    %v470 = vunpack.c.0.s8 %v469
    %v471 = vlaneseq
    %v472 = vshrl.u32 %v471, 7
    %v473 = vsub.s32 %v470, %v472
    %v474 = vrot.slane %v467, %v473
    %v475 = vcombine.low %v381, %v382
    %v477 = vunpack.c.l.s4 1983009808
    %v478 = vunpack.c.0.s8 %v477
    %v479 = vlaneseq
    %v480 = vshrl.u32 %v479, 7
    %v481 = vsub.s32 %v478, %v480
    %v482 = vrot.slane %v475, %v481
    %v483 = vcombine.low %v458, %v466
    %v484 = vcombine.high %v458, %v466
    %v486 = vunpack.c.l.s4 1934713408
    %v487 = vunpack.c.0.s8 %v486
    %v488 = vlaneseq
    %v489 = vshrl.u32 %v488, 7
    %v490 = vsub.s32 %v487, %v489
    %v491 = vrot.slane %v483, %v490
    %v493 = vunpack.c.l.s4 1934713408
    %v494 = vunpack.c.0.s8 %v493
    %v495 = vlaneseq
    %v496 = vshrl.u32 %v495, 7
    %v497 = vsub.s32 %v494, %v496
    %v498 = vrot.slane %v484, %v497
    %v499 = vcombine.low %v474, %v482
    %v500 = vcombine.high %v474, %v482
    %v502 = vunpack.c.l.s4 1934713408
    %v503 = vunpack.c.0.s8 %v502
    %v504 = vlaneseq
    %v505 = vshrl.u32 %v504, 7
    %v506 = vsub.s32 %v503, %v505
    %v507 = vrot.slane %v499, %v506
    %v509 = vunpack.c.l.s4 1934713408
    %v510 = vunpack.c.0.s8 %v509
    %v511 = vlaneseq
    %v512 = vshrl.u32 %v511, 7
    %v513 = vsub.s32 %v510, %v512
    %v514 = vrot.slane %v500, %v513
    %v515 = vcombine.low %v491, %v507
    %v516 = vcombine.high %v491, %v507
    %v517 = vcombine.low %v498, %v514
    %v518 = vcombine.high %v498, %v514
    %v519 = vcombine.low %v423, %v430
    %v521 = vunpack.c.l.s4 1983009808
    %v522 = vunpack.c.0.s8 %v521
    %v523 = vlaneseq
    %v524 = vshrl.u32 %v523, 7
    %v525 = vsub.s32 %v522, %v524
    %v526 = vrot.slane %v519, %v525
    %v527 = vcombine.low %v447, %v448
    %v529 = vunpack.c.l.s4 1983009808
    %v530 = vunpack.c.0.s8 %v529
    %v531 = vlaneseq
    %v532 = vshrl.u32 %v531, 7
    %v533 = vsub.s32 %v530, %v532
    %v534 = vrot.slane %v527, %v533
    %v535 = vcombine.low %v439, %v446
    %v537 = vunpack.c.l.s4 1983009808
    %v538 = vunpack.c.0.s8 %v537
    %v539 = vlaneseq
    %v540 = vshrl.u32 %v539, 7
    %v541 = vsub.s32 %v538, %v540
    %v542 = vrot.slane %v535, %v541
    %v543 = vcombine.low %v449, %v450
    %v545 = vunpack.c.l.s4 1983009808
    %v546 = vunpack.c.0.s8 %v545
    %v547 = vlaneseq
    %v548 = vshrl.u32 %v547, 7
    %v549 = vsub.s32 %v546, %v548
    %v550 = vrot.slane %v543, %v549
    %v551 = vcombine.low %v526, %v534
    %v552 = vcombine.high %v526, %v534
    %v554 = vunpack.c.l.s4 1934713408
    %v555 = vunpack.c.0.s8 %v554
    %v556 = vlaneseq
    %v557 = vshrl.u32 %v556, 7
    %v558 = vsub.s32 %v555, %v557
    %v559 = vrot.slane %v551, %v558
    %v561 = vunpack.c.l.s4 1934713408
    %v562 = vunpack.c.0.s8 %v561
    %v563 = vlaneseq
    %v564 = vshrl.u32 %v563, 7
    %v565 = vsub.s32 %v562, %v564
    %v566 = vrot.slane %v552, %v565
    %v567 = vcombine.low %v542, %v550
    %v568 = vcombine.high %v542, %v550
    %v570 = vunpack.c.l.s4 1934713408
    %v571 = vunpack.c.0.s8 %v570
    %v572 = vlaneseq
    %v573 = vshrl.u32 %v572, 7
    %v574 = vsub.s32 %v571, %v573
    %v575 = vrot.slane %v567, %v574
    %v577 = vunpack.c.l.s4 1934713408
    %v578 = vunpack.c.0.s8 %v577
    %v579 = vlaneseq
    %v580 = vshrl.u32 %v579, 7
    %v581 = vsub.s32 %v578, %v580
    %v582 = vrot.slane %v568, %v581
    %v583 = vcombine.low %v559, %v575
    %v584 = vcombine.high %v559, %v575
    %v585 = vcombine.low %v566, %v582
    %v586 = vcombine.high %v566, %v582
    %587 = vrot.lane.b32.xlu0 %v195, 96
    %v588 = vpop.permute.xlu0 %587
    %589 = vrot.lane.b32.xlu0 %v200, 96
    %v590 = vpop.permute.xlu0 %589
    %591 = vrot.lane.b32.xlu0 %v298, 96
    %v592 = vpop.permute.xlu0 %591
    %593 = vrot.lane.b32.xlu0 %v300, 96
    %v594 = vpop.permute.xlu0 %593
    %595 = vrot.lane.b32.xlu0 %v304, 96
    %v596 = vpop.permute.xlu0 %595
    %597 = vrot.lane.b32.xlu0 %v306, 96
    %v598 = vpop.permute.xlu0 %597
    %599 = vrot.lane.b32.xlu0 %v310, 96
    %v600 = vpop.permute.xlu0 %599
    %601 = vrot.lane.b32.xlu0 %v312, 96
    %v602 = vpop.permute.xlu0 %601
    %v611 = vcombine.low %v588, %v596
    %v612 = vcombine.high %v588, %v596
    %v614 = vunpack.c.l.s4 1983009808
    %v615 = vunpack.c.0.s8 %v614
    %v616 = vlaneseq
    %v617 = vshrl.u32 %v616, 7
    %v618 = vsub.s32 %v615, %v617
    %v619 = vrot.slane %v611, %v618
    %v621 = vunpack.c.l.s4 1983009808
    %v622 = vunpack.c.0.s8 %v621
    %v623 = vlaneseq
    %v624 = vshrl.u32 %v623, 7
    %v625 = vsub.s32 %v622, %v624
    %v626 = vrot.slane %v612, %v625
    %v627 = vcombine.low %v592, %v600
    %v628 = vcombine.high %v592, %v600
    %v630 = vunpack.c.l.s4 1983009808
    %v631 = vunpack.c.0.s8 %v630
    %v632 = vlaneseq
    %v633 = vshrl.u32 %v632, 7
    %v634 = vsub.s32 %v631, %v633
    %v635 = vrot.slane %v627, %v634
    %v637 = vunpack.c.l.s4 1983009808
    %v638 = vunpack.c.0.s8 %v637
    %v639 = vlaneseq
    %v640 = vshrl.u32 %v639, 7
    %v641 = vsub.s32 %v638, %v640
    %v642 = vrot.slane %v628, %v641
    %v643 = vcombine.low %v619, %v635
    %v644 = vcombine.high %v619, %v635
    %v646 = vunpack.c.l.s4 1934713408
    %v647 = vunpack.c.0.s8 %v646
    %v648 = vlaneseq
    %v649 = vshrl.u32 %v648, 7
    %v650 = vsub.s32 %v647, %v649
    %v651 = vrot.slane %v643, %v650
    %v653 = vunpack.c.l.s4 1934713408
    %v654 = vunpack.c.0.s8 %v653
    %v655 = vlaneseq
    %v656 = vshrl.u32 %v655, 7
    %v657 = vsub.s32 %v654, %v656
    %v658 = vrot.slane %v644, %v657
    %v659 = vcombine.low %v626, %v642
    %v660 = vcombine.high %v626, %v642
    %v662 = vunpack.c.l.s4 1934713408
    %v663 = vunpack.c.0.s8 %v662
    %v664 = vlaneseq
    %v665 = vshrl.u32 %v664, 7
    %v666 = vsub.s32 %v663, %v665
    %v667 = vrot.slane %v659, %v666
    %v669 = vunpack.c.l.s4 1934713408
    %v670 = vunpack.c.0.s8 %v669
    %v671 = vlaneseq
    %v672 = vshrl.u32 %v671, 7
    %v673 = vsub.s32 %v670, %v672
    %v674 = vrot.slane %v660, %v673
    %v675 = vcombine.high %v651, 0.0
    %v676 = vcombine.high %v658, 0.0
    %v677 = vcombine.high %v667, 0.0
    %v678 = vcombine.high %v674, 0.0
    %v679 = vcombine.low %v590, %v598
    %v680 = vcombine.high %v590, %v598
    %v682 = vunpack.c.l.s4 1983009808
    %v683 = vunpack.c.0.s8 %v682
    %v684 = vlaneseq
    %v685 = vshrl.u32 %v684, 7
    %v686 = vsub.s32 %v683, %v685
    %v687 = vrot.slane %v679, %v686
    %v689 = vunpack.c.l.s4 1983009808
    %v690 = vunpack.c.0.s8 %v689
    %v691 = vlaneseq
    %v692 = vshrl.u32 %v691, 7
    %v693 = vsub.s32 %v690, %v692
    %v694 = vrot.slane %v680, %v693
    %v695 = vcombine.low %v594, %v602
    %v696 = vcombine.high %v594, %v602
    %v698 = vunpack.c.l.s4 1983009808
    %v699 = vunpack.c.0.s8 %v698
    %v700 = vlaneseq
    %v701 = vshrl.u32 %v700, 7
    %v702 = vsub.s32 %v699, %v701
    %v703 = vrot.slane %v695, %v702
    %v705 = vunpack.c.l.s4 1983009808
    %v706 = vunpack.c.0.s8 %v705
    %v707 = vlaneseq
    %v708 = vshrl.u32 %v707, 7
    %v709 = vsub.s32 %v706, %v708
    %v710 = vrot.slane %v696, %v709
    %v711 = vcombine.low %v687, %v703
    %v712 = vcombine.high %v687, %v703
    %v714 = vunpack.c.l.s4 1934713408
    %v715 = vunpack.c.0.s8 %v714
    %v716 = vlaneseq
    %v717 = vshrl.u32 %v716, 7
    %v718 = vsub.s32 %v715, %v717
    %v719 = vrot.slane %v711, %v718
    %v721 = vunpack.c.l.s4 1934713408
    %v722 = vunpack.c.0.s8 %v721
    %v723 = vlaneseq
    %v724 = vshrl.u32 %v723, 7
    %v725 = vsub.s32 %v722, %v724
    %v726 = vrot.slane %v712, %v725
    %v727 = vcombine.low %v694, %v710
    %v728 = vcombine.high %v694, %v710
    %v730 = vunpack.c.l.s4 1934713408
    %v731 = vunpack.c.0.s8 %v730
    %v732 = vlaneseq
    %v733 = vshrl.u32 %v732, 7
    %v734 = vsub.s32 %v731, %v733
    %v735 = vrot.slane %v727, %v734
    %v737 = vunpack.c.l.s4 1934713408
    %v738 = vunpack.c.0.s8 %v737
    %v739 = vlaneseq
    %v740 = vshrl.u32 %v739, 7
    %v741 = vsub.s32 %v738, %v740
    %v742 = vrot.slane %v728, %v741
    %v743 = vcombine.high %v719, 0.0
    %v744 = vcombine.high %v726, 0.0
    %v745 = vcombine.high %v735, 0.0
    %v746 = vcombine.high %v742, 0.0
    %v747 = vcombine.low %v651, %v658
    %v749 = vunpack.c.l.s4 1983009808
    %v750 = vunpack.c.0.s8 %v749
    %v751 = vlaneseq
    %v752 = vshrl.u32 %v751, 7
    %v753 = vsub.s32 %v750, %v752
    %v754 = vrot.slane %v747, %v753
    %v755 = vcombine.low %v675, %v676
    %v757 = vunpack.c.l.s4 1983009808
    %v758 = vunpack.c.0.s8 %v757
    %v759 = vlaneseq
    %v760 = vshrl.u32 %v759, 7
    %v761 = vsub.s32 %v758, %v760
    %v762 = vrot.slane %v755, %v761
    %v763 = vcombine.low %v667, %v674
    %v765 = vunpack.c.l.s4 1983009808
    %v766 = vunpack.c.0.s8 %v765
    %v767 = vlaneseq
    %v768 = vshrl.u32 %v767, 7
    %v769 = vsub.s32 %v766, %v768
    %v770 = vrot.slane %v763, %v769
    %v771 = vcombine.low %v677, %v678
    %v773 = vunpack.c.l.s4 1983009808
    %v774 = vunpack.c.0.s8 %v773
    %v775 = vlaneseq
    %v776 = vshrl.u32 %v775, 7
    %v777 = vsub.s32 %v774, %v776
    %v778 = vrot.slane %v771, %v777
    %v779 = vcombine.low %v754, %v762
    %v780 = vcombine.high %v754, %v762
    %v782 = vunpack.c.l.s4 1934713408
    %v783 = vunpack.c.0.s8 %v782
    %v784 = vlaneseq
    %v785 = vshrl.u32 %v784, 7
    %v786 = vsub.s32 %v783, %v785
    %v787 = vrot.slane %v779, %v786
    %v789 = vunpack.c.l.s4 1934713408
    %v790 = vunpack.c.0.s8 %v789
    %v791 = vlaneseq
    %v792 = vshrl.u32 %v791, 7
    %v793 = vsub.s32 %v790, %v792
    %v794 = vrot.slane %v780, %v793
    %v795 = vcombine.low %v770, %v778
    %v796 = vcombine.high %v770, %v778
    %v798 = vunpack.c.l.s4 1934713408
    %v799 = vunpack.c.0.s8 %v798
    %v800 = vlaneseq
    %v801 = vshrl.u32 %v800, 7
    %v802 = vsub.s32 %v799, %v801
    %v803 = vrot.slane %v795, %v802
    %v805 = vunpack.c.l.s4 1934713408
    %v806 = vunpack.c.0.s8 %v805
    %v807 = vlaneseq
    %v808 = vshrl.u32 %v807, 7
    %v809 = vsub.s32 %v806, %v808
    %v810 = vrot.slane %v796, %v809
    %v811 = vcombine.low %v787, %v803
    %v812 = vcombine.high %v787, %v803
    %v813 = vcombine.low %v794, %v810
    %v814 = vcombine.high %v794, %v810
    %v815 = vcombine.low %v719, %v726
    %v817 = vunpack.c.l.s4 1983009808
    %v818 = vunpack.c.0.s8 %v817
    %v819 = vlaneseq
    %v820 = vshrl.u32 %v819, 7
    %v821 = vsub.s32 %v818, %v820
    %v822 = vrot.slane %v815, %v821
    %v823 = vcombine.low %v743, %v744
    %v825 = vunpack.c.l.s4 1983009808
    %v826 = vunpack.c.0.s8 %v825
    %v827 = vlaneseq
    %v828 = vshrl.u32 %v827, 7
    %v829 = vsub.s32 %v826, %v828
    %v830 = vrot.slane %v823, %v829
    %v831 = vcombine.low %v735, %v742
    %v833 = vunpack.c.l.s4 1983009808
    %v834 = vunpack.c.0.s8 %v833
    %v835 = vlaneseq
    %v836 = vshrl.u32 %v835, 7
    %v837 = vsub.s32 %v834, %v836
    %v838 = vrot.slane %v831, %v837
    %v839 = vcombine.low %v745, %v746
    %v841 = vunpack.c.l.s4 1983009808
    %v842 = vunpack.c.0.s8 %v841
    %v843 = vlaneseq
    %v844 = vshrl.u32 %v843, 7
    %v845 = vsub.s32 %v842, %v844
    %v846 = vrot.slane %v839, %v845
    %v847 = vcombine.low %v822, %v830
    %v848 = vcombine.high %v822, %v830
    %v850 = vunpack.c.l.s4 1934713408
    %v851 = vunpack.c.0.s8 %v850
    %v852 = vlaneseq
    %v853 = vshrl.u32 %v852, 7
    %v854 = vsub.s32 %v851, %v853
    %v855 = vrot.slane %v847, %v854
    %v857 = vunpack.c.l.s4 1934713408
    %v858 = vunpack.c.0.s8 %v857
    %v859 = vlaneseq
    %v860 = vshrl.u32 %v859, 7
    %v861 = vsub.s32 %v858, %v860
    %v862 = vrot.slane %v848, %v861
    %v863 = vcombine.low %v838, %v846
    %v864 = vcombine.high %v838, %v846
    %v866 = vunpack.c.l.s4 1934713408
    %v867 = vunpack.c.0.s8 %v866
    %v868 = vlaneseq
    %v869 = vshrl.u32 %v868, 7
    %v870 = vsub.s32 %v867, %v869
    %v871 = vrot.slane %v863, %v870
    %v873 = vunpack.c.l.s4 1934713408
    %v874 = vunpack.c.0.s8 %v873
    %v875 = vlaneseq
    %v876 = vshrl.u32 %v875, 7
    %v877 = vsub.s32 %v874, %v876
    %v878 = vrot.slane %v864, %v877
    %v879 = vcombine.low %v855, %v871
    %v880 = vcombine.high %v855, %v871
    %v881 = vcombine.low %v862, %v878
    %v882 = vcombine.high %v862, %v878
    %885 = vrot.lane.b32.xlu0 %v287, 120
    %v886 = vpop.permute.xlu0 %885
    %887 = vrot.lane.b32.xlu0 %v292, 120
    %v888 = vpop.permute.xlu0 %887
    %891 = vrot.lane.b32.xlu0 %v287, 112
    %v892 = vpop.permute.xlu0 %891
    %893 = vrot.lane.b32.xlu0 %v292, 112
    %v894 = vpop.permute.xlu0 %893
    %897 = vrot.lane.b32.xlu0 %v287, 104
    %v898 = vpop.permute.xlu0 %897
    %899 = vrot.lane.b32.xlu0 %v292, 104
    %v900 = vpop.permute.xlu0 %899
    %v903 = vcombine.low %v287, %v892
    %v904 = vcombine.high %v287, %v892
    %v906 = vunpack.c.l.s4 1983009808
    %v907 = vunpack.c.0.s8 %v906
    %v908 = vlaneseq
    %v909 = vshrl.u32 %v908, 7
    %v910 = vsub.s32 %v907, %v909
    %v911 = vrot.slane %v903, %v910
    %v913 = vunpack.c.l.s4 1983009808
    %v914 = vunpack.c.0.s8 %v913
    %v915 = vlaneseq
    %v916 = vshrl.u32 %v915, 7
    %v917 = vsub.s32 %v914, %v916
    %v918 = vrot.slane %v904, %v917
    %v919 = vcombine.low %v886, %v898
    %v920 = vcombine.high %v886, %v898
    %v922 = vunpack.c.l.s4 1983009808
    %v923 = vunpack.c.0.s8 %v922
    %v924 = vlaneseq
    %v925 = vshrl.u32 %v924, 7
    %v926 = vsub.s32 %v923, %v925
    %v927 = vrot.slane %v919, %v926
    %v929 = vunpack.c.l.s4 1983009808
    %v930 = vunpack.c.0.s8 %v929
    %v931 = vlaneseq
    %v932 = vshrl.u32 %v931, 7
    %v933 = vsub.s32 %v930, %v932
    %v934 = vrot.slane %v920, %v933
    %v935 = vcombine.low %v911, %v927
    %v936 = vcombine.high %v911, %v927
    %v938 = vunpack.c.l.s4 1934713408
    %v939 = vunpack.c.0.s8 %v938
    %v940 = vlaneseq
    %v941 = vshrl.u32 %v940, 7
    %v942 = vsub.s32 %v939, %v941
    %v943 = vrot.slane %v935, %v942
    %v945 = vunpack.c.l.s4 1934713408
    %v946 = vunpack.c.0.s8 %v945
    %v947 = vlaneseq
    %v948 = vshrl.u32 %v947, 7
    %v949 = vsub.s32 %v946, %v948
    %v950 = vrot.slane %v936, %v949
    %v951 = vcombine.low %v918, %v934
    %v952 = vcombine.high %v918, %v934
    %v954 = vunpack.c.l.s4 1934713408
    %v955 = vunpack.c.0.s8 %v954
    %v956 = vlaneseq
    %v957 = vshrl.u32 %v956, 7
    %v958 = vsub.s32 %v955, %v957
    %v959 = vrot.slane %v951, %v958
    %v961 = vunpack.c.l.s4 1934713408
    %v962 = vunpack.c.0.s8 %v961
    %v963 = vlaneseq
    %v964 = vshrl.u32 %v963, 7
    %v965 = vsub.s32 %v962, %v964
    %v966 = vrot.slane %v952, %v965
    %v967 = vcombine.high %v943, 0.0
    %v968 = vcombine.high %v950, 0.0
    %v969 = vcombine.high %v959, 0.0
    %v970 = vcombine.high %v966, 0.0
    %v971 = vcombine.low %v292, %v894
    %v972 = vcombine.high %v292, %v894
    %v974 = vunpack.c.l.s4 1983009808
    %v975 = vunpack.c.0.s8 %v974
    %v976 = vlaneseq
    %v977 = vshrl.u32 %v976, 7
    %v978 = vsub.s32 %v975, %v977
    %v979 = vrot.slane %v971, %v978
    %v981 = vunpack.c.l.s4 1983009808
    %v982 = vunpack.c.0.s8 %v981
    %v983 = vlaneseq
    %v984 = vshrl.u32 %v983, 7
    %v985 = vsub.s32 %v982, %v984
    %v986 = vrot.slane %v972, %v985
    %v987 = vcombine.low %v888, %v900
    %v988 = vcombine.high %v888, %v900
    %v990 = vunpack.c.l.s4 1983009808
    %v991 = vunpack.c.0.s8 %v990
    %v992 = vlaneseq
    %v993 = vshrl.u32 %v992, 7
    %v994 = vsub.s32 %v991, %v993
    %v995 = vrot.slane %v987, %v994
    %v997 = vunpack.c.l.s4 1983009808
    %v998 = vunpack.c.0.s8 %v997
    %v999 = vlaneseq
    %v1000 = vshrl.u32 %v999, 7
    %v1001 = vsub.s32 %v998, %v1000
    %v1002 = vrot.slane %v988, %v1001
    %v1003 = vcombine.low %v979, %v995
    %v1004 = vcombine.high %v979, %v995
    %v1006 = vunpack.c.l.s4 1934713408
    %v1007 = vunpack.c.0.s8 %v1006
    %v1008 = vlaneseq
    %v1009 = vshrl.u32 %v1008, 7
    %v1010 = vsub.s32 %v1007, %v1009
    %v1011 = vrot.slane %v1003, %v1010
    %v1013 = vunpack.c.l.s4 1934713408
    %v1014 = vunpack.c.0.s8 %v1013
    %v1015 = vlaneseq
    %v1016 = vshrl.u32 %v1015, 7
    %v1017 = vsub.s32 %v1014, %v1016
    %v1018 = vrot.slane %v1004, %v1017
    %v1019 = vcombine.low %v986, %v1002
    %v1020 = vcombine.high %v986, %v1002
    %v1022 = vunpack.c.l.s4 1934713408
    %v1023 = vunpack.c.0.s8 %v1022
    %v1024 = vlaneseq
    %v1025 = vshrl.u32 %v1024, 7
    %v1026 = vsub.s32 %v1023, %v1025
    %v1027 = vrot.slane %v1019, %v1026
    %v1029 = vunpack.c.l.s4 1934713408
    %v1030 = vunpack.c.0.s8 %v1029
    %v1031 = vlaneseq
    %v1032 = vshrl.u32 %v1031, 7
    %v1033 = vsub.s32 %v1030, %v1032
    %v1034 = vrot.slane %v1020, %v1033
    %v1035 = vcombine.high %v1011, 0.0
    %v1036 = vcombine.high %v1018, 0.0
    %v1037 = vcombine.high %v1027, 0.0
    %v1038 = vcombine.high %v1034, 0.0
    %v1039 = vcombine.low %v943, %v950
    %v1041 = vunpack.c.l.s4 1983009808
    %v1042 = vunpack.c.0.s8 %v1041
    %v1043 = vlaneseq
    %v1044 = vshrl.u32 %v1043, 7
    %v1045 = vsub.s32 %v1042, %v1044
    %v1046 = vrot.slane %v1039, %v1045
    %v1047 = vcombine.low %v967, %v968
    %v1049 = vunpack.c.l.s4 1983009808
    %v1050 = vunpack.c.0.s8 %v1049
    %v1051 = vlaneseq
    %v1052 = vshrl.u32 %v1051, 7
    %v1053 = vsub.s32 %v1050, %v1052
    %v1054 = vrot.slane %v1047, %v1053
    %v1055 = vcombine.low %v959, %v966
    %v1057 = vunpack.c.l.s4 1983009808
    %v1058 = vunpack.c.0.s8 %v1057
    %v1059 = vlaneseq
    %v1060 = vshrl.u32 %v1059, 7
    %v1061 = vsub.s32 %v1058, %v1060
    %v1062 = vrot.slane %v1055, %v1061
    %v1063 = vcombine.low %v969, %v970
    %v1065 = vunpack.c.l.s4 1983009808
    %v1066 = vunpack.c.0.s8 %v1065
    %v1067 = vlaneseq
    %v1068 = vshrl.u32 %v1067, 7
    %v1069 = vsub.s32 %v1066, %v1068
    %v1070 = vrot.slane %v1063, %v1069
    %v1071 = vcombine.low %v1046, %v1054
    %v1072 = vcombine.high %v1046, %v1054
    %v1074 = vunpack.c.l.s4 1934713408
    %v1075 = vunpack.c.0.s8 %v1074
    %v1076 = vlaneseq
    %v1077 = vshrl.u32 %v1076, 7
    %v1078 = vsub.s32 %v1075, %v1077
    %v1079 = vrot.slane %v1071, %v1078
    %v1081 = vunpack.c.l.s4 1934713408
    %v1082 = vunpack.c.0.s8 %v1081
    %v1083 = vlaneseq
    %v1084 = vshrl.u32 %v1083, 7
    %v1085 = vsub.s32 %v1082, %v1084
    %v1086 = vrot.slane %v1072, %v1085
    %v1087 = vcombine.low %v1062, %v1070
    %v1088 = vcombine.high %v1062, %v1070
    %v1090 = vunpack.c.l.s4 1934713408
    %v1091 = vunpack.c.0.s8 %v1090
    %v1092 = vlaneseq
    %v1093 = vshrl.u32 %v1092, 7
    %v1094 = vsub.s32 %v1091, %v1093
    %v1095 = vrot.slane %v1087, %v1094
    %v1097 = vunpack.c.l.s4 1934713408
    %v1098 = vunpack.c.0.s8 %v1097
    %v1099 = vlaneseq
    %v1100 = vshrl.u32 %v1099, 7
    %v1101 = vsub.s32 %v1098, %v1100
    %v1102 = vrot.slane %v1088, %v1101
    %v1103 = vcombine.low %v1079, %v1095
    %v1104 = vcombine.high %v1079, %v1095
    %v1105 = vcombine.low %v1086, %v1102
    %v1106 = vcombine.high %v1086, %v1102
    %v1107 = vcombine.low %v1011, %v1018
    %v1109 = vunpack.c.l.s4 1983009808
    %v1110 = vunpack.c.0.s8 %v1109
    %v1111 = vlaneseq
    %v1112 = vshrl.u32 %v1111, 7
    %v1113 = vsub.s32 %v1110, %v1112
    %v1114 = vrot.slane %v1107, %v1113
    %v1115 = vcombine.low %v1035, %v1036
    %v1117 = vunpack.c.l.s4 1983009808
    %v1118 = vunpack.c.0.s8 %v1117
    %v1119 = vlaneseq
    %v1120 = vshrl.u32 %v1119, 7
    %v1121 = vsub.s32 %v1118, %v1120
    %v1122 = vrot.slane %v1115, %v1121
    %v1123 = vcombine.low %v1027, %v1034
    %v1125 = vunpack.c.l.s4 1983009808
    %v1126 = vunpack.c.0.s8 %v1125
    %v1127 = vlaneseq
    %v1128 = vshrl.u32 %v1127, 7
    %v1129 = vsub.s32 %v1126, %v1128
    %v1130 = vrot.slane %v1123, %v1129
    %v1131 = vcombine.low %v1037, %v1038
    %v1133 = vunpack.c.l.s4 1983009808
    %v1134 = vunpack.c.0.s8 %v1133
    %v1135 = vlaneseq
    %v1136 = vshrl.u32 %v1135, 7
    %v1137 = vsub.s32 %v1134, %v1136
    %v1138 = vrot.slane %v1131, %v1137
    %v1139 = vcombine.low %v1114, %v1122
    %v1140 = vcombine.high %v1114, %v1122
    %v1142 = vunpack.c.l.s4 1934713408
    %v1143 = vunpack.c.0.s8 %v1142
    %v1144 = vlaneseq
    %v1145 = vshrl.u32 %v1144, 7
    %v1146 = vsub.s32 %v1143, %v1145
    %v1147 = vrot.slane %v1139, %v1146
    %v1149 = vunpack.c.l.s4 1934713408
    %v1150 = vunpack.c.0.s8 %v1149
    %v1151 = vlaneseq
    %v1152 = vshrl.u32 %v1151, 7
    %v1153 = vsub.s32 %v1150, %v1152
    %v1154 = vrot.slane %v1140, %v1153
    %v1155 = vcombine.low %v1130, %v1138
    %v1156 = vcombine.high %v1130, %v1138
    %v1158 = vunpack.c.l.s4 1934713408
    %v1159 = vunpack.c.0.s8 %v1158
    %v1160 = vlaneseq
    %v1161 = vshrl.u32 %v1160, 7
    %v1162 = vsub.s32 %v1159, %v1161
    %v1163 = vrot.slane %v1155, %v1162
    %v1165 = vunpack.c.l.s4 1934713408
    %v1166 = vunpack.c.0.s8 %v1165
    %v1167 = vlaneseq
    %v1168 = vshrl.u32 %v1167, 7
    %v1169 = vsub.s32 %v1166, %v1168
    %v1170 = vrot.slane %v1156, %v1169
    %v1171 = vcombine.low %v1147, %v1163
    %v1172 = vcombine.high %v1147, %v1163
    %v1173 = vcombine.low %v1154, %v1170
    %v1174 = vcombine.high %v1154, %v1170
    %vm1175 = vcmask 64512
    %v1177 = vsel %vm1175, %v515, 0
    %v1180 = vsel %vm1175, %v811, 0
    %1182 = vmatprep.subr.mxu0 0.0
    %1183 = vmatpush1.xpose.msra.mxu0 %v1180
    %1184 = vmatprep.subr.mxu0 0.0
    %1185 = vmatpush1.xpose.msra.mxu0 0.0
    %1186 = vmatprep.subr.mxu0 0.0
    %1187 = vmatpush1.xpose.msra.mxu0 0.0
    %1188 = vmatprep.subr.mxu0 0.0
    %1189 = vmatpush1.xpose.msra.mxu0 0.0
    %1190 = vmatprep.subr.mxu0 0.0
    %1191 = vmatpush1.xpose.msra.mxu0 0.0
    %1192 = vmatprep.subr.mxu0 0.0
    %1193 = vmatpush1.xpose.msra.mxu0 0.0
    %1194 = vmatprep.subr.mxu0 0.0
    %1195 = vmatpush1.xpose.msra.mxu0 0.0
    %1196 = vmatprep.subr.mxu0 0.0
    %1197 = vmatpush1.xpose.msra.mxu0 0.0
    %1198 = vmatprep.subr.mxu0 0.0
    %1199 = vmatpush1.xpose.msra.mxu0 0.0
    %1200 = vmatprep.subr.mxu0 0.0
    %1201 = vmatpush1.xpose.msra.mxu0 0.0
    %1202 = vmatprep.subr.mxu0 0.0
    %1203 = vmatpush1.xpose.msra.mxu0 0.0
    %1204 = vmatprep.subr.mxu0 0.0
    %1205 = vmatpush1.xpose.msra.mxu0 0.0
    %1206 = vmatprep.subr.mxu0 0.0
    %1207 = vmatpush1.xpose.msra.mxu0 0.0
    %1208 = vmatprep.subr.mxu0 0.0
    %1209 = vmatpush1.xpose.msra.mxu0 0.0
    %1210 = vmatprep.subr.mxu0 0.0
    %1211 = vmatpush1.xpose.msra.mxu0 0.0
    %1212 = vmatprep.subr.mxu0 0.0
    %1213 = vmatpush1.xpose.msra.mxu0 0.0
    %1214 = vmatprep.subr.mxu0 0.0
    %1215 = vmatpush1.xpose.msra.mxu0 0.0
    %1216 = vmatprep.subr.mxu0 0.0
    %1217 = vmatpush1.xpose.msra.mxu0 0.0
    %1218 = vmatprep.subr.mxu0 0.0
    %1219 = vmatpush1.xpose.msra.mxu0 0.0
    %1220 = vmatprep.subr.mxu0 0.0
    %1221 = vmatpush1.xpose.msra.mxu0 0.0
    %1222 = vmatprep.subr.mxu0 0.0
    %1223 = vmatpush1.xpose.msra.mxu0 0.0
    %1224 = vmatprep.subr.mxu0 0.0
    %1225 = vmatpush1.xpose.msra.mxu0 0.0
    %1226 = vmatprep.subr.mxu0 0.0
    %1227 = vmatpush1.xpose.msra.mxu0 0.0
    %1228 = vmatprep.subr.mxu0 0.0
    %1229 = vmatpush1.xpose.msra.mxu0 0.0
    %1230 = vmatprep.subr.mxu0 0.0
    %1231 = vmatpush1.xpose.msra.mxu0 0.0
    %1232 = vmatprep.subr.mxu0 0.0
    %1233 = vmatpush1.xpose.msra.mxu0 0.0
    %1234 = vmatprep.subr.mxu0 0.0
    %1235 = vmatpush1.xpose.msra.mxu0 0.0
    %1236 = vmatprep.subr.mxu0 0.0
    %1237 = vmatpush1.xpose.msra.mxu0 0.0
    %1238 = vmatprep.subr.mxu0 0.0
    %1239 = vmatpush1.xpose.msra.mxu0 0.0
    %1240 = vmatprep.subr.mxu0 0.0
    %1241 = vmatpush1.xpose.msra.mxu0 0.0
    %1242 = vmatprep.subr.mxu0 0.0
    %1243 = vmatpush1.xpose.msra.mxu0 0.0
    %1244 = vmatprep.subr.mxu0 0.0
    %1245 = vmatpush1.xpose.msra.mxu0 0.0
    %1246 = vmatprep.mubr.f32.mxu0 0.0
    %1247 = vmatmul.mubr.f32.gmra.mrb[0].mxu0 %v1177
    %v1248 = vpop.f32.mrb[0].mxu0
    %v1249 = vadd.f32 0.0, %v1248
    %v1250 = vpop.f32.mrb[0].mxu0
    %1251 = vdwg.mxu0
    %v1253 = vsel %vm1175, %v516, 0
    %v1256 = vsel %vm1175, %v812, 0
    %1258 = vmatprep.subr.mxu0 0.0
    %1259 = vmatpush1.xpose.msra.mxu0 %v1256
    %1260 = vmatprep.subr.mxu0 0.0
    %1261 = vmatpush1.xpose.msra.mxu0 0.0
    %1262 = vmatprep.subr.mxu0 0.0
    %1263 = vmatpush1.xpose.msra.mxu0 0.0
    %1264 = vmatprep.subr.mxu0 0.0
    %1265 = vmatpush1.xpose.msra.mxu0 0.0
    %1266 = vmatprep.subr.mxu0 0.0
    %1267 = vmatpush1.xpose.msra.mxu0 0.0
    %1268 = vmatprep.subr.mxu0 0.0
    %1269 = vmatpush1.xpose.msra.mxu0 0.0
    %1270 = vmatprep.subr.mxu0 0.0
    %1271 = vmatpush1.xpose.msra.mxu0 0.0
    %1272 = vmatprep.subr.mxu0 0.0
    %1273 = vmatpush1.xpose.msra.mxu0 0.0
    %1274 = vmatprep.subr.mxu0 0.0
    %1275 = vmatpush1.xpose.msra.mxu0 0.0
    %1276 = vmatprep.subr.mxu0 0.0
    %1277 = vmatpush1.xpose.msra.mxu0 0.0
    %1278 = vmatprep.subr.mxu0 0.0
    %1279 = vmatpush1.xpose.msra.mxu0 0.0
    %1280 = vmatprep.subr.mxu0 0.0
    %1281 = vmatpush1.xpose.msra.mxu0 0.0
    %1282 = vmatprep.subr.mxu0 0.0
    %1283 = vmatpush1.xpose.msra.mxu0 0.0
    %1284 = vmatprep.subr.mxu0 0.0
    %1285 = vmatpush1.xpose.msra.mxu0 0.0
    %1286 = vmatprep.subr.mxu0 0.0
    %1287 = vmatpush1.xpose.msra.mxu0 0.0
    %1288 = vmatprep.subr.mxu0 0.0
    %1289 = vmatpush1.xpose.msra.mxu0 0.0
    %1290 = vmatprep.subr.mxu0 0.0
    %1291 = vmatpush1.xpose.msra.mxu0 0.0
    %1292 = vmatprep.subr.mxu0 0.0
    %1293 = vmatpush1.xpose.msra.mxu0 0.0
    %1294 = vmatprep.subr.mxu0 0.0
    %1295 = vmatpush1.xpose.msra.mxu0 0.0
    %1296 = vmatprep.subr.mxu0 0.0
    %1297 = vmatpush1.xpose.msra.mxu0 0.0
    %1298 = vmatprep.subr.mxu0 0.0
    %1299 = vmatpush1.xpose.msra.mxu0 0.0
    %1300 = vmatprep.subr.mxu0 0.0
    %1301 = vmatpush1.xpose.msra.mxu0 0.0
    %1302 = vmatprep.subr.mxu0 0.0
    %1303 = vmatpush1.xpose.msra.mxu0 0.0
    %1304 = vmatprep.subr.mxu0 0.0
    %1305 = vmatpush1.xpose.msra.mxu0 0.0
    %1306 = vmatprep.subr.mxu0 0.0
    %1307 = vmatpush1.xpose.msra.mxu0 0.0
    %1308 = vmatprep.subr.mxu0 0.0
    %1309 = vmatpush1.xpose.msra.mxu0 0.0
    %1310 = vmatprep.subr.mxu0 0.0
    %1311 = vmatpush1.xpose.msra.mxu0 0.0
    %1312 = vmatprep.subr.mxu0 0.0
    %1313 = vmatpush1.xpose.msra.mxu0 0.0
    %1314 = vmatprep.subr.mxu0 0.0
    %1315 = vmatpush1.xpose.msra.mxu0 0.0
    %1316 = vmatprep.subr.mxu0 0.0
    %1317 = vmatpush1.xpose.msra.mxu0 0.0
    %1318 = vmatprep.subr.mxu0 0.0
    %1319 = vmatpush1.xpose.msra.mxu0 0.0
    %1320 = vmatprep.subr.mxu0 0.0
    %1321 = vmatpush1.xpose.msra.mxu0 0.0
    %1322 = vmatprep.mubr.f32.mxu0 0.0
    %1323 = vmatmul.mubr.f32.gmra.mrb[0].mxu0 %v1253
    %v1324 = vpop.f32.mrb[0].mxu0
    %v1325 = vadd.f32 0.0, %v1324
    %v1326 = vpop.f32.mrb[0].mxu0
    %1327 = vdwg.mxu0
    %v1329 = vsel %vm1175, %v517, 0
    %v1332 = vsel %vm1175, %v813, 0
    %1334 = vmatprep.subr.mxu0 0.0
    %1335 = vmatpush1.xpose.msra.mxu0 %v1332
    %1336 = vmatprep.subr.mxu0 0.0
    %1337 = vmatpush1.xpose.msra.mxu0 0.0
    %1338 = vmatprep.subr.mxu0 0.0
    %1339 = vmatpush1.xpose.msra.mxu0 0.0
    %1340 = vmatprep.subr.mxu0 0.0
    %1341 = vmatpush1.xpose.msra.mxu0 0.0
    %1342 = vmatprep.subr.mxu0 0.0
    %1343 = vmatpush1.xpose.msra.mxu0 0.0
    %1344 = vmatprep.subr.mxu0 0.0
    %1345 = vmatpush1.xpose.msra.mxu0 0.0
    %1346 = vmatprep.subr.mxu0 0.0
    %1347 = vmatpush1.xpose.msra.mxu0 0.0
    %1348 = vmatprep.subr.mxu0 0.0
    %1349 = vmatpush1.xpose.msra.mxu0 0.0
    %1350 = vmatprep.subr.mxu0 0.0
    %1351 = vmatpush1.xpose.msra.mxu0 0.0
    %1352 = vmatprep.subr.mxu0 0.0
    %1353 = vmatpush1.xpose.msra.mxu0 0.0
    %1354 = vmatprep.subr.mxu0 0.0
    %1355 = vmatpush1.xpose.msra.mxu0 0.0
    %1356 = vmatprep.subr.mxu0 0.0
    %1357 = vmatpush1.xpose.msra.mxu0 0.0
    %1358 = vmatprep.subr.mxu0 0.0
    %1359 = vmatpush1.xpose.msra.mxu0 0.0
    %1360 = vmatprep.subr.mxu0 0.0
    %1361 = vmatpush1.xpose.msra.mxu0 0.0
    %1362 = vmatprep.subr.mxu0 0.0
    %1363 = vmatpush1.xpose.msra.mxu0 0.0
    %1364 = vmatprep.subr.mxu0 0.0
    %1365 = vmatpush1.xpose.msra.mxu0 0.0
    %1366 = vmatprep.subr.mxu0 0.0
    %1367 = vmatpush1.xpose.msra.mxu0 0.0
    %1368 = vmatprep.subr.mxu0 0.0
    %1369 = vmatpush1.xpose.msra.mxu0 0.0
    %1370 = vmatprep.subr.mxu0 0.0
    %1371 = vmatpush1.xpose.msra.mxu0 0.0
    %1372 = vmatprep.subr.mxu0 0.0
    %1373 = vmatpush1.xpose.msra.mxu0 0.0
    %1374 = vmatprep.subr.mxu0 0.0
    %1375 = vmatpush1.xpose.msra.mxu0 0.0
    %1376 = vmatprep.subr.mxu0 0.0
    %1377 = vmatpush1.xpose.msra.mxu0 0.0
    %1378 = vmatprep.subr.mxu0 0.0
    %1379 = vmatpush1.xpose.msra.mxu0 0.0
    %1380 = vmatprep.subr.mxu0 0.0
    %1381 = vmatpush1.xpose.msra.mxu0 0.0
    %1382 = vmatprep.subr.mxu0 0.0
    %1383 = vmatpush1.xpose.msra.mxu0 0.0
    %1384 = vmatprep.subr.mxu0 0.0
    %1385 = vmatpush1.xpose.msra.mxu0 0.0
    %1386 = vmatprep.subr.mxu0 0.0
    %1387 = vmatpush1.xpose.msra.mxu0 0.0
    %1388 = vmatprep.subr.mxu0 0.0
    %1389 = vmatpush1.xpose.msra.mxu0 0.0
    %1390 = vmatprep.subr.mxu0 0.0
    %1391 = vmatpush1.xpose.msra.mxu0 0.0
    %1392 = vmatprep.subr.mxu0 0.0
    %1393 = vmatpush1.xpose.msra.mxu0 0.0
    %1394 = vmatprep.subr.mxu0 0.0
    %1395 = vmatpush1.xpose.msra.mxu0 0.0
    %1396 = vmatprep.subr.mxu0 0.0
    %1397 = vmatpush1.xpose.msra.mxu0 0.0
    %1398 = vmatprep.mubr.f32.mxu0 0.0
    %1399 = vmatmul.mubr.f32.gmra.mrb[0].mxu0 %v1329
    %v1400 = vpop.f32.mrb[0].mxu0
    %v1401 = vadd.f32 0.0, %v1400
    %v1402 = vpop.f32.mrb[0].mxu0
    %1403 = vdwg.mxu0
    %v1405 = vsel %vm1175, %v518, 0
    %v1408 = vsel %vm1175, %v814, 0
    %1410 = vmatprep.subr.mxu0 0.0
    %1411 = vmatpush1.xpose.msra.mxu0 %v1408
    %1412 = vmatprep.subr.mxu0 0.0
    %1413 = vmatpush1.xpose.msra.mxu0 0.0
    %1414 = vmatprep.subr.mxu0 0.0
    %1415 = vmatpush1.xpose.msra.mxu0 0.0
    %1416 = vmatprep.subr.mxu0 0.0
    %1417 = vmatpush1.xpose.msra.mxu0 0.0
    %1418 = vmatprep.subr.mxu0 0.0
    %1419 = vmatpush1.xpose.msra.mxu0 0.0
    %1420 = vmatprep.subr.mxu0 0.0
    %1421 = vmatpush1.xpose.msra.mxu0 0.0
    %1422 = vmatprep.subr.mxu0 0.0
    %1423 = vmatpush1.xpose.msra.mxu0 0.0
    %1424 = vmatprep.subr.mxu0 0.0
    %1425 = vmatpush1.xpose.msra.mxu0 0.0
    %1426 = vmatprep.subr.mxu0 0.0
    %1427 = vmatpush1.xpose.msra.mxu0 0.0
    %1428 = vmatprep.subr.mxu0 0.0
    %1429 = vmatpush1.xpose.msra.mxu0 0.0
    %1430 = vmatprep.subr.mxu0 0.0
    %1431 = vmatpush1.xpose.msra.mxu0 0.0
    %1432 = vmatprep.subr.mxu0 0.0
    %1433 = vmatpush1.xpose.msra.mxu0 0.0
    %1434 = vmatprep.subr.mxu0 0.0
    %1435 = vmatpush1.xpose.msra.mxu0 0.0
    %1436 = vmatprep.subr.mxu0 0.0
    %1437 = vmatpush1.xpose.msra.mxu0 0.0
    %1438 = vmatprep.subr.mxu0 0.0
    %1439 = vmatpush1.xpose.msra.mxu0 0.0
    %1440 = vmatprep.subr.mxu0 0.0
    %1441 = vmatpush1.xpose.msra.mxu0 0.0
    %1442 = vmatprep.subr.mxu0 0.0
    %1443 = vmatpush1.xpose.msra.mxu0 0.0
    %1444 = vmatprep.subr.mxu0 0.0
    %1445 = vmatpush1.xpose.msra.mxu0 0.0
    %1446 = vmatprep.subr.mxu0 0.0
    %1447 = vmatpush1.xpose.msra.mxu0 0.0
    %1448 = vmatprep.subr.mxu0 0.0
    %1449 = vmatpush1.xpose.msra.mxu0 0.0
    %1450 = vmatprep.subr.mxu0 0.0
    %1451 = vmatpush1.xpose.msra.mxu0 0.0
    %1452 = vmatprep.subr.mxu0 0.0
    %1453 = vmatpush1.xpose.msra.mxu0 0.0
    %1454 = vmatprep.subr.mxu0 0.0
    %1455 = vmatpush1.xpose.msra.mxu0 0.0
    %1456 = vmatprep.subr.mxu0 0.0
    %1457 = vmatpush1.xpose.msra.mxu0 0.0
    %1458 = vmatprep.subr.mxu0 0.0
    %1459 = vmatpush1.xpose.msra.mxu0 0.0
    %1460 = vmatprep.subr.mxu0 0.0
    %1461 = vmatpush1.xpose.msra.mxu0 0.0
    %1462 = vmatprep.subr.mxu0 0.0
    %1463 = vmatpush1.xpose.msra.mxu0 0.0
    %1464 = vmatprep.subr.mxu0 0.0
    %1465 = vmatpush1.xpose.msra.mxu0 0.0
    %1466 = vmatprep.subr.mxu0 0.0
    %1467 = vmatpush1.xpose.msra.mxu0 0.0
    %1468 = vmatprep.subr.mxu0 0.0
    %1469 = vmatpush1.xpose.msra.mxu0 0.0
    %1470 = vmatprep.subr.mxu0 0.0
    %1471 = vmatpush1.xpose.msra.mxu0 0.0
    %1472 = vmatprep.subr.mxu0 0.0
    %1473 = vmatpush1.xpose.msra.mxu0 0.0
    %1474 = vmatprep.mubr.f32.mxu0 0.0
    %1475 = vmatmul.mubr.f32.gmra.mrb[0].mxu0 %v1405
    %v1476 = vpop.f32.mrb[0].mxu0
    %v1477 = vadd.f32 0.0, %v1476
    %v1478 = vpop.f32.mrb[0].mxu0
    %1479 = vdwg.mxu0
    %v1481 = vsel %vm1175, %v583, 0
    %v1484 = vsel %vm1175, %v879, 0
    %1486 = vmatprep.subr.mxu0 0.0
    %1487 = vmatpush1.xpose.msra.mxu0 %v1484
    %1488 = vmatprep.subr.mxu0 0.0
    %1489 = vmatpush1.xpose.msra.mxu0 0.0
    %1490 = vmatprep.subr.mxu0 0.0
    %1491 = vmatpush1.xpose.msra.mxu0 0.0
    %1492 = vmatprep.subr.mxu0 0.0
    %1493 = vmatpush1.xpose.msra.mxu0 0.0
    %1494 = vmatprep.subr.mxu0 0.0
    %1495 = vmatpush1.xpose.msra.mxu0 0.0
    %1496 = vmatprep.subr.mxu0 0.0
    %1497 = vmatpush1.xpose.msra.mxu0 0.0
    %1498 = vmatprep.subr.mxu0 0.0
    %1499 = vmatpush1.xpose.msra.mxu0 0.0
    %1500 = vmatprep.subr.mxu0 0.0
    %1501 = vmatpush1.xpose.msra.mxu0 0.0
    %1502 = vmatprep.subr.mxu0 0.0
    %1503 = vmatpush1.xpose.msra.mxu0 0.0
    %1504 = vmatprep.subr.mxu0 0.0
    %1505 = vmatpush1.xpose.msra.mxu0 0.0
    %1506 = vmatprep.subr.mxu0 0.0
    %1507 = vmatpush1.xpose.msra.mxu0 0.0
    %1508 = vmatprep.subr.mxu0 0.0
    %1509 = vmatpush1.xpose.msra.mxu0 0.0
    %1510 = vmatprep.subr.mxu0 0.0
    %1511 = vmatpush1.xpose.msra.mxu0 0.0
    %1512 = vmatprep.subr.mxu0 0.0
    %1513 = vmatpush1.xpose.msra.mxu0 0.0
    %1514 = vmatprep.subr.mxu0 0.0
    %1515 = vmatpush1.xpose.msra.mxu0 0.0
    %1516 = vmatprep.subr.mxu0 0.0
    %1517 = vmatpush1.xpose.msra.mxu0 0.0
    %1518 = vmatprep.subr.mxu0 0.0
    %1519 = vmatpush1.xpose.msra.mxu0 0.0
    %1520 = vmatprep.subr.mxu0 0.0
    %1521 = vmatpush1.xpose.msra.mxu0 0.0
    %1522 = vmatprep.subr.mxu0 0.0
    %1523 = vmatpush1.xpose.msra.mxu0 0.0
    %1524 = vmatprep.subr.mxu0 0.0
    %1525 = vmatpush1.xpose.msra.mxu0 0.0
    %1526 = vmatprep.subr.mxu0 0.0
    %1527 = vmatpush1.xpose.msra.mxu0 0.0
    %1528 = vmatprep.subr.mxu0 0.0
    %1529 = vmatpush1.xpose.msra.mxu0 0.0
    %1530 = vmatprep.subr.mxu0 0.0
    %1531 = vmatpush1.xpose.msra.mxu0 0.0
    %1532 = vmatprep.subr.mxu0 0.0
    %1533 = vmatpush1.xpose.msra.mxu0 0.0
    %1534 = vmatprep.subr.mxu0 0.0
    %1535 = vmatpush1.xpose.msra.mxu0 0.0
    %1536 = vmatprep.subr.mxu0 0.0
    %1537 = vmatpush1.xpose.msra.mxu0 0.0
    %1538 = vmatprep.subr.mxu0 0.0
    %1539 = vmatpush1.xpose.msra.mxu0 0.0
    %1540 = vmatprep.subr.mxu0 0.0
    %1541 = vmatpush1.xpose.msra.mxu0 0.0
    %1542 = vmatprep.subr.mxu0 0.0
    %1543 = vmatpush1.xpose.msra.mxu0 0.0
    %1544 = vmatprep.subr.mxu0 0.0
    %1545 = vmatpush1.xpose.msra.mxu0 0.0
    %1546 = vmatprep.subr.mxu0 0.0
    %1547 = vmatpush1.xpose.msra.mxu0 0.0
    %1548 = vmatprep.subr.mxu0 0.0
    %1549 = vmatpush1.xpose.msra.mxu0 0.0
    %1550 = vmatprep.mubr.f32.mxu0 0.0
    %1551 = vmatmul.mubr.f32.gmra.mrb[0].mxu0 %v1481
    %v1552 = vpop.f32.mrb[0].mxu0
    %v1553 = vadd.f32 0.0, %v1552
    %v1554 = vpop.f32.mrb[0].mxu0
    %1555 = vdwg.mxu0
    %v1557 = vsel %vm1175, %v584, 0
    %v1560 = vsel %vm1175, %v880, 0
    %1562 = vmatprep.subr.mxu0 0.0
    %1563 = vmatpush1.xpose.msra.mxu0 %v1560
    %1564 = vmatprep.subr.mxu0 0.0
    %1565 = vmatpush1.xpose.msra.mxu0 0.0
    %1566 = vmatprep.subr.mxu0 0.0
    %1567 = vmatpush1.xpose.msra.mxu0 0.0
    %1568 = vmatprep.subr.mxu0 0.0
    %1569 = vmatpush1.xpose.msra.mxu0 0.0
    %1570 = vmatprep.subr.mxu0 0.0
    %1571 = vmatpush1.xpose.msra.mxu0 0.0
    %1572 = vmatprep.subr.mxu0 0.0
    %1573 = vmatpush1.xpose.msra.mxu0 0.0
    %1574 = vmatprep.subr.mxu0 0.0
    %1575 = vmatpush1.xpose.msra.mxu0 0.0
    %1576 = vmatprep.subr.mxu0 0.0
    %1577 = vmatpush1.xpose.msra.mxu0 0.0
    %1578 = vmatprep.subr.mxu0 0.0
    %1579 = vmatpush1.xpose.msra.mxu0 0.0
    %1580 = vmatprep.subr.mxu0 0.0
    %1581 = vmatpush1.xpose.msra.mxu0 0.0
    %1582 = vmatprep.subr.mxu0 0.0
    %1583 = vmatpush1.xpose.msra.mxu0 0.0
    %1584 = vmatprep.subr.mxu0 0.0
    %1585 = vmatpush1.xpose.msra.mxu0 0.0
    %1586 = vmatprep.subr.mxu0 0.0
    %1587 = vmatpush1.xpose.msra.mxu0 0.0
    %1588 = vmatprep.subr.mxu0 0.0
    %1589 = vmatpush1.xpose.msra.mxu0 0.0
    %1590 = vmatprep.subr.mxu0 0.0
    %1591 = vmatpush1.xpose.msra.mxu0 0.0
    %1592 = vmatprep.subr.mxu0 0.0
    %1593 = vmatpush1.xpose.msra.mxu0 0.0
    %1594 = vmatprep.subr.mxu0 0.0
    %1595 = vmatpush1.xpose.msra.mxu0 0.0
    %1596 = vmatprep.subr.mxu0 0.0
    %1597 = vmatpush1.xpose.msra.mxu0 0.0
    %1598 = vmatprep.subr.mxu0 0.0
    %1599 = vmatpush1.xpose.msra.mxu0 0.0
    %1600 = vmatprep.subr.mxu0 0.0
    %1601 = vmatpush1.xpose.msra.mxu0 0.0
    %1602 = vmatprep.subr.mxu0 0.0
    %1603 = vmatpush1.xpose.msra.mxu0 0.0
    %1604 = vmatprep.subr.mxu0 0.0
    %1605 = vmatpush1.xpose.msra.mxu0 0.0
    %1606 = vmatprep.subr.mxu0 0.0
    %1607 = vmatpush1.xpose.msra.mxu0 0.0
    %1608 = vmatprep.subr.mxu0 0.0
    %1609 = vmatpush1.xpose.msra.mxu0 0.0
    %1610 = vmatprep.subr.mxu0 0.0
    %1611 = vmatpush1.xpose.msra.mxu0 0.0
    %1612 = vmatprep.subr.mxu0 0.0
    %1613 = vmatpush1.xpose.msra.mxu0 0.0
    %1614 = vmatprep.subr.mxu0 0.0
    %1615 = vmatpush1.xpose.msra.mxu0 0.0
    %1616 = vmatprep.subr.mxu0 0.0
    %1617 = vmatpush1.xpose.msra.mxu0 0.0
    %1618 = vmatprep.subr.mxu0 0.0
    %1619 = vmatpush1.xpose.msra.mxu0 0.0
    %1620 = vmatprep.subr.mxu0 0.0
    %1621 = vmatpush1.xpose.msra.mxu0 0.0
    %1622 = vmatprep.subr.mxu0 0.0
    %1623 = vmatpush1.xpose.msra.mxu0 0.0
    %1624 = vmatprep.subr.mxu0 0.0
    %1625 = vmatpush1.xpose.msra.mxu0 0.0
    %1626 = vmatprep.mubr.f32.mxu0 0.0
    %1627 = vmatmul.mubr.f32.gmra.mrb[0].mxu0 %v1557
    %v1628 = vpop.f32.mrb[0].mxu0
    %v1629 = vadd.f32 0.0, %v1628
    %v1630 = vpop.f32.mrb[0].mxu0
    %1631 = vdwg.mxu0
    %v1633 = vsel %vm1175, %v585, 0
    %v1636 = vsel %vm1175, %v881, 0
    %1638 = vmatprep.subr.mxu0 0.0
    %1639 = vmatpush1.xpose.msra.mxu0 %v1636
    %1640 = vmatprep.subr.mxu0 0.0
    %1641 = vmatpush1.xpose.msra.mxu0 0.0
    %1642 = vmatprep.subr.mxu0 0.0
    %1643 = vmatpush1.xpose.msra.mxu0 0.0
    %1644 = vmatprep.subr.mxu0 0.0
    %1645 = vmatpush1.xpose.msra.mxu0 0.0
    %1646 = vmatprep.subr.mxu0 0.0
    %1647 = vmatpush1.xpose.msra.mxu0 0.0
    %1648 = vmatprep.subr.mxu0 0.0
    %1649 = vmatpush1.xpose.msra.mxu0 0.0
    %1650 = vmatprep.subr.mxu0 0.0
    %1651 = vmatpush1.xpose.msra.mxu0 0.0
    %1652 = vmatprep.subr.mxu0 0.0
    %1653 = vmatpush1.xpose.msra.mxu0 0.0
    %1654 = vmatprep.subr.mxu0 0.0
    %1655 = vmatpush1.xpose.msra.mxu0 0.0
    %1656 = vmatprep.subr.mxu0 0.0
    %1657 = vmatpush1.xpose.msra.mxu0 0.0
    %1658 = vmatprep.subr.mxu0 0.0
    %1659 = vmatpush1.xpose.msra.mxu0 0.0
    %1660 = vmatprep.subr.mxu0 0.0
    %1661 = vmatpush1.xpose.msra.mxu0 0.0
    %1662 = vmatprep.subr.mxu0 0.0
    %1663 = vmatpush1.xpose.msra.mxu0 0.0
    %1664 = vmatprep.subr.mxu0 0.0
    %1665 = vmatpush1.xpose.msra.mxu0 0.0
    %1666 = vmatprep.subr.mxu0 0.0
    %1667 = vmatpush1.xpose.msra.mxu0 0.0
    %1668 = vmatprep.subr.mxu0 0.0
    %1669 = vmatpush1.xpose.msra.mxu0 0.0
    %1670 = vmatprep.subr.mxu0 0.0
    %1671 = vmatpush1.xpose.msra.mxu0 0.0
    %1672 = vmatprep.subr.mxu0 0.0
    %1673 = vmatpush1.xpose.msra.mxu0 0.0
    %1674 = vmatprep.subr.mxu0 0.0
    %1675 = vmatpush1.xpose.msra.mxu0 0.0
    %1676 = vmatprep.subr.mxu0 0.0
    %1677 = vmatpush1.xpose.msra.mxu0 0.0
    %1678 = vmatprep.subr.mxu0 0.0
    %1679 = vmatpush1.xpose.msra.mxu0 0.0
    %1680 = vmatprep.subr.mxu0 0.0
    %1681 = vmatpush1.xpose.msra.mxu0 0.0
    %1682 = vmatprep.subr.mxu0 0.0
    %1683 = vmatpush1.xpose.msra.mxu0 0.0
    %1684 = vmatprep.subr.mxu0 0.0
    %1685 = vmatpush1.xpose.msra.mxu0 0.0
    %1686 = vmatprep.subr.mxu0 0.0
    %1687 = vmatpush1.xpose.msra.mxu0 0.0
    %1688 = vmatprep.subr.mxu0 0.0
    %1689 = vmatpush1.xpose.msra.mxu0 0.0
    %1690 = vmatprep.subr.mxu0 0.0
    %1691 = vmatpush1.xpose.msra.mxu0 0.0
    %1692 = vmatprep.subr.mxu0 0.0
    %1693 = vmatpush1.xpose.msra.mxu0 0.0
    %1694 = vmatprep.subr.mxu0 0.0
    %1695 = vmatpush1.xpose.msra.mxu0 0.0
    %1696 = vmatprep.subr.mxu0 0.0
    %1697 = vmatpush1.xpose.msra.mxu0 0.0
    %1698 = vmatprep.subr.mxu0 0.0
    %1699 = vmatpush1.xpose.msra.mxu0 0.0
    %1700 = vmatprep.subr.mxu0 0.0
    %1701 = vmatpush1.xpose.msra.mxu0 0.0
    %1702 = vmatprep.mubr.f32.mxu0 0.0
    %1703 = vmatmul.mubr.f32.gmra.mrb[0].mxu0 %v1633
    %v1704 = vpop.f32.mrb[0].mxu0
    %v1705 = vadd.f32 0.0, %v1704
    %v1706 = vpop.f32.mrb[0].mxu0
    %1707 = vdwg.mxu0
    %v1709 = vsel %vm1175, %v586, 0
    %v1712 = vsel %vm1175, %v882, 0
    %1714 = vmatprep.subr.mxu0 0.0
    %1715 = vmatpush1.xpose.msra.mxu0 %v1712
    %1716 = vmatprep.subr.mxu0 0.0
    %1717 = vmatpush1.xpose.msra.mxu0 0.0
    %1718 = vmatprep.subr.mxu0 0.0
    %1719 = vmatpush1.xpose.msra.mxu0 0.0
    %1720 = vmatprep.subr.mxu0 0.0
    %1721 = vmatpush1.xpose.msra.mxu0 0.0
    %1722 = vmatprep.subr.mxu0 0.0
    %1723 = vmatpush1.xpose.msra.mxu0 0.0
    %1724 = vmatprep.subr.mxu0 0.0
    %1725 = vmatpush1.xpose.msra.mxu0 0.0
    %1726 = vmatprep.subr.mxu0 0.0
    %1727 = vmatpush1.xpose.msra.mxu0 0.0
    %1728 = vmatprep.subr.mxu0 0.0
    %1729 = vmatpush1.xpose.msra.mxu0 0.0
    %1730 = vmatprep.subr.mxu0 0.0
    %1731 = vmatpush1.xpose.msra.mxu0 0.0
    %1732 = vmatprep.subr.mxu0 0.0
    %1733 = vmatpush1.xpose.msra.mxu0 0.0
    %1734 = vmatprep.subr.mxu0 0.0
    %1735 = vmatpush1.xpose.msra.mxu0 0.0
    %1736 = vmatprep.subr.mxu0 0.0
    %1737 = vmatpush1.xpose.msra.mxu0 0.0
    %1738 = vmatprep.subr.mxu0 0.0
    %1739 = vmatpush1.xpose.msra.mxu0 0.0
    %1740 = vmatprep.subr.mxu0 0.0
    %1741 = vmatpush1.xpose.msra.mxu0 0.0
    %1742 = vmatprep.subr.mxu0 0.0
    %1743 = vmatpush1.xpose.msra.mxu0 0.0
    %1744 = vmatprep.subr.mxu0 0.0
    %1745 = vmatpush1.xpose.msra.mxu0 0.0
    %1746 = vmatprep.subr.mxu0 0.0
    %1747 = vmatpush1.xpose.msra.mxu0 0.0
    %1748 = vmatprep.subr.mxu0 0.0
    %1749 = vmatpush1.xpose.msra.mxu0 0.0
    %1750 = vmatprep.subr.mxu0 0.0
    %1751 = vmatpush1.xpose.msra.mxu0 0.0
    %1752 = vmatprep.subr.mxu0 0.0
    %1753 = vmatpush1.xpose.msra.mxu0 0.0
    %1754 = vmatprep.subr.mxu0 0.0
    %1755 = vmatpush1.xpose.msra.mxu0 0.0
    %1756 = vmatprep.subr.mxu0 0.0
    %1757 = vmatpush1.xpose.msra.mxu0 0.0
    %1758 = vmatprep.subr.mxu0 0.0
    %1759 = vmatpush1.xpose.msra.mxu0 0.0
    %1760 = vmatprep.subr.mxu0 0.0
    %1761 = vmatpush1.xpose.msra.mxu0 0.0
    %1762 = vmatprep.subr.mxu0 0.0
    %1763 = vmatpush1.xpose.msra.mxu0 0.0
    %1764 = vmatprep.subr.mxu0 0.0
    %1765 = vmatpush1.xpose.msra.mxu0 0.0
    %1766 = vmatprep.subr.mxu0 0.0
    %1767 = vmatpush1.xpose.msra.mxu0 0.0
    %1768 = vmatprep.subr.mxu0 0.0
    %1769 = vmatpush1.xpose.msra.mxu0 0.0
    %1770 = vmatprep.subr.mxu0 0.0
    %1771 = vmatpush1.xpose.msra.mxu0 0.0
    %1772 = vmatprep.subr.mxu0 0.0
    %1773 = vmatpush1.xpose.msra.mxu0 0.0
    %1774 = vmatprep.subr.mxu0 0.0
    %1775 = vmatpush1.xpose.msra.mxu0 0.0
    %1776 = vmatprep.subr.mxu0 0.0
    %1777 = vmatpush1.xpose.msra.mxu0 0.0
    %1778 = vmatprep.mubr.f32.mxu0 0.0
    %1779 = vmatmul.mubr.f32.gmra.mrb[0].mxu0 %v1709
    %v1780 = vpop.f32.mrb[0].mxu0
    %v1781 = vadd.f32 0.0, %v1780
    %v1782 = vpop.f32.mrb[0].mxu0
    %1783 = vdwg.mxu0
    %v1784 = vsel %vm1175, %v1249, -inf
    %1785 = vmax.xlane.f32.xlu0 %v1784
    %v1786 = vpop.xlane.xlu0 %1785
    %v1787 = vsel %vm1175, %v1325, -inf
    %1788 = vmax.xlane.f32.xlu0 %v1787
    %v1789 = vpop.xlane.xlu0 %1788
    %v1790 = vsel %vm1175, %v1401, -inf
    %1791 = vmax.xlane.f32.xlu0 %v1790
    %v1792 = vpop.xlane.xlu0 %1791
    %v1793 = vsel %vm1175, %v1477, -inf
    %1794 = vmax.xlane.f32.xlu0 %v1793
    %v1795 = vpop.xlane.xlu0 %1794
    %v1796 = vsel %vm1175, %v1553, -inf
    %1797 = vmax.xlane.f32.xlu0 %v1796
    %v1798 = vpop.xlane.xlu0 %1797
    %v1799 = vsel %vm1175, %v1629, -inf
    %1800 = vmax.xlane.f32.xlu0 %v1799
    %v1801 = vpop.xlane.xlu0 %1800
    %v1802 = vsel %vm1175, %v1705, -inf
    %1803 = vmax.xlane.f32.xlu0 %v1802
    %v1804 = vpop.xlane.xlu0 %1803
    %v1805 = vsel %vm1175, %v1781, -inf
    %1806 = vmax.xlane.f32.xlu0 %v1805
    %v1807 = vpop.xlane.xlu0 %1806
    %v1808 = vsub.f32 %v1249, %v1786
    %v1809 = vsub.f32 %v1325, %v1789
    %v1810 = vsub.f32 %v1401, %v1792
    %v1811 = vsub.f32 %v1477, %v1795
    %v1812 = vsub.f32 %v1553, %v1798
    %v1813 = vsub.f32 %v1629, %v1801
    %v1814 = vsub.f32 %v1705, %v1804
    %v1815 = vsub.f32 %v1781, %v1807
    %v1816 = vmul.f32 %v1808, 1.442695
    %v1817 = vpow.pop %v1816
    %v1818 = vmul.f32 %v1809, 1.442695
    %v1819 = vpow.pop %v1818
    %v1820 = vmul.f32 %v1810, 1.442695
    %v1821 = vpow.pop %v1820
    %v1822 = vmul.f32 %v1811, 1.442695
    %v1823 = vpow.pop %v1822
    %v1824 = vmul.f32 %v1812, 1.442695
    %v1825 = vpow.pop %v1824
    %v1826 = vmul.f32 %v1813, 1.442695
    %v1827 = vpow.pop %v1826
    %v1828 = vmul.f32 %v1814, 1.442695
    %v1829 = vpow.pop %v1828
    %v1830 = vmul.f32 %v1815, 1.442695
    %v1831 = vpow.pop %v1830
    %v1832 = vsel %vm1175, %v1817, 0.0
    %1833 = vadd.xlane.f32.xlu0 %v1832
    %v1834 = vpop.xlane.xlu0 %1833
    %v1835 = vsel %vm1175, %v1819, 0.0
    %1836 = vadd.xlane.f32.xlu0 %v1835
    %v1837 = vpop.xlane.xlu0 %1836
    %v1838 = vsel %vm1175, %v1821, 0.0
    %1839 = vadd.xlane.f32.xlu0 %v1838
    %v1840 = vpop.xlane.xlu0 %1839
    %v1841 = vsel %vm1175, %v1823, 0.0
    %1842 = vadd.xlane.f32.xlu0 %v1841
    %v1843 = vpop.xlane.xlu0 %1842
    %v1844 = vsel %vm1175, %v1825, 0.0
    %1845 = vadd.xlane.f32.xlu0 %v1844
    %v1846 = vpop.xlane.xlu0 %1845
    %v1847 = vsel %vm1175, %v1827, 0.0
    %1848 = vadd.xlane.f32.xlu0 %v1847
    %v1849 = vpop.xlane.xlu0 %1848
    %v1850 = vsel %vm1175, %v1829, 0.0
    %1851 = vadd.xlane.f32.xlu0 %v1850
    %v1852 = vpop.xlane.xlu0 %1851
    %v1853 = vsel %vm1175, %v1831, 0.0
    %1854 = vadd.xlane.f32.xlu0 %v1853
    %v1855 = vpop.xlane.xlu0 %1854
    %v1857 = vsel %vm1175, %v1817, 0
    %1859 = vmatprep.subr.mxu0 0.0
    %1860 = vmatpush1.msra.mxu0 %v1103
    %1861 = vmatprep.subr.mxu0 0.0
    %1862 = vmatpush1.msra.mxu0 0.0
    %1863 = vmatprep.subr.mxu0 0.0
    %1864 = vmatpush1.msra.mxu0 0.0
    %1865 = vmatprep.subr.mxu0 0.0
    %1866 = vmatpush1.msra.mxu0 0.0
    %1867 = vmatprep.subr.mxu0 0.0
    %1868 = vmatpush1.msra.mxu0 0.0
    %1869 = vmatprep.subr.mxu0 0.0
    %1870 = vmatpush1.msra.mxu0 0.0
    %1871 = vmatprep.subr.mxu0 0.0
    %1872 = vmatpush1.msra.mxu0 0.0
    %1873 = vmatprep.subr.mxu0 0.0
    %1874 = vmatpush1.msra.mxu0 0.0
    %1875 = vmatprep.subr.mxu0 0.0
    %1876 = vmatpush1.msra.mxu0 0.0
    %1877 = vmatprep.subr.mxu0 0.0
    %1878 = vmatpush1.msra.mxu0 0.0
    %1879 = vmatprep.subr.mxu0 0.0
    %1880 = vmatpush1.msra.mxu0 0.0
    %1881 = vmatprep.subr.mxu0 0.0
    %1882 = vmatpush1.msra.mxu0 0.0
    %1883 = vmatprep.subr.mxu0 0.0
    %1884 = vmatpush1.msra.mxu0 0.0
    %1885 = vmatprep.subr.mxu0 0.0
    %1886 = vmatpush1.msra.mxu0 0.0
    %1887 = vmatprep.subr.mxu0 0.0
    %1888 = vmatpush1.msra.mxu0 0.0
    %1889 = vmatprep.subr.mxu0 0.0
    %1890 = vmatpush1.msra.mxu0 0.0
    %1891 = vmatprep.subr.mxu0 0.0
    %1892 = vmatpush1.msra.mxu0 0.0
    %1893 = vmatprep.subr.mxu0 0.0
    %1894 = vmatpush1.msra.mxu0 0.0
    %1895 = vmatprep.subr.mxu0 0.0
    %1896 = vmatpush1.msra.mxu0 0.0
    %1897 = vmatprep.subr.mxu0 0.0
    %1898 = vmatpush1.msra.mxu0 0.0
    %1899 = vmatprep.subr.mxu0 0.0
    %1900 = vmatpush1.msra.mxu0 0.0
    %1901 = vmatprep.subr.mxu0 0.0
    %1902 = vmatpush1.msra.mxu0 0.0
    %1903 = vmatprep.subr.mxu0 0.0
    %1904 = vmatpush1.msra.mxu0 0.0
    %1905 = vmatprep.subr.mxu0 0.0
    %1906 = vmatpush1.msra.mxu0 0.0
    %1907 = vmatprep.subr.mxu0 0.0
    %1908 = vmatpush1.msra.mxu0 0.0
    %1909 = vmatprep.subr.mxu0 0.0
    %1910 = vmatpush1.msra.mxu0 0.0
    %1911 = vmatprep.subr.mxu0 0.0
    %1912 = vmatpush1.msra.mxu0 0.0
    %1913 = vmatprep.subr.mxu0 0.0
    %1914 = vmatpush1.msra.mxu0 0.0
    %1915 = vmatprep.subr.mxu0 0.0
    %1916 = vmatpush1.msra.mxu0 0.0
    %1917 = vmatprep.subr.mxu0 0.0
    %1918 = vmatpush1.msra.mxu0 0.0
    %1919 = vmatprep.subr.mxu0 0.0
    %1920 = vmatpush1.msra.mxu0 0.0
    %1921 = vmatprep.subr.mxu0 0.0
    %1922 = vmatpush1.msra.mxu0 0.0
    %1923 = vmatprep.mubr.f32.mxu0 0.0
    %1924 = vmatmul.mubr.f32.gmra.mrb[0].mxu0 %v1857
    %v1925 = vpop.f32.mrb[0].mxu0
    %v1926 = vadd.f32 0.0, %v1925
    %v1927 = vpop.f32.mrb[0].mxu0
    %1928 = vdwg.mxu0
    %v1930 = vsel %vm1175, %v1819, 0
    %1932 = vmatprep.subr.mxu0 0.0
    %1933 = vmatpush1.msra.mxu0 %v1104
    %1934 = vmatprep.subr.mxu0 0.0
    %1935 = vmatpush1.msra.mxu0 0.0
    %1936 = vmatprep.subr.mxu0 0.0
    %1937 = vmatpush1.msra.mxu0 0.0
    %1938 = vmatprep.subr.mxu0 0.0
    %1939 = vmatpush1.msra.mxu0 0.0
    %1940 = vmatprep.subr.mxu0 0.0
    %1941 = vmatpush1.msra.mxu0 0.0
    %1942 = vmatprep.subr.mxu0 0.0
    %1943 = vmatpush1.msra.mxu0 0.0
    %1944 = vmatprep.subr.mxu0 0.0
    %1945 = vmatpush1.msra.mxu0 0.0
    %1946 = vmatprep.subr.mxu0 0.0
    %1947 = vmatpush1.msra.mxu0 0.0
    %1948 = vmatprep.subr.mxu0 0.0
    %1949 = vmatpush1.msra.mxu0 0.0
    %1950 = vmatprep.subr.mxu0 0.0
    %1951 = vmatpush1.msra.mxu0 0.0
    %1952 = vmatprep.subr.mxu0 0.0
    %1953 = vmatpush1.msra.mxu0 0.0
    %1954 = vmatprep.subr.mxu0 0.0
    %1955 = vmatpush1.msra.mxu0 0.0
    %1956 = vmatprep.subr.mxu0 0.0
    %1957 = vmatpush1.msra.mxu0 0.0
    %1958 = vmatprep.subr.mxu0 0.0
    %1959 = vmatpush1.msra.mxu0 0.0
    %1960 = vmatprep.subr.mxu0 0.0
    %1961 = vmatpush1.msra.mxu0 0.0
    %1962 = vmatprep.subr.mxu0 0.0
    %1963 = vmatpush1.msra.mxu0 0.0
    %1964 = vmatprep.subr.mxu0 0.0
    %1965 = vmatpush1.msra.mxu0 0.0
    %1966 = vmatprep.subr.mxu0 0.0
    %1967 = vmatpush1.msra.mxu0 0.0
    %1968 = vmatprep.subr.mxu0 0.0
    %1969 = vmatpush1.msra.mxu0 0.0
    %1970 = vmatprep.subr.mxu0 0.0
    %1971 = vmatpush1.msra.mxu0 0.0
    %1972 = vmatprep.subr.mxu0 0.0
    %1973 = vmatpush1.msra.mxu0 0.0
    %1974 = vmatprep.subr.mxu0 0.0
    %1975 = vmatpush1.msra.mxu0 0.0
    %1976 = vmatprep.subr.mxu0 0.0
    %1977 = vmatpush1.msra.mxu0 0.0
    %1978 = vmatprep.subr.mxu0 0.0
    %1979 = vmatpush1.msra.mxu0 0.0
    %1980 = vmatprep.subr.mxu0 0.0
    %1981 = vmatpush1.msra.mxu0 0.0
    %1982 = vmatprep.subr.mxu0 0.0
    %1983 = vmatpush1.msra.mxu0 0.0
    %1984 = vmatprep.subr.mxu0 0.0
    %1985 = vmatpush1.msra.mxu0 0.0
    %1986 = vmatprep.subr.mxu0 0.0
    %1987 = vmatpush1.msra.mxu0 0.0
    %1988 = vmatprep.subr.mxu0 0.0
    %1989 = vmatpush1.msra.mxu0 0.0
    %1990 = vmatprep.subr.mxu0 0.0
    %1991 = vmatpush1.msra.mxu0 0.0
    %1992 = vmatprep.subr.mxu0 0.0
    %1993 = vmatpush1.msra.mxu0 0.0
    %1994 = vmatprep.subr.mxu0 0.0
    %1995 = vmatpush1.msra.mxu0 0.0
    %1996 = vmatprep.mubr.f32.mxu0 0.0
    %1997 = vmatmul.mubr.f32.gmra.mrb[0].mxu0 %v1930
    %v1998 = vpop.f32.mrb[0].mxu0
    %v1999 = vadd.f32 0.0, %v1998
    %v2000 = vpop.f32.mrb[0].mxu0
    %2001 = vdwg.mxu0
    %v2003 = vsel %vm1175, %v1821, 0
    %2005 = vmatprep.subr.mxu0 0.0
    %2006 = vmatpush1.msra.mxu0 %v1105
    %2007 = vmatprep.subr.mxu0 0.0
    %2008 = vmatpush1.msra.mxu0 0.0
    %2009 = vmatprep.subr.mxu0 0.0
    %2010 = vmatpush1.msra.mxu0 0.0
    %2011 = vmatprep.subr.mxu0 0.0
    %2012 = vmatpush1.msra.mxu0 0.0
    %2013 = vmatprep.subr.mxu0 0.0
    %2014 = vmatpush1.msra.mxu0 0.0
    %2015 = vmatprep.subr.mxu0 0.0
    %2016 = vmatpush1.msra.mxu0 0.0
    %2017 = vmatprep.subr.mxu0 0.0
    %2018 = vmatpush1.msra.mxu0 0.0
    %2019 = vmatprep.subr.mxu0 0.0
    %2020 = vmatpush1.msra.mxu0 0.0
    %2021 = vmatprep.subr.mxu0 0.0
    %2022 = vmatpush1.msra.mxu0 0.0
    %2023 = vmatprep.subr.mxu0 0.0
    %2024 = vmatpush1.msra.mxu0 0.0
    %2025 = vmatprep.subr.mxu0 0.0
    %2026 = vmatpush1.msra.mxu0 0.0
    %2027 = vmatprep.subr.mxu0 0.0
    %2028 = vmatpush1.msra.mxu0 0.0
    %2029 = vmatprep.subr.mxu0 0.0
    %2030 = vmatpush1.msra.mxu0 0.0
    %2031 = vmatprep.subr.mxu0 0.0
    %2032 = vmatpush1.msra.mxu0 0.0
    %2033 = vmatprep.subr.mxu0 0.0
    %2034 = vmatpush1.msra.mxu0 0.0
    %2035 = vmatprep.subr.mxu0 0.0
    %2036 = vmatpush1.msra.mxu0 0.0
    %2037 = vmatprep.subr.mxu0 0.0
    %2038 = vmatpush1.msra.mxu0 0.0
    %2039 = vmatprep.subr.mxu0 0.0
    %2040 = vmatpush1.msra.mxu0 0.0
    %2041 = vmatprep.subr.mxu0 0.0
    %2042 = vmatpush1.msra.mxu0 0.0
    %2043 = vmatprep.subr.mxu0 0.0
    %2044 = vmatpush1.msra.mxu0 0.0
    %2045 = vmatprep.subr.mxu0 0.0
    %2046 = vmatpush1.msra.mxu0 0.0
    %2047 = vmatprep.subr.mxu0 0.0
    %2048 = vmatpush1.msra.mxu0 0.0
    %2049 = vmatprep.subr.mxu0 0.0
    %2050 = vmatpush1.msra.mxu0 0.0
    %2051 = vmatprep.subr.mxu0 0.0
    %2052 = vmatpush1.msra.mxu0 0.0
    %2053 = vmatprep.subr.mxu0 0.0
    %2054 = vmatpush1.msra.mxu0 0.0
    %2055 = vmatprep.subr.mxu0 0.0
    %2056 = vmatpush1.msra.mxu0 0.0
    %2057 = vmatprep.subr.mxu0 0.0
    %2058 = vmatpush1.msra.mxu0 0.0
    %2059 = vmatprep.subr.mxu0 0.0
    %2060 = vmatpush1.msra.mxu0 0.0
    %2061 = vmatprep.subr.mxu0 0.0
    %2062 = vmatpush1.msra.mxu0 0.0
    %2063 = vmatprep.subr.mxu0 0.0
    %2064 = vmatpush1.msra.mxu0 0.0
    %2065 = vmatprep.subr.mxu0 0.0
    %2066 = vmatpush1.msra.mxu0 0.0
    %2067 = vmatprep.subr.mxu0 0.0
    %2068 = vmatpush1.msra.mxu0 0.0
    %2069 = vmatprep.mubr.f32.mxu0 0.0
    %2070 = vmatmul.mubr.f32.gmra.mrb[0].mxu0 %v2003
    %v2071 = vpop.f32.mrb[0].mxu0
    %v2072 = vadd.f32 0.0, %v2071
    %v2073 = vpop.f32.mrb[0].mxu0
    %2074 = vdwg.mxu0
    %v2076 = vsel %vm1175, %v1823, 0
    %2078 = vmatprep.subr.mxu0 0.0
    %2079 = vmatpush1.msra.mxu0 %v1106
    %2080 = vmatprep.subr.mxu0 0.0
    %2081 = vmatpush1.msra.mxu0 0.0
    %2082 = vmatprep.subr.mxu0 0.0
    %2083 = vmatpush1.msra.mxu0 0.0
    %2084 = vmatprep.subr.mxu0 0.0
    %2085 = vmatpush1.msra.mxu0 0.0
    %2086 = vmatprep.subr.mxu0 0.0
    %2087 = vmatpush1.msra.mxu0 0.0
    %2088 = vmatprep.subr.mxu0 0.0
    %2089 = vmatpush1.msra.mxu0 0.0
    %2090 = vmatprep.subr.mxu0 0.0
    %2091 = vmatpush1.msra.mxu0 0.0
    %2092 = vmatprep.subr.mxu0 0.0
    %2093 = vmatpush1.msra.mxu0 0.0
    %2094 = vmatprep.subr.mxu0 0.0
    %2095 = vmatpush1.msra.mxu0 0.0
    %2096 = vmatprep.subr.mxu0 0.0
    %2097 = vmatpush1.msra.mxu0 0.0
    %2098 = vmatprep.subr.mxu0 0.0
    %2099 = vmatpush1.msra.mxu0 0.0
    %2100 = vmatprep.subr.mxu0 0.0
    %2101 = vmatpush1.msra.mxu0 0.0
    %2102 = vmatprep.subr.mxu0 0.0
    %2103 = vmatpush1.msra.mxu0 0.0
    %2104 = vmatprep.subr.mxu0 0.0
    %2105 = vmatpush1.msra.mxu0 0.0
    %2106 = vmatprep.subr.mxu0 0.0
    %2107 = vmatpush1.msra.mxu0 0.0
    %2108 = vmatprep.subr.mxu0 0.0
    %2109 = vmatpush1.msra.mxu0 0.0
    %2110 = vmatprep.subr.mxu0 0.0
    %2111 = vmatpush1.msra.mxu0 0.0
    %2112 = vmatprep.subr.mxu0 0.0
    %2113 = vmatpush1.msra.mxu0 0.0
    %2114 = vmatprep.subr.mxu0 0.0
    %2115 = vmatpush1.msra.mxu0 0.0
    %2116 = vmatprep.subr.mxu0 0.0
    %2117 = vmatpush1.msra.mxu0 0.0
    %2118 = vmatprep.subr.mxu0 0.0
    %2119 = vmatpush1.msra.mxu0 0.0
    %2120 = vmatprep.subr.mxu0 0.0
    %2121 = vmatpush1.msra.mxu0 0.0
    %2122 = vmatprep.subr.mxu0 0.0
    %2123 = vmatpush1.msra.mxu0 0.0
    %2124 = vmatprep.subr.mxu0 0.0
    %2125 = vmatpush1.msra.mxu0 0.0
    %2126 = vmatprep.subr.mxu0 0.0
    %2127 = vmatpush1.msra.mxu0 0.0
    %2128 = vmatprep.subr.mxu0 0.0
    %2129 = vmatpush1.msra.mxu0 0.0
    %2130 = vmatprep.subr.mxu0 0.0
    %2131 = vmatpush1.msra.mxu0 0.0
    %2132 = vmatprep.subr.mxu0 0.0
    %2133 = vmatpush1.msra.mxu0 0.0
    %2134 = vmatprep.subr.mxu0 0.0
    %2135 = vmatpush1.msra.mxu0 0.0
    %2136 = vmatprep.subr.mxu0 0.0
    %2137 = vmatpush1.msra.mxu0 0.0
    %2138 = vmatprep.subr.mxu0 0.0
    %2139 = vmatpush1.msra.mxu0 0.0
    %2140 = vmatprep.subr.mxu0 0.0
    %2141 = vmatpush1.msra.mxu0 0.0
    %2142 = vmatprep.mubr.f32.mxu0 0.0
    %2143 = vmatmul.mubr.f32.gmra.mrb[0].mxu0 %v2076
    %v2144 = vpop.f32.mrb[0].mxu0
    %v2145 = vadd.f32 0.0, %v2144
    %v2146 = vpop.f32.mrb[0].mxu0
    %2147 = vdwg.mxu0
    %v2149 = vsel %vm1175, %v1825, 0
    %2151 = vmatprep.subr.mxu0 0.0
    %2152 = vmatpush1.msra.mxu0 %v1171
    %2153 = vmatprep.subr.mxu0 0.0
    %2154 = vmatpush1.msra.mxu0 0.0
    %2155 = vmatprep.subr.mxu0 0.0
    %2156 = vmatpush1.msra.mxu0 0.0
    %2157 = vmatprep.subr.mxu0 0.0
    %2158 = vmatpush1.msra.mxu0 0.0
    %2159 = vmatprep.subr.mxu0 0.0
    %2160 = vmatpush1.msra.mxu0 0.0
    %2161 = vmatprep.subr.mxu0 0.0
    %2162 = vmatpush1.msra.mxu0 0.0
    %2163 = vmatprep.subr.mxu0 0.0
    %2164 = vmatpush1.msra.mxu0 0.0
    %2165 = vmatprep.subr.mxu0 0.0
    %2166 = vmatpush1.msra.mxu0 0.0
    %2167 = vmatprep.subr.mxu0 0.0
    %2168 = vmatpush1.msra.mxu0 0.0
    %2169 = vmatprep.subr.mxu0 0.0
    %2170 = vmatpush1.msra.mxu0 0.0
    %2171 = vmatprep.subr.mxu0 0.0
    %2172 = vmatpush1.msra.mxu0 0.0
    %2173 = vmatprep.subr.mxu0 0.0
    %2174 = vmatpush1.msra.mxu0 0.0
    %2175 = vmatprep.subr.mxu0 0.0
    %2176 = vmatpush1.msra.mxu0 0.0
    %2177 = vmatprep.subr.mxu0 0.0
    %2178 = vmatpush1.msra.mxu0 0.0
    %2179 = vmatprep.subr.mxu0 0.0
    %2180 = vmatpush1.msra.mxu0 0.0
    %2181 = vmatprep.subr.mxu0 0.0
    %2182 = vmatpush1.msra.mxu0 0.0
    %2183 = vmatprep.subr.mxu0 0.0
    %2184 = vmatpush1.msra.mxu0 0.0
    %2185 = vmatprep.subr.mxu0 0.0
    %2186 = vmatpush1.msra.mxu0 0.0
    %2187 = vmatprep.subr.mxu0 0.0
    %2188 = vmatpush1.msra.mxu0 0.0
    %2189 = vmatprep.subr.mxu0 0.0
    %2190 = vmatpush1.msra.mxu0 0.0
    %2191 = vmatprep.subr.mxu0 0.0
    %2192 = vmatpush1.msra.mxu0 0.0
    %2193 = vmatprep.subr.mxu0 0.0
    %2194 = vmatpush1.msra.mxu0 0.0
    %2195 = vmatprep.subr.mxu0 0.0
    %2196 = vmatpush1.msra.mxu0 0.0
    %2197 = vmatprep.subr.mxu0 0.0
    %2198 = vmatpush1.msra.mxu0 0.0
    %2199 = vmatprep.subr.mxu0 0.0
    %2200 = vmatpush1.msra.mxu0 0.0
    %2201 = vmatprep.subr.mxu0 0.0
    %2202 = vmatpush1.msra.mxu0 0.0
    %2203 = vmatprep.subr.mxu0 0.0
    %2204 = vmatpush1.msra.mxu0 0.0
    %2205 = vmatprep.subr.mxu0 0.0
    %2206 = vmatpush1.msra.mxu0 0.0
    %2207 = vmatprep.subr.mxu0 0.0
    %2208 = vmatpush1.msra.mxu0 0.0
    %2209 = vmatprep.subr.mxu0 0.0
    %2210 = vmatpush1.msra.mxu0 0.0
    %2211 = vmatprep.subr.mxu0 0.0
    %2212 = vmatpush1.msra.mxu0 0.0
    %2213 = vmatprep.subr.mxu0 0.0
    %2214 = vmatpush1.msra.mxu0 0.0
    %2215 = vmatprep.mubr.f32.mxu0 0.0
    %2216 = vmatmul.mubr.f32.gmra.mrb[0].mxu0 %v2149
    %v2217 = vpop.f32.mrb[0].mxu0
    %v2218 = vadd.f32 0.0, %v2217
    %v2219 = vpop.f32.mrb[0].mxu0
    %2220 = vdwg.mxu0
    %v2222 = vsel %vm1175, %v1827, 0
    %2224 = vmatprep.subr.mxu0 0.0
    %2225 = vmatpush1.msra.mxu0 %v1172
    %2226 = vmatprep.subr.mxu0 0.0
    %2227 = vmatpush1.msra.mxu0 0.0
    %2228 = vmatprep.subr.mxu0 0.0
    %2229 = vmatpush1.msra.mxu0 0.0
    %2230 = vmatprep.subr.mxu0 0.0
    %2231 = vmatpush1.msra.mxu0 0.0
    %2232 = vmatprep.subr.mxu0 0.0
    %2233 = vmatpush1.msra.mxu0 0.0
    %2234 = vmatprep.subr.mxu0 0.0
    %2235 = vmatpush1.msra.mxu0 0.0
    %2236 = vmatprep.subr.mxu0 0.0
    %2237 = vmatpush1.msra.mxu0 0.0
    %2238 = vmatprep.subr.mxu0 0.0
    %2239 = vmatpush1.msra.mxu0 0.0
    %2240 = vmatprep.subr.mxu0 0.0
    %2241 = vmatpush1.msra.mxu0 0.0
    %2242 = vmatprep.subr.mxu0 0.0
    %2243 = vmatpush1.msra.mxu0 0.0
    %2244 = vmatprep.subr.mxu0 0.0
    %2245 = vmatpush1.msra.mxu0 0.0
    %2246 = vmatprep.subr.mxu0 0.0
    %2247 = vmatpush1.msra.mxu0 0.0
    %2248 = vmatprep.subr.mxu0 0.0
    %2249 = vmatpush1.msra.mxu0 0.0
    %2250 = vmatprep.subr.mxu0 0.0
    %2251 = vmatpush1.msra.mxu0 0.0
    %2252 = vmatprep.subr.mxu0 0.0
    %2253 = vmatpush1.msra.mxu0 0.0
    %2254 = vmatprep.subr.mxu0 0.0
    %2255 = vmatpush1.msra.mxu0 0.0
    %2256 = vmatprep.subr.mxu0 0.0
    %2257 = vmatpush1.msra.mxu0 0.0
    %2258 = vmatprep.subr.mxu0 0.0
    %2259 = vmatpush1.msra.mxu0 0.0
    %2260 = vmatprep.subr.mxu0 0.0
    %2261 = vmatpush1.msra.mxu0 0.0
    %2262 = vmatprep.subr.mxu0 0.0
    %2263 = vmatpush1.msra.mxu0 0.0
    %2264 = vmatprep.subr.mxu0 0.0
    %2265 = vmatpush1.msra.mxu0 0.0
    %2266 = vmatprep.subr.mxu0 0.0
    %2267 = vmatpush1.msra.mxu0 0.0
    %2268 = vmatprep.subr.mxu0 0.0
    %2269 = vmatpush1.msra.mxu0 0.0
    %2270 = vmatprep.subr.mxu0 0.0
    %2271 = vmatpush1.msra.mxu0 0.0
    %2272 = vmatprep.subr.mxu0 0.0
    %2273 = vmatpush1.msra.mxu0 0.0
    %2274 = vmatprep.subr.mxu0 0.0
    %2275 = vmatpush1.msra.mxu0 0.0
    %2276 = vmatprep.subr.mxu0 0.0
    %2277 = vmatpush1.msra.mxu0 0.0
    %2278 = vmatprep.subr.mxu0 0.0
    %2279 = vmatpush1.msra.mxu0 0.0
    %2280 = vmatprep.subr.mxu0 0.0
    %2281 = vmatpush1.msra.mxu0 0.0
    %2282 = vmatprep.subr.mxu0 0.0
    %2283 = vmatpush1.msra.mxu0 0.0
    %2284 = vmatprep.subr.mxu0 0.0
    %2285 = vmatpush1.msra.mxu0 0.0
    %2286 = vmatprep.subr.mxu0 0.0
    %2287 = vmatpush1.msra.mxu0 0.0
    %2288 = vmatprep.mubr.f32.mxu0 0.0
    %2289 = vmatmul.mubr.f32.gmra.mrb[0].mxu0 %v2222
    %v2290 = vpop.f32.mrb[0].mxu0
    %v2291 = vadd.f32 0.0, %v2290
    %v2292 = vpop.f32.mrb[0].mxu0
    %2293 = vdwg.mxu0
    %v2295 = vsel %vm1175, %v1829, 0
    %2297 = vmatprep.subr.mxu0 0.0
    %2298 = vmatpush1.msra.mxu0 %v1173
    %2299 = vmatprep.subr.mxu0 0.0
    %2300 = vmatpush1.msra.mxu0 0.0
    %2301 = vmatprep.subr.mxu0 0.0
    %2302 = vmatpush1.msra.mxu0 0.0
    %2303 = vmatprep.subr.mxu0 0.0
    %2304 = vmatpush1.msra.mxu0 0.0
    %2305 = vmatprep.subr.mxu0 0.0
    %2306 = vmatpush1.msra.mxu0 0.0
    %2307 = vmatprep.subr.mxu0 0.0
    %2308 = vmatpush1.msra.mxu0 0.0
    %2309 = vmatprep.subr.mxu0 0.0
    %2310 = vmatpush1.msra.mxu0 0.0
    %2311 = vmatprep.subr.mxu0 0.0
    %2312 = vmatpush1.msra.mxu0 0.0
    %2313 = vmatprep.subr.mxu0 0.0
    %2314 = vmatpush1.msra.mxu0 0.0
    %2315 = vmatprep.subr.mxu0 0.0
    %2316 = vmatpush1.msra.mxu0 0.0
    %2317 = vmatprep.subr.mxu0 0.0
    %2318 = vmatpush1.msra.mxu0 0.0
    %2319 = vmatprep.subr.mxu0 0.0
    %2320 = vmatpush1.msra.mxu0 0.0
    %2321 = vmatprep.subr.mxu0 0.0
    %2322 = vmatpush1.msra.mxu0 0.0
    %2323 = vmatprep.subr.mxu0 0.0
    %2324 = vmatpush1.msra.mxu0 0.0
    %2325 = vmatprep.subr.mxu0 0.0
    %2326 = vmatpush1.msra.mxu0 0.0
    %2327 = vmatprep.subr.mxu0 0.0
    %2328 = vmatpush1.msra.mxu0 0.0
    %2329 = vmatprep.subr.mxu0 0.0
    %2330 = vmatpush1.msra.mxu0 0.0
    %2331 = vmatprep.subr.mxu0 0.0
    %2332 = vmatpush1.msra.mxu0 0.0
    %2333 = vmatprep.subr.mxu0 0.0
    %2334 = vmatpush1.msra.mxu0 0.0
    %2335 = vmatprep.subr.mxu0 0.0
    %2336 = vmatpush1.msra.mxu0 0.0
    %2337 = vmatprep.subr.mxu0 0.0
    %2338 = vmatpush1.msra.mxu0 0.0
    %2339 = vmatprep.subr.mxu0 0.0
    %2340 = vmatpush1.msra.mxu0 0.0
    %2341 = vmatprep.subr.mxu0 0.0
    %2342 = vmatpush1.msra.mxu0 0.0
    %2343 = vmatprep.subr.mxu0 0.0
    %2344 = vmatpush1.msra.mxu0 0.0
    %2345 = vmatprep.subr.mxu0 0.0
    %2346 = vmatpush1.msra.mxu0 0.0
    %2347 = vmatprep.subr.mxu0 0.0
    %2348 = vmatpush1.msra.mxu0 0.0
    %2349 = vmatprep.subr.mxu0 0.0
    %2350 = vmatpush1.msra.mxu0 0.0
    %2351 = vmatprep.subr.mxu0 0.0
    %2352 = vmatpush1.msra.mxu0 0.0
    %2353 = vmatprep.subr.mxu0 0.0
    %2354 = vmatpush1.msra.mxu0 0.0
    %2355 = vmatprep.subr.mxu0 0.0
    %2356 = vmatpush1.msra.mxu0 0.0
    %2357 = vmatprep.subr.mxu0 0.0
    %2358 = vmatpush1.msra.mxu0 0.0
    %2359 = vmatprep.subr.mxu0 0.0
    %2360 = vmatpush1.msra.mxu0 0.0
    %2361 = vmatprep.mubr.f32.mxu0 0.0
    %2362 = vmatmul.mubr.f32.gmra.mrb[0].mxu0 %v2295
    %v2363 = vpop.f32.mrb[0].mxu0
    %v2364 = vadd.f32 0.0, %v2363
    %v2365 = vpop.f32.mrb[0].mxu0
    %2366 = vdwg.mxu0
    %v2368 = vsel %vm1175, %v1831, 0
    %2370 = vmatprep.subr.mxu0 0.0
    %2371 = vmatpush1.msra.mxu0 %v1174
    %2372 = vmatprep.subr.mxu0 0.0
    %2373 = vmatpush1.msra.mxu0 0.0
    %2374 = vmatprep.subr.mxu0 0.0
    %2375 = vmatpush1.msra.mxu0 0.0
    %2376 = vmatprep.subr.mxu0 0.0
    %2377 = vmatpush1.msra.mxu0 0.0
    %2378 = vmatprep.subr.mxu0 0.0
    %2379 = vmatpush1.msra.mxu0 0.0
    %2380 = vmatprep.subr.mxu0 0.0
    %2381 = vmatpush1.msra.mxu0 0.0
    %2382 = vmatprep.subr.mxu0 0.0
    %2383 = vmatpush1.msra.mxu0 0.0
    %2384 = vmatprep.subr.mxu0 0.0
    %2385 = vmatpush1.msra.mxu0 0.0
    %2386 = vmatprep.subr.mxu0 0.0
    %2387 = vmatpush1.msra.mxu0 0.0
    %2388 = vmatprep.subr.mxu0 0.0
    %2389 = vmatpush1.msra.mxu0 0.0
    %2390 = vmatprep.subr.mxu0 0.0
    %2391 = vmatpush1.msra.mxu0 0.0
    %2392 = vmatprep.subr.mxu0 0.0
    %2393 = vmatpush1.msra.mxu0 0.0
    %2394 = vmatprep.subr.mxu0 0.0
    %2395 = vmatpush1.msra.mxu0 0.0
    %2396 = vmatprep.subr.mxu0 0.0
    %2397 = vmatpush1.msra.mxu0 0.0
    %2398 = vmatprep.subr.mxu0 0.0
    %2399 = vmatpush1.msra.mxu0 0.0
    %2400 = vmatprep.subr.mxu0 0.0
    %2401 = vmatpush1.msra.mxu0 0.0
    %2402 = vmatprep.subr.mxu0 0.0
    %2403 = vmatpush1.msra.mxu0 0.0
    %2404 = vmatprep.subr.mxu0 0.0
    %2405 = vmatpush1.msra.mxu0 0.0
    %2406 = vmatprep.subr.mxu0 0.0
    %2407 = vmatpush1.msra.mxu0 0.0
    %2408 = vmatprep.subr.mxu0 0.0
    %2409 = vmatpush1.msra.mxu0 0.0
    %2410 = vmatprep.subr.mxu0 0.0
    %2411 = vmatpush1.msra.mxu0 0.0
    %2412 = vmatprep.subr.mxu0 0.0
    %2413 = vmatpush1.msra.mxu0 0.0
    %2414 = vmatprep.subr.mxu0 0.0
    %2415 = vmatpush1.msra.mxu0 0.0
    %2416 = vmatprep.subr.mxu0 0.0
    %2417 = vmatpush1.msra.mxu0 0.0
    %2418 = vmatprep.subr.mxu0 0.0
    %2419 = vmatpush1.msra.mxu0 0.0
    %2420 = vmatprep.subr.mxu0 0.0
    %2421 = vmatpush1.msra.mxu0 0.0
    %2422 = vmatprep.subr.mxu0 0.0
    %2423 = vmatpush1.msra.mxu0 0.0
    %2424 = vmatprep.subr.mxu0 0.0
    %2425 = vmatpush1.msra.mxu0 0.0
    %2426 = vmatprep.subr.mxu0 0.0
    %2427 = vmatpush1.msra.mxu0 0.0
    %2428 = vmatprep.subr.mxu0 0.0
    %2429 = vmatpush1.msra.mxu0 0.0
    %2430 = vmatprep.subr.mxu0 0.0
    %2431 = vmatpush1.msra.mxu0 0.0
    %2432 = vmatprep.subr.mxu0 0.0
    %2433 = vmatpush1.msra.mxu0 0.0
    %2434 = vmatprep.mubr.f32.mxu0 0.0
    %2435 = vmatmul.mubr.f32.gmra.mrb[0].mxu0 %v2368
    %v2436 = vpop.f32.mrb[0].mxu0
    %v2437 = vadd.f32 0.0, %v2436
    %v2438 = vpop.f32.mrb[0].mxu0
    %2439 = vdwg.mxu0
    %v2440 = vrcp.pop %v1834
    %v2441 = vrcp.pop %v1837
    %v2442 = vrcp.pop %v1840
    %v2443 = vrcp.pop %v1843
    %v2444 = vrcp.pop %v1846
    %v2445 = vrcp.pop %v1849
    %v2446 = vrcp.pop %v1852
    %v2447 = vrcp.pop %v1855
    %v2448 = vmul.f32 %v1926, %v2440
    %v2449 = vmul.f32 %v1999, %v2441
    %v2450 = vmul.f32 %v2072, %v2442
    %v2451 = vmul.f32 %v2145, %v2443
    %v2452 = vmul.f32 %v2218, %v2444
    %v2453 = vmul.f32 %v2291, %v2445
    %v2454 = vmul.f32 %v2364, %v2446
    %v2455 = vmul.f32 %v2437, %v2447
    %v2456 = vcombine.low %v2448, %v2450
    %v2457 = vcombine.high %v2448, %v2450
    %v2459 = vunpack.c.l.s4 1983009808
    %v2460 = vunpack.c.0.s8 %v2459
    %v2461 = vlaneseq
    %v2462 = vshrl.u32 %v2461, 7
    %v2463 = vsub.s32 %v2460, %v2462
    %v2464 = vrot.slane %v2456, %v2463
    %v2466 = vunpack.c.l.s4 1983009808
    %v2467 = vunpack.c.0.s8 %v2466
    %v2468 = vlaneseq
    %v2469 = vshrl.u32 %v2468, 7
    %v2470 = vsub.s32 %v2467, %v2469
    %v2471 = vrot.slane %v2457, %v2470
    %v2472 = vcombine.low %v2449, %v2451
    %v2473 = vcombine.high %v2449, %v2451
    %v2475 = vunpack.c.l.s4 1983009808
    %v2476 = vunpack.c.0.s8 %v2475
    %v2477 = vlaneseq
    %v2478 = vshrl.u32 %v2477, 7
    %v2479 = vsub.s32 %v2476, %v2478
    %v2480 = vrot.slane %v2472, %v2479
    %v2482 = vunpack.c.l.s4 1983009808
    %v2483 = vunpack.c.0.s8 %v2482
    %v2484 = vlaneseq
    %v2485 = vshrl.u32 %v2484, 7
    %v2486 = vsub.s32 %v2483, %v2485
    %v2487 = vrot.slane %v2473, %v2486
    %v2488 = vcombine.low %v2464, %v2480
    %v2489 = vcombine.high %v2464, %v2480
    %v2491 = vunpack.c.l.s4 1934713408
    %v2492 = vunpack.c.0.s8 %v2491
    %v2493 = vlaneseq
    %v2494 = vshrl.u32 %v2493, 7
    %v2495 = vsub.s32 %v2492, %v2494
    %v2496 = vrot.slane %v2488, %v2495
    %v2498 = vunpack.c.l.s4 1934713408
    %v2499 = vunpack.c.0.s8 %v2498
    %v2500 = vlaneseq
    %v2501 = vshrl.u32 %v2500, 7
    %v2502 = vsub.s32 %v2499, %v2501
    %v2503 = vrot.slane %v2489, %v2502
    %v2504 = vcombine.low %v2471, %v2487
    %v2505 = vcombine.high %v2471, %v2487
    %v2507 = vunpack.c.l.s4 1934713408
    %v2508 = vunpack.c.0.s8 %v2507
    %v2509 = vlaneseq
    %v2510 = vshrl.u32 %v2509, 7
    %v2511 = vsub.s32 %v2508, %v2510
    %v2512 = vrot.slane %v2504, %v2511
    %v2514 = vunpack.c.l.s4 1934713408
    %v2515 = vunpack.c.0.s8 %v2514
    %v2516 = vlaneseq
    %v2517 = vshrl.u32 %v2516, 7
    %v2518 = vsub.s32 %v2515, %v2517
    %v2519 = vrot.slane %v2505, %v2518
    %v2520 = vcombine.high %v2496, 0.0
    %v2521 = vcombine.high %v2503, 0.0
    %v2522 = vcombine.high %v2512, 0.0
    %v2523 = vcombine.high %v2519, 0.0
    %v2524 = vcombine.low %v2452, %v2454
    %v2525 = vcombine.high %v2452, %v2454
    %v2527 = vunpack.c.l.s4 1983009808
    %v2528 = vunpack.c.0.s8 %v2527
    %v2529 = vlaneseq
    %v2530 = vshrl.u32 %v2529, 7
    %v2531 = vsub.s32 %v2528, %v2530
    %v2532 = vrot.slane %v2524, %v2531
    %v2534 = vunpack.c.l.s4 1983009808
    %v2535 = vunpack.c.0.s8 %v2534
    %v2536 = vlaneseq
    %v2537 = vshrl.u32 %v2536, 7
    %v2538 = vsub.s32 %v2535, %v2537
    %v2539 = vrot.slane %v2525, %v2538
    %v2540 = vcombine.low %v2453, %v2455
    %v2541 = vcombine.high %v2453, %v2455
    %v2543 = vunpack.c.l.s4 1983009808
    %v2544 = vunpack.c.0.s8 %v2543
    %v2545 = vlaneseq
    %v2546 = vshrl.u32 %v2545, 7
    %v2547 = vsub.s32 %v2544, %v2546
    %v2548 = vrot.slane %v2540, %v2547
    %v2550 = vunpack.c.l.s4 1983009808
    %v2551 = vunpack.c.0.s8 %v2550
    %v2552 = vlaneseq
    %v2553 = vshrl.u32 %v2552, 7
    %v2554 = vsub.s32 %v2551, %v2553
    %v2555 = vrot.slane %v2541, %v2554
    %v2556 = vcombine.low %v2532, %v2548
    %v2557 = vcombine.high %v2532, %v2548
    %v2559 = vunpack.c.l.s4 1934713408
    %v2560 = vunpack.c.0.s8 %v2559
    %v2561 = vlaneseq
    %v2562 = vshrl.u32 %v2561, 7
    %v2563 = vsub.s32 %v2560, %v2562
    %v2564 = vrot.slane %v2556, %v2563
    %v2566 = vunpack.c.l.s4 1934713408
    %v2567 = vunpack.c.0.s8 %v2566
    %v2568 = vlaneseq
    %v2569 = vshrl.u32 %v2568, 7
    %v2570 = vsub.s32 %v2567, %v2569
    %v2571 = vrot.slane %v2557, %v2570
    %v2572 = vcombine.low %v2539, %v2555
    %v2573 = vcombine.high %v2539, %v2555
    %v2575 = vunpack.c.l.s4 1934713408
    %v2576 = vunpack.c.0.s8 %v2575
    %v2577 = vlaneseq
    %v2578 = vshrl.u32 %v2577, 7
    %v2579 = vsub.s32 %v2576, %v2578
    %v2580 = vrot.slane %v2572, %v2579
    %v2582 = vunpack.c.l.s4 1934713408
    %v2583 = vunpack.c.0.s8 %v2582
    %v2584 = vlaneseq
    %v2585 = vshrl.u32 %v2584, 7
    %v2586 = vsub.s32 %v2583, %v2585
    %v2587 = vrot.slane %v2573, %v2586
    %v2588 = vcombine.high %v2564, 0.0
    %v2589 = vcombine.high %v2571, 0.0
    %v2590 = vcombine.high %v2580, 0.0
    %v2591 = vcombine.high %v2587, 0.0
    %v2592 = vcombine.low %v2496, %v2503
    %v2594 = vunpack.c.l.s4 1983009808
    %v2595 = vunpack.c.0.s8 %v2594
    %v2596 = vlaneseq
    %v2597 = vshrl.u32 %v2596, 7
    %v2598 = vsub.s32 %v2595, %v2597
    %v2599 = vrot.slane %v2592, %v2598
    %v2600 = vcombine.low %v2520, %v2521
    %v2602 = vunpack.c.l.s4 1983009808
    %v2603 = vunpack.c.0.s8 %v2602
    %v2604 = vlaneseq
    %v2605 = vshrl.u32 %v2604, 7
    %v2606 = vsub.s32 %v2603, %v2605
    %v2607 = vrot.slane %v2600, %v2606
    %v2608 = vcombine.low %v2512, %v2519
    %v2610 = vunpack.c.l.s4 1983009808
    %v2611 = vunpack.c.0.s8 %v2610
    %v2612 = vlaneseq
    %v2613 = vshrl.u32 %v2612, 7
    %v2614 = vsub.s32 %v2611, %v2613
    %v2615 = vrot.slane %v2608, %v2614
    %v2616 = vcombine.low %v2522, %v2523
    %v2618 = vunpack.c.l.s4 1983009808
    %v2619 = vunpack.c.0.s8 %v2618
    %v2620 = vlaneseq
    %v2621 = vshrl.u32 %v2620, 7
    %v2622 = vsub.s32 %v2619, %v2621
    %v2623 = vrot.slane %v2616, %v2622
    %v2624 = vcombine.low %v2599, %v2607
    %v2625 = vcombine.high %v2599, %v2607
    %v2627 = vunpack.c.l.s4 1934713408
    %v2628 = vunpack.c.0.s8 %v2627
    %v2629 = vlaneseq
    %v2630 = vshrl.u32 %v2629, 7
    %v2631 = vsub.s32 %v2628, %v2630
    %v2632 = vrot.slane %v2624, %v2631
    %v2634 = vunpack.c.l.s4 1934713408
    %v2635 = vunpack.c.0.s8 %v2634
    %v2636 = vlaneseq
    %v2637 = vshrl.u32 %v2636, 7
    %v2638 = vsub.s32 %v2635, %v2637
    %v2639 = vrot.slane %v2625, %v2638
    %v2640 = vcombine.low %v2615, %v2623
    %v2641 = vcombine.high %v2615, %v2623
    %v2643 = vunpack.c.l.s4 1934713408
    %v2644 = vunpack.c.0.s8 %v2643
    %v2645 = vlaneseq
    %v2646 = vshrl.u32 %v2645, 7
    %v2647 = vsub.s32 %v2644, %v2646
    %v2648 = vrot.slane %v2640, %v2647
    %v2650 = vunpack.c.l.s4 1934713408
    %v2651 = vunpack.c.0.s8 %v2650
    %v2652 = vlaneseq
    %v2653 = vshrl.u32 %v2652, 7
    %v2654 = vsub.s32 %v2651, %v2653
    %v2655 = vrot.slane %v2641, %v2654
    %v2656 = vcombine.low %v2632, %v2648
    %v2657 = vcombine.high %v2632, %v2648
    %v2658 = vcombine.low %v2639, %v2655
    %v2659 = vcombine.high %v2639, %v2655
    %v2660 = vcombine.low %v2564, %v2571
    %v2662 = vunpack.c.l.s4 1983009808
    %v2663 = vunpack.c.0.s8 %v2662
    %v2664 = vlaneseq
    %v2665 = vshrl.u32 %v2664, 7
    %v2666 = vsub.s32 %v2663, %v2665
    %v2667 = vrot.slane %v2660, %v2666
    %v2668 = vcombine.low %v2588, %v2589
    %v2670 = vunpack.c.l.s4 1983009808
    %v2671 = vunpack.c.0.s8 %v2670
    %v2672 = vlaneseq
    %v2673 = vshrl.u32 %v2672, 7
    %v2674 = vsub.s32 %v2671, %v2673
    %v2675 = vrot.slane %v2668, %v2674
    %v2676 = vcombine.low %v2580, %v2587
    %v2678 = vunpack.c.l.s4 1983009808
    %v2679 = vunpack.c.0.s8 %v2678
    %v2680 = vlaneseq
    %v2681 = vshrl.u32 %v2680, 7
    %v2682 = vsub.s32 %v2679, %v2681
    %v2683 = vrot.slane %v2676, %v2682
    %v2684 = vcombine.low %v2590, %v2591
    %v2686 = vunpack.c.l.s4 1983009808
    %v2687 = vunpack.c.0.s8 %v2686
    %v2688 = vlaneseq
    %v2689 = vshrl.u32 %v2688, 7
    %v2690 = vsub.s32 %v2687, %v2689
    %v2691 = vrot.slane %v2684, %v2690
    %v2692 = vcombine.low %v2667, %v2675
    %v2693 = vcombine.high %v2667, %v2675
    %v2695 = vunpack.c.l.s4 1934713408
    %v2696 = vunpack.c.0.s8 %v2695
    %v2697 = vlaneseq
    %v2698 = vshrl.u32 %v2697, 7
    %v2699 = vsub.s32 %v2696, %v2698
    %v2700 = vrot.slane %v2692, %v2699
    %v2702 = vunpack.c.l.s4 1934713408
    %v2703 = vunpack.c.0.s8 %v2702
    %v2704 = vlaneseq
    %v2705 = vshrl.u32 %v2704, 7
    %v2706 = vsub.s32 %v2703, %v2705
    %v2707 = vrot.slane %v2693, %v2706
    %v2708 = vcombine.low %v2683, %v2691
    %v2709 = vcombine.high %v2683, %v2691
    %v2711 = vunpack.c.l.s4 1934713408
    %v2712 = vunpack.c.0.s8 %v2711
    %v2713 = vlaneseq
    %v2714 = vshrl.u32 %v2713, 7
    %v2715 = vsub.s32 %v2712, %v2714
    %v2716 = vrot.slane %v2708, %v2715
    %v2718 = vunpack.c.l.s4 1934713408
    %v2719 = vunpack.c.0.s8 %v2718
    %v2720 = vlaneseq
    %v2721 = vshrl.u32 %v2720, 7
    %v2722 = vsub.s32 %v2719, %v2721
    %v2723 = vrot.slane %v2709, %v2722
    %v2724 = vcombine.low %v2700, %v2716
    %v2725 = vcombine.high %v2700, %v2716
    %v2726 = vcombine.low %v2707, %v2723
    %v2727 = vcombine.high %v2707, %v2723
    %2730 = vrot.lane.b32.xlu0 %v2657, 8
    %v2731 = vpop.permute.xlu0 %2730
    %2732 = vrot.lane.b32.xlu0 %v2725, 8
    %v2733 = vpop.permute.xlu0 %2732
    %2738 = vrot.lane.b32.xlu0 %v2658, 16
    %v2739 = vpop.permute.xlu0 %2738
    %2740 = vrot.lane.b32.xlu0 %v2726, 16
    %v2741 = vpop.permute.xlu0 %2740
    %2746 = vrot.lane.b32.xlu0 %v2659, 24
    %v2747 = vpop.permute.xlu0 %2746
    %2748 = vrot.lane.b32.xlu0 %v2727, 24
    %v2749 = vpop.permute.xlu0 %2748
    %v2752 = vsel %vm1175, %v2656, %v2731
    %v2753 = vsel %vm1175, %v2724, %v2733
    %vm2754 = vcmask 130048
    %v2755 = vsel %vm2754, %v2752, %v2739
    %v2756 = vsel %vm2754, %v2753, %v2741
    %vm2757 = vcmask 195584
    %v2758 = vsel %vm2757, %v2755, %v2747
    %v2759 = vsel %vm2757, %v2756, %v2749
    %v2760 = vld [vmem:[#allocation10] sm:$0xff]
    %v2761 = vld [vmem:[#allocation10 + $0x8] sm:$0xff]
    %v2762 = vld [vmem:[#allocation10 + $0x10] sm:$0xff]
    %v2763 = vld [vmem:[#allocation10 + $0x18] sm:$0xff]
    %v2764 = vld [vmem:[%s7] sm:$0x1]
    %v2766 = vlaneseq
    %v2767 = vshrl.u32 %v2766, 7
    %v2768 = vsub.s32 0, %v2767
    %v2769 = vrot.slane %v2764, %v2768
    %v2772 = vsel %vm121, %v2758, 0
    %v2775 = vsel %vm121, %v2759, 0
    %2777 = vmatprep.subr.mxu0 0.0
    %2778 = vmatpush1.msra.mxu0 %v2760
    %2779 = vmatprep.subr.mxu0 0.0
    %2780 = vmatpush1.msra.mxu0 %v2761
    %2781 = vmatprep.subr.mxu0 0.0
    %2782 = vmatpush1.msra.mxu0 %v2762
    %2783 = vmatprep.subr.mxu0 0.0
    %2784 = vmatpush1.msra.mxu0 %v2763
    %2785 = vmatprep.subr.mxu0 0.0
    %2786 = vmatpush1.msra.mxu0 0.0
    %2787 = vmatprep.subr.mxu0 0.0
    %2788 = vmatpush1.msra.mxu0 0.0
    %2789 = vmatprep.subr.mxu0 0.0
    %2790 = vmatpush1.msra.mxu0 0.0
    %2791 = vmatprep.subr.mxu0 0.0
    %2792 = vmatpush1.msra.mxu0 0.0
    %2793 = vmatprep.subr.mxu0 0.0
    %2794 = vmatpush1.msra.mxu0 0.0
    %2795 = vmatprep.subr.mxu0 0.0
    %2796 = vmatpush1.msra.mxu0 0.0
    %2797 = vmatprep.subr.mxu0 0.0
    %2798 = vmatpush1.msra.mxu0 0.0
    %2799 = vmatprep.subr.mxu0 0.0
    %2800 = vmatpush1.msra.mxu0 0.0
    %2801 = vmatprep.subr.mxu0 0.0
    %2802 = vmatpush1.msra.mxu0 0.0
    %2803 = vmatprep.subr.mxu0 0.0
    %2804 = vmatpush1.msra.mxu0 0.0
    %2805 = vmatprep.subr.mxu0 0.0
    %2806 = vmatpush1.msra.mxu0 0.0
    %2807 = vmatprep.subr.mxu0 0.0
    %2808 = vmatpush1.msra.mxu0 0.0
    %2809 = vmatprep.subr.mxu0 0.0
    %2810 = vmatpush1.msra.mxu0 0.0
    %2811 = vmatprep.subr.mxu0 0.0
    %2812 = vmatpush1.msra.mxu0 0.0
    %2813 = vmatprep.subr.mxu0 0.0
    %2814 = vmatpush1.msra.mxu0 0.0
    %2815 = vmatprep.subr.mxu0 0.0
    %2816 = vmatpush1.msra.mxu0 0.0
    %2817 = vmatprep.subr.mxu0 0.0
    %2818 = vmatpush1.msra.mxu0 0.0
    %2819 = vmatprep.subr.mxu0 0.0
    %2820 = vmatpush1.msra.mxu0 0.0
    %2821 = vmatprep.subr.mxu0 0.0
    %2822 = vmatpush1.msra.mxu0 0.0
    %2823 = vmatprep.subr.mxu0 0.0
    %2824 = vmatpush1.msra.mxu0 0.0
    %2825 = vmatprep.subr.mxu0 0.0
    %2826 = vmatpush1.msra.mxu0 0.0
    %2827 = vmatprep.subr.mxu0 0.0
    %2828 = vmatpush1.msra.mxu0 0.0
    %2829 = vmatprep.subr.mxu0 0.0
    %2830 = vmatpush1.msra.mxu0 0.0
    %2831 = vmatprep.subr.mxu0 0.0
    %2832 = vmatpush1.msra.mxu0 0.0
    %2833 = vmatprep.subr.mxu0 0.0
    %2834 = vmatpush1.msra.mxu0 0.0
    %2835 = vmatprep.subr.mxu0 0.0
    %2836 = vmatpush1.msra.mxu0 0.0
    %2837 = vmatprep.subr.mxu0 0.0
    %2838 = vmatpush1.msra.mxu0 0.0
    %2839 = vmatprep.subr.mxu0 0.0
    %2840 = vmatpush1.msra.mxu0 0.0
    %2841 = vmatprep.mubr.f32.mxu0 0.0
    %2842 = vmatmul.mubr.f32.gmra.mrb[0].mxu0 %v2772
    %v2843 = vpop.f32.mrb[0].mxu0
    %v2844 = vadd.f32 %v2769, %v2843
    %v2845 = vpop.f32.mrb[0].mxu0
    %2846 = vmatprep.mubr.f32.mxu0 0.0
    %2847 = vmatmul.mubr.f32.gmra.mrb[0].mxu0 %v2775
    %v2848 = vpop.f32.mrb[0].mxu0
    %v2849 = vadd.f32 %v2769, %v2848
    %v2850 = vpop.f32.mrb[0].mxu0
    %2851 = vdwg.mxu0
    %v2852 = vadd.f32 %v104, %v2844
    %v2853 = vadd.f32 %v105, %v2849
    %v2854 = vsel %vm121, %v2852, 0.0
    %2855 = vadd.xlane.f32.xlu0 %v2854
    %v2856 = vpop.xlane.xlu0 %2855
    %v2857 = vsel %vm121, %v2853, 0.0
    %2858 = vadd.xlane.f32.xlu0 %v2857
    %v2859 = vpop.xlane.xlu0 %2858
    %v2860 = vrcp.pop 32.0
    %v2861 = vmul.f32 %v2856, %v2860
    %v2862 = vmul.f32 %v2859, %v2860
    %v2863 = vsub.f32 %v2852, %v2861
    %v2864 = vsub.f32 %v2853, %v2862
    %v2865 = vmul.f32 %v2863, %v2863
    %v2866 = vmul.f32 %v2864, %v2864
    %v2867 = vsel %vm121, %v2865, 0.0
    %2868 = vadd.xlane.f32.xlu0 %v2867
    %v2869 = vpop.xlane.xlu0 %2868
    %v2870 = vsel %vm121, %v2866, 0.0
    %2871 = vadd.xlane.f32.xlu0 %v2870
    %v2872 = vpop.xlane.xlu0 %2871
    %v2873 = vmul.f32 %v2869, %v2860
    %v2874 = vmul.f32 %v2872, %v2860
    %v2875 = vadd.f32 %v2873, 1e-05
    %v2876 = vadd.f32 %v2874, 1e-05
    %v2877 = vrsqrt.pop %v2875
    %v2878 = vrsqrt.pop %v2876
    %v2879 = vmul.f32 %v2863, %v2877
    %v2880 = vmul.f32 %v2864, %v2878
    %v2881 = vld [vmem:[%s8] sm:$0x1]
    %v2883 = vlaneseq
    %v2884 = vshrl.u32 %v2883, 7
    %v2885 = vsub.s32 0, %v2884
    %v2886 = vrot.slane %v2881, %v2885
    %v2888 = vmul.f32 %v2879, %v2886
    %v2889 = vmul.f32 %v2880, %v2886
    %v2890 = vld [vmem:[%s9] sm:$0x1]
    %v2892 = vlaneseq
    %v2893 = vshrl.u32 %v2892, 7
    %v2894 = vsub.s32 0, %v2893
    %v2895 = vrot.slane %v2890, %v2894
    %v2897 = vadd.f32 %v2888, %v2895
    %v2898 = vadd.f32 %v2889, %v2895
    %2899 = vst.msk [vmem:[#allocation11] sm:$0xff] %vm121, %v2897
    %2900 = vst.msk [vmem:[#allocation11 + $0x8] sm:$0xff] %vm121, %v2898
    // Predicated region
    $region62: #{tpu_custom_call.1} parent=1 // pred_check
      _
    $region63: #{tpu_custom_call.1} parent=1 // pred_check_branch
      %2902 = sbr.rel (0) target = $region65
    $region64: #{tpu_custom_call.1} parent=1 // pred_region
      %s2904 = ssub.s32 256, 256
      %2905 = vsyncadd [#allocation4], %s2904
      %s2906 = sshll.u32 [#allocation11], 4
      %s2907 = int_to_ptr.vmem [resolvable:$true] %s2906
      %2912 = dma.vmem_to_hbm [thread:$0]  %s2907, 256, %s10, [#allocation4], 128, 128, 8
    $region65: #{tpu_custom_call.1} parent=1 // pred_fallthru
      _
    // Predicated region
    $region66: #{tpu_custom_call.1} parent=1 // pred_check
      _
    $region67: #{tpu_custom_call.1} parent=1 // pred_check_branch
      %2914 = sbr.rel (0) target = $region69
    $region68: #{tpu_custom_call.1} parent=1 // pred_region
      %2915 = dma.done [#allocation4], 256
    $region69: #{tpu_custom_call.1} parent=1 // pred_fallthru
      _
    %2916 = vsyncpa [#allocation3], 1
    %2917 = vsyncpa [#allocation6], 1
    %2918 = vsyncpa [#allocation9], 1
    %2919 = vsyncpa [#allocation4], 1

</llo_original>
